<compile_context>
chip_gen: v5e
topology: v5e:2x2
jax: 0.10.0
libtpu: 0.0.40
codegen_flags: <defaults>
</compile_context>

<pallas_src>
import functools
import math

import jax
import jax.numpy as jnp
import numpy as np
from jax.experimental import pallas as pl
from jax.experimental.pallas import tpu as pltpu

NUM_DISEASES = 49
CLASS_PAD = 128          # lane-dense padded class dim for the kernel output
NEG_PAD = -1e9           # logit value for padded classes (never enters support)
MASK_NEG = -1e9          # additive attention-mask "minus infinity"


# ---------------------------------------------------------------------------
# Fused encoder + classifier + sparsemax kernel
# ---------------------------------------------------------------------------
def _fused_bert_kernel(
    emb_ref,             # [B*S, H]    summed embeddings (pre-LN), f32
    mask_ref,            # [N, N]      N = heads*B*S; block-diag additive bias (0 / -1e9)
    eg_ref, eb_ref,      # [1, H]      embedding LayerNorm gamma / beta
    wqkv_ref, bqkv_ref,  # [L, H, 3H] bf16, [L, 1, 3H] f32
    wo_ref, bo_ref,      # [L, H, H]  bf16, [L, 1, H]  f32
    ln1g_ref, ln1b_ref,  # [L, 1, H]
    wi_ref, bi_ref,      # [L, H, I]  bf16, [L, 1, I]  f32
    wf_ref, bf_ref,      # [L, I, H]  bf16, [L, 1, H]  f32
    ln2g_ref, ln2b_ref,  # [L, 1, H]
    wc_ref, bc_ref,      # [H, Cpad] bf16, [1, Cpad] f32 (padded classifier)
    out_ref,             # [B, Cpad]  sparsemax probs (padded lanes are 0)
    *, batch, seq, heads, eps,
):
    H = emb_ref.shape[-1]
    L = wqkv_ref.shape[0]
    Dh = H // heads
    BS = batch * seq
    scale = 1.0 / math.sqrt(Dh)

    def mdot(a, b):
        # bf16 MXU operands (v6e/v7x bf16-native MXU; also fine on v5e),
        # f32 accumulation via preferred_element_type.
        return jnp.dot(a.astype(jnp.bfloat16), b.astype(jnp.bfloat16),
                       preferred_element_type=jnp.float32)

    def ln(x, g, b):
        mu = jnp.mean(x, axis=-1, keepdims=True)
        var = jnp.mean((x - mu) ** 2, axis=-1, keepdims=True)
        return (x - mu) * jax.lax.rsqrt(var + eps) * g + b

    mask = mask_ref[...]                                        # [N, N] f32
    x = ln(emb_ref[...], eg_ref[...], eb_ref[...])              # [B*S, H] f32

    # --- transformer encoder (layers unrolled; all weights resident in VMEM) ---
    for l in range(L):
        qkv = mdot(x, wqkv_ref[l]) + bqkv_ref[l]                # [BS, 3H] f32

        # Fold (head, batch) into the row axis: stack per-head slices along rows.
        # Row index = h*BS + b*S + s  (matches the host-built block-diag mask).
        q_stk = jnp.concatenate(
            [qkv[:, h * Dh:(h + 1) * Dh] for h in range(heads)], axis=0)       # [N, Dh]
        k_stk = jnp.concatenate(
            [qkv[:, H + h * Dh:H + (h + 1) * Dh] for h in range(heads)], axis=0)
        v_stk = jnp.concatenate(
            [qkv[:, 2 * H + h * Dh:2 * H + (h + 1) * Dh] for h in range(heads)], axis=0)

        # ONE scores matmul + ONE softmax + ONE p@v for all (batch, head) blocks.
        s = jax.lax.dot_general(
            q_stk.astype(jnp.bfloat16), k_stk.astype(jnp.bfloat16),
            (((1,), (1,)), ((), ())), preferred_element_type=jnp.float32,
        ) * scale + mask                                        # [N, N] f32
        s = s - jnp.max(s, axis=-1, keepdims=True)
        p = jnp.exp(s)
        p = p * pl.reciprocal(jnp.sum(p, axis=-1, keepdims=True), approx=True)
        ctx_stk = mdot(p, v_stk)                                # [N, Dh] f32

        # Regroup heads back onto lanes -> [BS, H] (single 4-piece lane repack).
        ctx = jnp.concatenate(
            [ctx_stk[h * BS:(h + 1) * BS, :] for h in range(heads)], axis=-1)

        attn = mdot(ctx, wo_ref[l]) + bo_ref[l]
        x = ln(x + attn, ln1g_ref[l], ln1b_ref[l])

        ff = mdot(x, wi_ref[l]) + bi_ref[l]
        # TODO(synk): BERT uses exact erf-GELU; tanh-approx GELU used here (EUP tanh).
        ff = jax.nn.gelu(ff, approximate=True)
        ff = mdot(ff, wf_ref[l]) + bf_ref[l]
        x = ln(x + ff, ln2g_ref[l], ln2b_ref[l])

    # --- head: CLS token -> linear -> sparsemax(dim=1) ---
    # B=2 -> two static row slices; at larger B use a [B,S,H] reshape + [:,0,:].
    cls = jnp.concatenate([x[b * seq:b * seq + 1, :] for b in range(batch)], axis=0)
    z = mdot(cls, wc_ref[...]) + bc_ref[...]                    # [B, Cpad]; pad lanes = NEG_PAD
    Cp = z.shape[-1]

    rows = jax.lax.broadcasted_iota(jnp.int32, (Cp, Cp), 0)
    cols = jax.lax.broadcasted_iota(jnp.int32, (Cp, Cp), 1)
    diag = rows == cols

    out_rows = []
    for b in range(batch):
        zr = z[b:b + 1, :]                                      # [1, Cp]
        A = jnp.broadcast_to(zr, (Cp, Cp))                      # A[i, j] = z_j
        # zcol[i, 0] = z_i via diag-masked lane reduce (proven lowering path;
        # this is a 2-row epilogue so the [Cp,Cp] select is negligible).
        zcol = jnp.sum(jnp.where(diag, A, 0.0), axis=-1, keepdims=True)
        ge = (A >= zcol).astype(jnp.float32)                    # 1{z_j >= z_i}
        r = jnp.sum(ge, axis=-1, keepdims=True)                 # rank of z_i
        sge = jnp.sum(ge * A, axis=-1, keepdims=True)           # sum of z_j >= z_i
        support = ((1.0 + r * zcol) > sge).astype(jnp.float32)
        ksum = jnp.sum(support)                                 # |support| >= 1
        tau = (jnp.sum(zcol * support) - 1.0) / ksum            # exact div (1 scalar/row)
        out_rows.append(jnp.maximum(zr - tau, 0.0))             # padded lanes -> 0
    out_ref[...] = jnp.concatenate(out_rows, axis=0)


# ---------------------------------------------------------------------------
# Parameters (deterministic synthetic weights; frozen bert_model synthesized)
# ---------------------------------------------------------------------------
def init_params(
    key,
    *,
    vocab=50,
    max_pos=16,
    type_vocab=2,
    hidden=32,
    layers=2,
    heads=4,
    inter=64,
    num_diseases=NUM_DISEASES,
    class_pad=CLASS_PAD,
):
    keys = iter(jax.random.split(key, 64))

    def nrm(shape):
        return 0.02 * jax.random.normal(next(keys), shape, jnp.float32)

    p = {
        "word_emb": nrm((vocab, hidden)),
        "pos_emb": nrm((max_pos, hidden)),
        "type_emb": nrm((type_vocab, hidden)),
        "emb_ln_g": jnp.ones((1, hidden), jnp.float32),
        "emb_ln_b": jnp.zeros((1, hidden), jnp.float32),
        "heads": heads,
        "num_diseases": num_diseases,
    }

    wqkv, bqkv, wo, bo = [], [], [], []
    ln1g, ln1b, wi, bi, wf, bf, ln2g, ln2b = [], [], [], [], [], [], [], []
    for _ in range(layers):
        wqkv.append(jnp.concatenate([nrm((hidden, hidden)) for _ in range(3)], axis=1))
        bqkv.append(jnp.zeros((1, 3 * hidden), jnp.float32))
        wo.append(nrm((hidden, hidden)))
        bo.append(jnp.zeros((1, hidden), jnp.float32))
        ln1g.append(jnp.ones((1, hidden), jnp.float32))
        ln1b.append(jnp.zeros((1, hidden), jnp.float32))
        wi.append(nrm((hidden, inter)))
        bi.append(jnp.zeros((1, inter), jnp.float32))
        wf.append(nrm((inter, hidden)))
        bf.append(jnp.zeros((1, hidden), jnp.float32))
        ln2g.append(jnp.ones((1, hidden), jnp.float32))
        ln2b.append(jnp.zeros((1, hidden), jnp.float32))

    p.update(
        wqkv=jnp.stack(wqkv), bqkv=jnp.stack(bqkv),
        wo=jnp.stack(wo), bo=jnp.stack(bo),
        ln1_g=jnp.stack(ln1g), ln1_b=jnp.stack(ln1b),
        wi=jnp.stack(wi), bi=jnp.stack(bi),
        wf=jnp.stack(wf), bf=jnp.stack(bf),
        ln2_g=jnp.stack(ln2g), ln2_b=jnp.stack(ln2b),
    )

    # classifier: xavier_uniform_ weight, zero bias; padded to a lane-dense width.
    a = math.sqrt(6.0 / (hidden + num_diseases))
    clf_w = jax.random.uniform(next(keys), (hidden, num_diseases), jnp.float32, -a, a)
    pad = class_pad - num_diseases
    p["clf_w"] = jnp.concatenate([clf_w, jnp.zeros((hidden, pad), jnp.float32)], axis=1)
    p["clf_b"] = jnp.concatenate(
        [jnp.zeros((1, num_diseases), jnp.float32),
         jnp.full((1, pad), NEG_PAD, jnp.float32)], axis=1)
    return p


# ---------------------------------------------------------------------------
# Forward pass (mirrors BertForDiseasePrediction.forward)
# ---------------------------------------------------------------------------
def _full_block(shape):
    rank = len(shape)

    def idx(i):
        return (0,) * rank

    return pl.BlockSpec(shape, idx)


def bert_for_disease_prediction(
    params, input_ids, attention_mask=None, token_type_ids=None, labels=None
):
    B, S = input_ids.shape
    H = params["word_emb"].shape[1]
    heads = params["heads"]
    C = params["num_diseases"]
    Cpad = params["clf_w"].shape[1]
    L = params["wqkv"].shape[0]
    I = params["wi"].shape[2]
    Dh = H // heads

    if attention_mask is None:
        attention_mask = jnp.ones((B, S), jnp.int32)
    if token_type_ids is None:
        token_type_ids = jnp.zeros((B, S), jnp.int32)

    # --- embeddings (table gathers kept in plain-JAX glue) ---
    emb = (
        jnp.take(params["word_emb"], input_ids, axis=0)
        + params["pos_emb"][:S][None, :, :]
        + jnp.take(params["type_emb"], token_type_ids, axis=0)
    ).reshape(B * S, H).astype(jnp.float32)

    # Block-diagonal (head, batch) additive attention mask merged with the
    # per-key padding bias.  Row/col index = h*B*S + b*S + s.
    N = heads * B * S
    ids = jnp.arange(N)
    h_id = ids // (B * S)
    b_id = (ids % (B * S)) // S
    s_id = ids % S
    key_ok = attention_mask[b_id, s_id] > 0
    allow = (
        (h_id[:, None] == h_id[None, :])
        & (b_id[:, None] == b_id[None, :])
        & key_ok[None, :]
    )
    mask_full = jnp.where(allow, 0.0, MASK_NEG).astype(jnp.float32)    # [N, N]

    bf16 = jnp.bfloat16
    inputs = (
        emb, mask_full, params["emb_ln_g"], params["emb_ln_b"],
        params["wqkv"].astype(bf16), params["bqkv"],
        params["wo"].astype(bf16), params["bo"],
        params["ln1_g"], params["ln1_b"],
        params["wi"].astype(bf16), params["bi"],
        params["wf"].astype(bf16), params["bf"],
        params["ln2_g"], params["ln2_b"],
        params["clf_w"].astype(bf16), params["clf_b"],
    )

    # Advisory cost estimate for XLA scheduling around the custom call.
    per_layer_flops = (
        2 * B * S * H * 3 * H          # fused QKV
        + 2 * (2 * N * N * Dh)         # scores + p@v
        + 2 * B * S * H * H            # attention output proj
        + 2 * (2 * B * S * H * I)      # FFN
    )
    flops = L * per_layer_flops + 2 * B * H * Cpad
    transcendentals = L * (N * N + B * S * I) + (2 * L + 1) * B * S
    bytes_accessed = sum(int(a.size) * a.dtype.itemsize for a in inputs) + B * Cpad * 4
    cost = pl.CostEstimate(flops=int(flops), transcendentals=int(transcendentals),
                           bytes_accessed=int(bytes_accessed))

    probs_pad = pl.pallas_call(
        functools.partial(_fused_bert_kernel, batch=B, seq=S, heads=heads, eps=1e-12),
        out_shape=jax.ShapeDtypeStruct((B, Cpad), jnp.float32),
        grid=(1,),
        in_specs=[_full_block(a.shape) for a in inputs],
        out_specs=_full_block((B, Cpad)),
        compiler_params=pltpu.CompilerParams(
            dimension_semantics=("arbitrary",),
            vmem_limit_bytes=32 * 1024 * 1024,
        ),
        cost_estimate=cost,
    )(*inputs)

    probs = probs_pad[:, :C]                                   # drop lane padding

    loss = None
    if labels is not None:
        loss = jnp.mean((probs - labels) ** 2)                 # nn.MSELoss(reduction='mean')
    return {"loss": loss, "probs": probs}


# ---------------------------------------------------------------------------
if __name__ == "__main__":
    key = jax.random.PRNGKey(0)
    pkey, ikey, lkey = jax.random.split(key, 3)

    B, S = 2, 8
    params = init_params(pkey)

    input_ids = jax.random.randint(ikey, (B, S), 0, 50, dtype=jnp.int32)
    attention_mask = jnp.array(
        [[1, 1, 1, 1, 1, 1, 1, 1], [1, 1, 1, 1, 1, 1, 0, 0]], dtype=jnp.int32
    )
    token_type_ids = jnp.zeros((B, S), jnp.int32)
    labels = jax.nn.softmax(
        jax.random.normal(lkey, (B, NUM_DISEASES), jnp.float32), axis=-1
    )

    out = bert_for_disease_prediction(
        params, input_ids, attention_mask, token_type_ids, labels
    )
    probs = jax.block_until_ready(out["probs"])
    loss = jax.block_until_ready(out["loss"])

    probs_np = np.asarray(probs)
    assert probs_np.shape == (B, NUM_DISEASES)
    assert np.all(probs_np >= 0.0)
    np.testing.assert_allclose(probs_np.sum(axis=1), 1.0, atol=1e-3)
    assert np.isfinite(float(loss))

    print("KERNEL_OK")
</pallas_src>

<mosaic_0001>
module attributes {stable_mosaic.version = 11 : i64} {
  func.func @_fused_bert_kernel(%arg0: i32, %arg1: memref<16x32xf32, #tpu.memory_space<vmem>>, %arg2: memref<64x64xf32, #tpu.memory_space<vmem>>, %arg3: memref<1x32xf32, #tpu.memory_space<vmem>>, %arg4: memref<1x32xf32, #tpu.memory_space<vmem>>, %arg5: memref<2x32x96xbf16, #tpu.memory_space<vmem>>, %arg6: memref<2x1x96xf32, #tpu.memory_space<vmem>>, %arg7: memref<2x32x32xbf16, #tpu.memory_space<vmem>>, %arg8: memref<2x1x32xf32, #tpu.memory_space<vmem>>, %arg9: memref<2x1x32xf32, #tpu.memory_space<vmem>>, %arg10: memref<2x1x32xf32, #tpu.memory_space<vmem>>, %arg11: memref<2x32x64xbf16, #tpu.memory_space<vmem>>, %arg12: memref<2x1x64xf32, #tpu.memory_space<vmem>>, %arg13: memref<2x64x32xbf16, #tpu.memory_space<vmem>>, %arg14: memref<2x1x32xf32, #tpu.memory_space<vmem>>, %arg15: memref<2x1x32xf32, #tpu.memory_space<vmem>>, %arg16: memref<2x1x32xf32, #tpu.memory_space<vmem>>, %arg17: memref<32x128xbf16, #tpu.memory_space<vmem>>, %arg18: memref<1x128xf32, #tpu.memory_space<vmem>>, %arg19: memref<2x128xf32, #tpu.memory_space<vmem>>) attributes {dimension_semantics = [#tpu.dimension_semantics<arbitrary>], iteration_bounds = array<i64: 1>, scalar_prefetch = 0 : i64, scratch_operands = 0 : i64, tpu.core_type = #tpu.core_type<tc>, window_params = [{pipeline_mode = #tpu.pipeline_mode<synchronous>, transform_indices = @transform_0, window_bounds = array<i64: 16, 32>}, {pipeline_mode = #tpu.pipeline_mode<synchronous>, transform_indices = @transform_1, window_bounds = array<i64: 64, 64>}, {pipeline_mode = #tpu.pipeline_mode<synchronous>, transform_indices = @transform_2, window_bounds = array<i64: 1, 32>}, {pipeline_mode = #tpu.pipeline_mode<synchronous>, transform_indices = @transform_3, window_bounds = array<i64: 1, 32>}, {pipeline_mode = #tpu.pipeline_mode<synchronous>, transform_indices = @transform_4, window_bounds = array<i64: 2, 32, 96>}, {pipeline_mode = #tpu.pipeline_mode<synchronous>, transform_indices = @transform_5, window_bounds = array<i64: 2, 1, 96>}, {pipeline_mode = #tpu.pipeline_mode<synchronous>, transform_indices = @transform_6, window_bounds = array<i64: 2, 32, 32>}, {pipeline_mode = #tpu.pipeline_mode<synchronous>, transform_indices = @transform_7, window_bounds = array<i64: 2, 1, 32>}, {pipeline_mode = #tpu.pipeline_mode<synchronous>, transform_indices = @transform_8, window_bounds = array<i64: 2, 1, 32>}, {pipeline_mode = #tpu.pipeline_mode<synchronous>, transform_indices = @transform_9, window_bounds = array<i64: 2, 1, 32>}, {pipeline_mode = #tpu.pipeline_mode<synchronous>, transform_indices = @transform_10, window_bounds = array<i64: 2, 32, 64>}, {pipeline_mode = #tpu.pipeline_mode<synchronous>, transform_indices = @transform_11, window_bounds = array<i64: 2, 1, 64>}, {pipeline_mode = #tpu.pipeline_mode<synchronous>, transform_indices = @transform_12, window_bounds = array<i64: 2, 64, 32>}, {pipeline_mode = #tpu.pipeline_mode<synchronous>, transform_indices = @transform_13, window_bounds = array<i64: 2, 1, 32>}, {pipeline_mode = #tpu.pipeline_mode<synchronous>, transform_indices = @transform_14, window_bounds = array<i64: 2, 1, 32>}, {pipeline_mode = #tpu.pipeline_mode<synchronous>, transform_indices = @transform_15, window_bounds = array<i64: 2, 1, 32>}, {pipeline_mode = #tpu.pipeline_mode<synchronous>, transform_indices = @transform_16, window_bounds = array<i64: 32, 128>}, {pipeline_mode = #tpu.pipeline_mode<synchronous>, transform_indices = @transform_17, window_bounds = array<i64: 1, 128>}, {pipeline_mode = #tpu.pipeline_mode<synchronous>, transform_indices = @transform_18, window_bounds = array<i64: 2, 128>}]} {
    %c0 = arith.constant 0 : index
    %c0_0 = arith.constant 0 : index
    %0 = vector.load %arg2[%c0, %c0_0] : memref<64x64xf32, #tpu.memory_space<vmem>>, vector<64x64xf32>
    %c0_1 = arith.constant 0 : index
    %c0_2 = arith.constant 0 : index
    %1 = vector.load %arg1[%c0_1, %c0_2] : memref<16x32xf32, #tpu.memory_space<vmem>>, vector<16x32xf32>
    %c0_3 = arith.constant 0 : index
    %c0_4 = arith.constant 0 : index
    %2 = vector.load %arg3[%c0_3, %c0_4] : memref<1x32xf32, #tpu.memory_space<vmem>>, vector<1x32xf32>
    %c0_5 = arith.constant 0 : index
    %c0_6 = arith.constant 0 : index
    %3 = vector.load %arg4[%c0_5, %c0_6] : memref<1x32xf32, #tpu.memory_space<vmem>>, vector<1x32xf32>
    %cst = arith.constant dense<0.000000e+00> : vector<16xf32>
    %4 = vector.multi_reduction <add>, %1, %cst [1] : vector<16x32xf32> to vector<16xf32>
    %5 = vector.shape_cast %4 : vector<16xf32> to vector<16x1xf32>
    %cst_7 = arith.constant 3.200000e+01 : f32
    %6 = vector.broadcast %cst_7 : f32 to vector<16x1xf32>
    %7 = arith.divf %5, %6 : vector<16x1xf32>
    %8 = vector.broadcast %7 : vector<16x1xf32> to vector<16x32xf32>
    %9 = arith.subf %1, %8 : vector<16x32xf32>
    %10 = arith.mulf %9, %9 : vector<16x32xf32>
    %cst_8 = arith.constant dense<0.000000e+00> : vector<16xf32>
    %11 = vector.multi_reduction <add>, %10, %cst_8 [1] : vector<16x32xf32> to vector<16xf32>
    %12 = vector.shape_cast %11 : vector<16xf32> to vector<16x1xf32>
    %cst_9 = arith.constant 3.200000e+01 : f32
    %13 = vector.broadcast %cst_9 : f32 to vector<16x1xf32>
    %14 = arith.divf %12, %13 : vector<16x1xf32>
    %15 = vector.broadcast %7 : vector<16x1xf32> to vector<16x32xf32>
    %16 = arith.subf %1, %15 : vector<16x32xf32>
    %cst_10 = arith.constant 9.99999996E-13 : f32
    %17 = vector.broadcast %cst_10 : f32 to vector<16x1xf32>
    %18 = arith.addf %14, %17 : vector<16x1xf32>
    %19 = math.rsqrt %18 : vector<16x1xf32>
    %20 = vector.broadcast %19 : vector<16x1xf32> to vector<16x32xf32>
    %21 = arith.mulf %16, %20 : vector<16x32xf32>
    %22 = vector.broadcast %2 : vector<1x32xf32> to vector<16x32xf32>
    %23 = arith.mulf %21, %22 : vector<16x32xf32>
    %24 = vector.broadcast %3 : vector<1x32xf32> to vector<16x32xf32>
    %25 = arith.addf %23, %24 : vector<16x32xf32>
    %c0_11 = arith.constant 0 : index
    %c0_12 = arith.constant 0 : index
    %c0_13 = arith.constant 0 : index
    %26 = vector.load %arg5[%c0_11, %c0_12, %c0_13] : memref<2x32x96xbf16, #tpu.memory_space<vmem>>, vector<1x32x96xbf16>
    %27 = vector.shape_cast %26 : vector<1x32x96xbf16> to vector<32x96xbf16>
    %28 = arith.truncf %25 : vector<16x32xf32> to vector<16x32xbf16>
    %cst_14 = arith.constant dense<0.000000e+00> : vector<16x96xf32>
    %29 = tpu.matmul %28, %27, %cst_14 {dimension_numbers = #tpu.dot_dimension_numbers<[1], [0], [0], [1], [0, 0, 1, 1], [], []>} : vector<16x32xbf16>, vector<32x96xbf16>, vector<16x96xf32> -> vector<16x96xf32>
    %c0_15 = arith.constant 0 : index
    %c0_16 = arith.constant 0 : index
    %c0_17 = arith.constant 0 : index
    %30 = vector.load %arg6[%c0_15, %c0_16, %c0_17] : memref<2x1x96xf32, #tpu.memory_space<vmem>>, vector<1x1x96xf32>
    %31 = vector.shape_cast %30 : vector<1x1x96xf32> to vector<1x96xf32>
    %32 = vector.broadcast %31 : vector<1x96xf32> to vector<16x96xf32>
    %33 = arith.addf %29, %32 : vector<16x96xf32>
    %34 = vector.extract_strided_slice %33 {offsets = [0, 0], sizes = [16, 8], strides = [1, 1]} : vector<16x96xf32> to vector<16x8xf32>
    %35 = vector.extract_strided_slice %33 {offsets = [0, 8], sizes = [16, 8], strides = [1, 1]} : vector<16x96xf32> to vector<16x8xf32>
    %36 = vector.extract_strided_slice %33 {offsets = [0, 16], sizes = [16, 8], strides = [1, 1]} : vector<16x96xf32> to vector<16x8xf32>
    %37 = vector.extract_strided_slice %33 {offsets = [0, 24], sizes = [16, 8], strides = [1, 1]} : vector<16x96xf32> to vector<16x8xf32>
    %38 = tpu.concatenate %34, %35, %36, %37 in 0 : vector<16x8xf32>, vector<16x8xf32>, vector<16x8xf32>, vector<16x8xf32> -> vector<64x8xf32>
    %39 = vector.extract_strided_slice %33 {offsets = [0, 32], sizes = [16, 8], strides = [1, 1]} : vector<16x96xf32> to vector<16x8xf32>
    %40 = vector.extract_strided_slice %33 {offsets = [0, 40], sizes = [16, 8], strides = [1, 1]} : vector<16x96xf32> to vector<16x8xf32>
    %41 = vector.extract_strided_slice %33 {offsets = [0, 48], sizes = [16, 8], strides = [1, 1]} : vector<16x96xf32> to vector<16x8xf32>
    %42 = vector.extract_strided_slice %33 {offsets = [0, 56], sizes = [16, 8], strides = [1, 1]} : vector<16x96xf32> to vector<16x8xf32>
    %43 = tpu.concatenate %39, %40, %41, %42 in 0 : vector<16x8xf32>, vector<16x8xf32>, vector<16x8xf32>, vector<16x8xf32> -> vector<64x8xf32>
    %44 = vector.extract_strided_slice %33 {offsets = [0, 64], sizes = [16, 8], strides = [1, 1]} : vector<16x96xf32> to vector<16x8xf32>
    %45 = vector.extract_strided_slice %33 {offsets = [0, 72], sizes = [16, 8], strides = [1, 1]} : vector<16x96xf32> to vector<16x8xf32>
    %46 = vector.extract_strided_slice %33 {offsets = [0, 80], sizes = [16, 8], strides = [1, 1]} : vector<16x96xf32> to vector<16x8xf32>
    %47 = vector.extract_strided_slice %33 {offsets = [0, 88], sizes = [16, 8], strides = [1, 1]} : vector<16x96xf32> to vector<16x8xf32>
    %48 = tpu.concatenate %44, %45, %46, %47 in 0 : vector<16x8xf32>, vector<16x8xf32>, vector<16x8xf32>, vector<16x8xf32> -> vector<64x8xf32>
    %49 = arith.truncf %38 : vector<64x8xf32> to vector<64x8xbf16>
    %50 = arith.truncf %43 : vector<64x8xf32> to vector<64x8xbf16>
    %cst_18 = arith.constant dense<0.000000e+00> : vector<64x64xf32>
    %51 = tpu.matmul %49, %50, %cst_18 {dimension_numbers = #tpu.dot_dimension_numbers<[1], [1], [0], [0], [0, 0, 1, 0], [], []>} : vector<64x8xbf16>, vector<64x8xbf16>, vector<64x64xf32> -> vector<64x64xf32>
    %cst_19 = arith.constant 0.353553385 : f32
    %52 = vector.broadcast %cst_19 : f32 to vector<64x64xf32>
    %53 = arith.mulf %51, %52 : vector<64x64xf32>
    %54 = arith.addf %53, %0 : vector<64x64xf32>
    %cst_20 = arith.constant dense<0xFF800000> : vector<64xf32>
    %55 = vector.multi_reduction <maximumf>, %54, %cst_20 [1] : vector<64x64xf32> to vector<64xf32>
    %56 = vector.shape_cast %55 : vector<64xf32> to vector<64x1xf32>
    %57 = vector.broadcast %56 : vector<64x1xf32> to vector<64x64xf32>
    %58 = arith.subf %54, %57 : vector<64x64xf32>
    %59 = math.exp %58 : vector<64x64xf32>
    %cst_21 = arith.constant dense<0.000000e+00> : vector<64xf32>
    %60 = vector.multi_reduction <add>, %59, %cst_21 [1] : vector<64x64xf32> to vector<64xf32>
    %61 = vector.shape_cast %60 : vector<64xf32> to vector<64x1xf32>
    %62 = tpu.reciprocal %61 {approx = true} : vector<64x1xf32> -> vector<64x1xf32>
    %63 = vector.broadcast %62 : vector<64x1xf32> to vector<64x64xf32>
    %64 = arith.mulf %59, %63 : vector<64x64xf32>
    %65 = arith.truncf %64 : vector<64x64xf32> to vector<64x64xbf16>
    %66 = arith.truncf %48 : vector<64x8xf32> to vector<64x8xbf16>
    %cst_22 = arith.constant dense<0.000000e+00> : vector<64x8xf32>
    %67 = tpu.matmul %65, %66, %cst_22 {dimension_numbers = #tpu.dot_dimension_numbers<[1], [0], [0], [1], [0, 0, 1, 1], [], []>} : vector<64x64xbf16>, vector<64x8xbf16>, vector<64x8xf32> -> vector<64x8xf32>
    %68 = vector.extract_strided_slice %67 {offsets = [0, 0], sizes = [16, 8], strides = [1, 1]} : vector<64x8xf32> to vector<16x8xf32>
    %69 = vector.extract_strided_slice %67 {offsets = [16, 0], sizes = [16, 8], strides = [1, 1]} : vector<64x8xf32> to vector<16x8xf32>
    %70 = vector.extract_strided_slice %67 {offsets = [32, 0], sizes = [16, 8], strides = [1, 1]} : vector<64x8xf32> to vector<16x8xf32>
    %71 = vector.extract_strided_slice %67 {offsets = [48, 0], sizes = [16, 8], strides = [1, 1]} : vector<64x8xf32> to vector<16x8xf32>
    %72 = tpu.concatenate %68, %69, %70, %71 in 1 : vector<16x8xf32>, vector<16x8xf32>, vector<16x8xf32>, vector<16x8xf32> -> vector<16x32xf32>
    %c0_23 = arith.constant 0 : index
    %c0_24 = arith.constant 0 : index
    %c0_25 = arith.constant 0 : index
    %73 = vector.load %arg7[%c0_23, %c0_24, %c0_25] : memref<2x32x32xbf16, #tpu.memory_space<vmem>>, vector<1x32x32xbf16>
    %74 = vector.shape_cast %73 : vector<1x32x32xbf16> to vector<32x32xbf16>
    %75 = arith.truncf %72 : vector<16x32xf32> to vector<16x32xbf16>
    %cst_26 = arith.constant dense<0.000000e+00> : vector<16x32xf32>
    %76 = tpu.matmul %75, %74, %cst_26 {dimension_numbers = #tpu.dot_dimension_numbers<[1], [0], [0], [1], [0, 0, 1, 1], [], []>} : vector<16x32xbf16>, vector<32x32xbf16>, vector<16x32xf32> -> vector<16x32xf32>
    %c0_27 = arith.constant 0 : index
    %c0_28 = arith.constant 0 : index
    %c0_29 = arith.constant 0 : index
    %77 = vector.load %arg8[%c0_27, %c0_28, %c0_29] : memref<2x1x32xf32, #tpu.memory_space<vmem>>, vector<1x1x32xf32>
    %78 = vector.shape_cast %77 : vector<1x1x32xf32> to vector<1x32xf32>
    %79 = vector.broadcast %78 : vector<1x32xf32> to vector<16x32xf32>
    %80 = arith.addf %76, %79 : vector<16x32xf32>
    %81 = arith.addf %25, %80 : vector<16x32xf32>
    %c0_30 = arith.constant 0 : index
    %c0_31 = arith.constant 0 : index
    %c0_32 = arith.constant 0 : index
    %82 = vector.load %arg9[%c0_30, %c0_31, %c0_32] : memref<2x1x32xf32, #tpu.memory_space<vmem>>, vector<1x1x32xf32>
    %83 = vector.shape_cast %82 : vector<1x1x32xf32> to vector<1x32xf32>
    %c0_33 = arith.constant 0 : index
    %c0_34 = arith.constant 0 : index
    %c0_35 = arith.constant 0 : index
    %84 = vector.load %arg10[%c0_33, %c0_34, %c0_35] : memref<2x1x32xf32, #tpu.memory_space<vmem>>, vector<1x1x32xf32>
    %85 = vector.shape_cast %84 : vector<1x1x32xf32> to vector<1x32xf32>
    %cst_36 = arith.constant dense<0.000000e+00> : vector<16xf32>
    %86 = vector.multi_reduction <add>, %81, %cst_36 [1] : vector<16x32xf32> to vector<16xf32>
    %87 = vector.shape_cast %86 : vector<16xf32> to vector<16x1xf32>
    %cst_37 = arith.constant 3.200000e+01 : f32
    %88 = vector.broadcast %cst_37 : f32 to vector<16x1xf32>
    %89 = arith.divf %87, %88 : vector<16x1xf32>
    %90 = vector.broadcast %89 : vector<16x1xf32> to vector<16x32xf32>
    %91 = arith.subf %81, %90 : vector<16x32xf32>
    %92 = arith.mulf %91, %91 : vector<16x32xf32>
    %cst_38 = arith.constant dense<0.000000e+00> : vector<16xf32>
    %93 = vector.multi_reduction <add>, %92, %cst_38 [1] : vector<16x32xf32> to vector<16xf32>
    %94 = vector.shape_cast %93 : vector<16xf32> to vector<16x1xf32>
    %cst_39 = arith.constant 3.200000e+01 : f32
    %95 = vector.broadcast %cst_39 : f32 to vector<16x1xf32>
    %96 = arith.divf %94, %95 : vector<16x1xf32>
    %97 = vector.broadcast %89 : vector<16x1xf32> to vector<16x32xf32>
    %98 = arith.subf %81, %97 : vector<16x32xf32>
    %cst_40 = arith.constant 9.99999996E-13 : f32
    %99 = vector.broadcast %cst_40 : f32 to vector<16x1xf32>
    %100 = arith.addf %96, %99 : vector<16x1xf32>
    %101 = math.rsqrt %100 : vector<16x1xf32>
    %102 = vector.broadcast %101 : vector<16x1xf32> to vector<16x32xf32>
    %103 = arith.mulf %98, %102 : vector<16x32xf32>
    %104 = vector.broadcast %83 : vector<1x32xf32> to vector<16x32xf32>
    %105 = arith.mulf %103, %104 : vector<16x32xf32>
    %106 = vector.broadcast %85 : vector<1x32xf32> to vector<16x32xf32>
    %107 = arith.addf %105, %106 : vector<16x32xf32>
    %c0_41 = arith.constant 0 : index
    %c0_42 = arith.constant 0 : index
    %c0_43 = arith.constant 0 : index
    %108 = vector.load %arg11[%c0_41, %c0_42, %c0_43] : memref<2x32x64xbf16, #tpu.memory_space<vmem>>, vector<1x32x64xbf16>
    %109 = vector.shape_cast %108 : vector<1x32x64xbf16> to vector<32x64xbf16>
    %110 = arith.truncf %107 : vector<16x32xf32> to vector<16x32xbf16>
    %cst_44 = arith.constant dense<0.000000e+00> : vector<16x64xf32>
    %111 = tpu.matmul %110, %109, %cst_44 {dimension_numbers = #tpu.dot_dimension_numbers<[1], [0], [0], [1], [0, 0, 1, 1], [], []>} : vector<16x32xbf16>, vector<32x64xbf16>, vector<16x64xf32> -> vector<16x64xf32>
    %c0_45 = arith.constant 0 : index
    %c0_46 = arith.constant 0 : index
    %c0_47 = arith.constant 0 : index
    %112 = vector.load %arg12[%c0_45, %c0_46, %c0_47] : memref<2x1x64xf32, #tpu.memory_space<vmem>>, vector<1x1x64xf32>
    %113 = vector.shape_cast %112 : vector<1x1x64xf32> to vector<1x64xf32>
    %114 = vector.broadcast %113 : vector<1x64xf32> to vector<16x64xf32>
    %115 = arith.addf %111, %114 : vector<16x64xf32>
    %116 = arith.mulf %115, %115 : vector<16x64xf32>
    %117 = arith.mulf %115, %116 : vector<16x64xf32>
    %cst_48 = arith.constant 4.471500e-02 : f32
    %118 = vector.broadcast %cst_48 : f32 to vector<16x64xf32>
    %119 = arith.mulf %118, %117 : vector<16x64xf32>
    %120 = arith.addf %115, %119 : vector<16x64xf32>
    %cst_49 = arith.constant 0.797884583 : f32
    %121 = vector.broadcast %cst_49 : f32 to vector<16x64xf32>
    %122 = arith.mulf %121, %120 : vector<16x64xf32>
    %123 = math.tanh %122 : vector<16x64xf32>
    %cst_50 = arith.constant 1.000000e+00 : f32
    %124 = vector.broadcast %cst_50 : f32 to vector<16x64xf32>
    %125 = arith.addf %124, %123 : vector<16x64xf32>
    %cst_51 = arith.constant 5.000000e-01 : f32
    %126 = vector.broadcast %cst_51 : f32 to vector<16x64xf32>
    %127 = arith.mulf %126, %125 : vector<16x64xf32>
    %128 = arith.mulf %115, %127 : vector<16x64xf32>
    %c0_52 = arith.constant 0 : index
    %c0_53 = arith.constant 0 : index
    %c0_54 = arith.constant 0 : index
    %129 = vector.load %arg13[%c0_52, %c0_53, %c0_54] : memref<2x64x32xbf16, #tpu.memory_space<vmem>>, vector<1x64x32xbf16>
    %130 = vector.shape_cast %129 : vector<1x64x32xbf16> to vector<64x32xbf16>
    %131 = arith.truncf %128 : vector<16x64xf32> to vector<16x64xbf16>
    %cst_55 = arith.constant dense<0.000000e+00> : vector<16x32xf32>
    %132 = tpu.matmul %131, %130, %cst_55 {dimension_numbers = #tpu.dot_dimension_numbers<[1], [0], [0], [1], [0, 0, 1, 1], [], []>} : vector<16x64xbf16>, vector<64x32xbf16>, vector<16x32xf32> -> vector<16x32xf32>
    %c0_56 = arith.constant 0 : index
    %c0_57 = arith.constant 0 : index
    %c0_58 = arith.constant 0 : index
    %133 = vector.load %arg14[%c0_56, %c0_57, %c0_58] : memref<2x1x32xf32, #tpu.memory_space<vmem>>, vector<1x1x32xf32>
    %134 = vector.shape_cast %133 : vector<1x1x32xf32> to vector<1x32xf32>
    %135 = vector.broadcast %134 : vector<1x32xf32> to vector<16x32xf32>
    %136 = arith.addf %132, %135 : vector<16x32xf32>
    %137 = arith.addf %107, %136 : vector<16x32xf32>
    %c0_59 = arith.constant 0 : index
    %c0_60 = arith.constant 0 : index
    %c0_61 = arith.constant 0 : index
    %138 = vector.load %arg15[%c0_59, %c0_60, %c0_61] : memref<2x1x32xf32, #tpu.memory_space<vmem>>, vector<1x1x32xf32>
    %139 = vector.shape_cast %138 : vector<1x1x32xf32> to vector<1x32xf32>
    %c0_62 = arith.constant 0 : index
    %c0_63 = arith.constant 0 : index
    %c0_64 = arith.constant 0 : index
    %140 = vector.load %arg16[%c0_62, %c0_63, %c0_64] : memref<2x1x32xf32, #tpu.memory_space<vmem>>, vector<1x1x32xf32>
    %141 = vector.shape_cast %140 : vector<1x1x32xf32> to vector<1x32xf32>
    %cst_65 = arith.constant dense<0.000000e+00> : vector<16xf32>
    %142 = vector.multi_reduction <add>, %137, %cst_65 [1] : vector<16x32xf32> to vector<16xf32>
    %143 = vector.shape_cast %142 : vector<16xf32> to vector<16x1xf32>
    %cst_66 = arith.constant 3.200000e+01 : f32
    %144 = vector.broadcast %cst_66 : f32 to vector<16x1xf32>
    %145 = arith.divf %143, %144 : vector<16x1xf32>
    %146 = vector.broadcast %145 : vector<16x1xf32> to vector<16x32xf32>
    %147 = arith.subf %137, %146 : vector<16x32xf32>
    %148 = arith.mulf %147, %147 : vector<16x32xf32>
    %cst_67 = arith.constant dense<0.000000e+00> : vector<16xf32>
    %149 = vector.multi_reduction <add>, %148, %cst_67 [1] : vector<16x32xf32> to vector<16xf32>
    %150 = vector.shape_cast %149 : vector<16xf32> to vector<16x1xf32>
    %cst_68 = arith.constant 3.200000e+01 : f32
    %151 = vector.broadcast %cst_68 : f32 to vector<16x1xf32>
    %152 = arith.divf %150, %151 : vector<16x1xf32>
    %153 = vector.broadcast %145 : vector<16x1xf32> to vector<16x32xf32>
    %154 = arith.subf %137, %153 : vector<16x32xf32>
    %cst_69 = arith.constant 9.99999996E-13 : f32
    %155 = vector.broadcast %cst_69 : f32 to vector<16x1xf32>
    %156 = arith.addf %152, %155 : vector<16x1xf32>
    %157 = math.rsqrt %156 : vector<16x1xf32>
    %158 = vector.broadcast %157 : vector<16x1xf32> to vector<16x32xf32>
    %159 = arith.mulf %154, %158 : vector<16x32xf32>
    %160 = vector.broadcast %139 : vector<1x32xf32> to vector<16x32xf32>
    %161 = arith.mulf %159, %160 : vector<16x32xf32>
    %162 = vector.broadcast %141 : vector<1x32xf32> to vector<16x32xf32>
    %163 = arith.addf %161, %162 : vector<16x32xf32>
    %c1 = arith.constant 1 : index
    %c0_70 = arith.constant 0 : index
    %c0_71 = arith.constant 0 : index
    %164 = vector.load %arg5[%c1, %c0_70, %c0_71] : memref<2x32x96xbf16, #tpu.memory_space<vmem>>, vector<1x32x96xbf16>
    %165 = vector.shape_cast %164 : vector<1x32x96xbf16> to vector<32x96xbf16>
    %166 = arith.truncf %163 : vector<16x32xf32> to vector<16x32xbf16>
    %cst_72 = arith.constant dense<0.000000e+00> : vector<16x96xf32>
    %167 = tpu.matmul %166, %165, %cst_72 {dimension_numbers = #tpu.dot_dimension_numbers<[1], [0], [0], [1], [0, 0, 1, 1], [], []>} : vector<16x32xbf16>, vector<32x96xbf16>, vector<16x96xf32> -> vector<16x96xf32>
    %c1_73 = arith.constant 1 : index
    %c0_74 = arith.constant 0 : index
    %c0_75 = arith.constant 0 : index
    %168 = vector.load %arg6[%c1_73, %c0_74, %c0_75] : memref<2x1x96xf32, #tpu.memory_space<vmem>>, vector<1x1x96xf32>
    %169 = vector.shape_cast %168 : vector<1x1x96xf32> to vector<1x96xf32>
    %170 = vector.broadcast %169 : vector<1x96xf32> to vector<16x96xf32>
    %171 = arith.addf %167, %170 : vector<16x96xf32>
    %172 = vector.extract_strided_slice %171 {offsets = [0, 0], sizes = [16, 8], strides = [1, 1]} : vector<16x96xf32> to vector<16x8xf32>
    %173 = vector.extract_strided_slice %171 {offsets = [0, 8], sizes = [16, 8], strides = [1, 1]} : vector<16x96xf32> to vector<16x8xf32>
    %174 = vector.extract_strided_slice %171 {offsets = [0, 16], sizes = [16, 8], strides = [1, 1]} : vector<16x96xf32> to vector<16x8xf32>
    %175 = vector.extract_strided_slice %171 {offsets = [0, 24], sizes = [16, 8], strides = [1, 1]} : vector<16x96xf32> to vector<16x8xf32>
    %176 = tpu.concatenate %172, %173, %174, %175 in 0 : vector<16x8xf32>, vector<16x8xf32>, vector<16x8xf32>, vector<16x8xf32> -> vector<64x8xf32>
    %177 = vector.extract_strided_slice %171 {offsets = [0, 32], sizes = [16, 8], strides = [1, 1]} : vector<16x96xf32> to vector<16x8xf32>
    %178 = vector.extract_strided_slice %171 {offsets = [0, 40], sizes = [16, 8], strides = [1, 1]} : vector<16x96xf32> to vector<16x8xf32>
    %179 = vector.extract_strided_slice %171 {offsets = [0, 48], sizes = [16, 8], strides = [1, 1]} : vector<16x96xf32> to vector<16x8xf32>
    %180 = vector.extract_strided_slice %171 {offsets = [0, 56], sizes = [16, 8], strides = [1, 1]} : vector<16x96xf32> to vector<16x8xf32>
    %181 = tpu.concatenate %177, %178, %179, %180 in 0 : vector<16x8xf32>, vector<16x8xf32>, vector<16x8xf32>, vector<16x8xf32> -> vector<64x8xf32>
    %182 = vector.extract_strided_slice %171 {offsets = [0, 64], sizes = [16, 8], strides = [1, 1]} : vector<16x96xf32> to vector<16x8xf32>
    %183 = vector.extract_strided_slice %171 {offsets = [0, 72], sizes = [16, 8], strides = [1, 1]} : vector<16x96xf32> to vector<16x8xf32>
    %184 = vector.extract_strided_slice %171 {offsets = [0, 80], sizes = [16, 8], strides = [1, 1]} : vector<16x96xf32> to vector<16x8xf32>
    %185 = vector.extract_strided_slice %171 {offsets = [0, 88], sizes = [16, 8], strides = [1, 1]} : vector<16x96xf32> to vector<16x8xf32>
    %186 = tpu.concatenate %182, %183, %184, %185 in 0 : vector<16x8xf32>, vector<16x8xf32>, vector<16x8xf32>, vector<16x8xf32> -> vector<64x8xf32>
    %187 = arith.truncf %176 : vector<64x8xf32> to vector<64x8xbf16>
    %188 = arith.truncf %181 : vector<64x8xf32> to vector<64x8xbf16>
    %cst_76 = arith.constant dense<0.000000e+00> : vector<64x64xf32>
    %189 = tpu.matmul %187, %188, %cst_76 {dimension_numbers = #tpu.dot_dimension_numbers<[1], [1], [0], [0], [0, 0, 1, 0], [], []>} : vector<64x8xbf16>, vector<64x8xbf16>, vector<64x64xf32> -> vector<64x64xf32>
    %cst_77 = arith.constant 0.353553385 : f32
    %190 = vector.broadcast %cst_77 : f32 to vector<64x64xf32>
    %191 = arith.mulf %189, %190 : vector<64x64xf32>
    %192 = arith.addf %191, %0 : vector<64x64xf32>
    %cst_78 = arith.constant dense<0xFF800000> : vector<64xf32>
    %193 = vector.multi_reduction <maximumf>, %192, %cst_78 [1] : vector<64x64xf32> to vector<64xf32>
    %194 = vector.shape_cast %193 : vector<64xf32> to vector<64x1xf32>
    %195 = vector.broadcast %194 : vector<64x1xf32> to vector<64x64xf32>
    %196 = arith.subf %192, %195 : vector<64x64xf32>
    %197 = math.exp %196 : vector<64x64xf32>
    %cst_79 = arith.constant dense<0.000000e+00> : vector<64xf32>
    %198 = vector.multi_reduction <add>, %197, %cst_79 [1] : vector<64x64xf32> to vector<64xf32>
    %199 = vector.shape_cast %198 : vector<64xf32> to vector<64x1xf32>
    %200 = tpu.reciprocal %199 {approx = true} : vector<64x1xf32> -> vector<64x1xf32>
    %201 = vector.broadcast %200 : vector<64x1xf32> to vector<64x64xf32>
    %202 = arith.mulf %197, %201 : vector<64x64xf32>
    %203 = arith.truncf %202 : vector<64x64xf32> to vector<64x64xbf16>
    %204 = arith.truncf %186 : vector<64x8xf32> to vector<64x8xbf16>
    %cst_80 = arith.constant dense<0.000000e+00> : vector<64x8xf32>
    %205 = tpu.matmul %203, %204, %cst_80 {dimension_numbers = #tpu.dot_dimension_numbers<[1], [0], [0], [1], [0, 0, 1, 1], [], []>} : vector<64x64xbf16>, vector<64x8xbf16>, vector<64x8xf32> -> vector<64x8xf32>
    %206 = vector.extract_strided_slice %205 {offsets = [0, 0], sizes = [16, 8], strides = [1, 1]} : vector<64x8xf32> to vector<16x8xf32>
    %207 = vector.extract_strided_slice %205 {offsets = [16, 0], sizes = [16, 8], strides = [1, 1]} : vector<64x8xf32> to vector<16x8xf32>
    %208 = vector.extract_strided_slice %205 {offsets = [32, 0], sizes = [16, 8], strides = [1, 1]} : vector<64x8xf32> to vector<16x8xf32>
    %209 = vector.extract_strided_slice %205 {offsets = [48, 0], sizes = [16, 8], strides = [1, 1]} : vector<64x8xf32> to vector<16x8xf32>
    %210 = tpu.concatenate %206, %207, %208, %209 in 1 : vector<16x8xf32>, vector<16x8xf32>, vector<16x8xf32>, vector<16x8xf32> -> vector<16x32xf32>
    %c1_81 = arith.constant 1 : index
    %c0_82 = arith.constant 0 : index
    %c0_83 = arith.constant 0 : index
    %211 = vector.load %arg7[%c1_81, %c0_82, %c0_83] : memref<2x32x32xbf16, #tpu.memory_space<vmem>>, vector<1x32x32xbf16>
    %212 = vector.shape_cast %211 : vector<1x32x32xbf16> to vector<32x32xbf16>
    %213 = arith.truncf %210 : vector<16x32xf32> to vector<16x32xbf16>
    %cst_84 = arith.constant dense<0.000000e+00> : vector<16x32xf32>
    %214 = tpu.matmul %213, %212, %cst_84 {dimension_numbers = #tpu.dot_dimension_numbers<[1], [0], [0], [1], [0, 0, 1, 1], [], []>} : vector<16x32xbf16>, vector<32x32xbf16>, vector<16x32xf32> -> vector<16x32xf32>
    %c1_85 = arith.constant 1 : index
    %c0_86 = arith.constant 0 : index
    %c0_87 = arith.constant 0 : index
    %215 = vector.load %arg8[%c1_85, %c0_86, %c0_87] : memref<2x1x32xf32, #tpu.memory_space<vmem>>, vector<1x1x32xf32>
    %216 = vector.shape_cast %215 : vector<1x1x32xf32> to vector<1x32xf32>
    %217 = vector.broadcast %216 : vector<1x32xf32> to vector<16x32xf32>
    %218 = arith.addf %214, %217 : vector<16x32xf32>
    %219 = arith.addf %163, %218 : vector<16x32xf32>
    %c1_88 = arith.constant 1 : index
    %c0_89 = arith.constant 0 : index
    %c0_90 = arith.constant 0 : index
    %220 = vector.load %arg9[%c1_88, %c0_89, %c0_90] : memref<2x1x32xf32, #tpu.memory_space<vmem>>, vector<1x1x32xf32>
    %221 = vector.shape_cast %220 : vector<1x1x32xf32> to vector<1x32xf32>
    %c1_91 = arith.constant 1 : index
    %c0_92 = arith.constant 0 : index
    %c0_93 = arith.constant 0 : index
    %222 = vector.load %arg10[%c1_91, %c0_92, %c0_93] : memref<2x1x32xf32, #tpu.memory_space<vmem>>, vector<1x1x32xf32>
    %223 = vector.shape_cast %222 : vector<1x1x32xf32> to vector<1x32xf32>
    %cst_94 = arith.constant dense<0.000000e+00> : vector<16xf32>
    %224 = vector.multi_reduction <add>, %219, %cst_94 [1] : vector<16x32xf32> to vector<16xf32>
    %225 = vector.shape_cast %224 : vector<16xf32> to vector<16x1xf32>
    %cst_95 = arith.constant 3.200000e+01 : f32
    %226 = vector.broadcast %cst_95 : f32 to vector<16x1xf32>
    %227 = arith.divf %225, %226 : vector<16x1xf32>
    %228 = vector.broadcast %227 : vector<16x1xf32> to vector<16x32xf32>
    %229 = arith.subf %219, %228 : vector<16x32xf32>
    %230 = arith.mulf %229, %229 : vector<16x32xf32>
    %cst_96 = arith.constant dense<0.000000e+00> : vector<16xf32>
    %231 = vector.multi_reduction <add>, %230, %cst_96 [1] : vector<16x32xf32> to vector<16xf32>
    %232 = vector.shape_cast %231 : vector<16xf32> to vector<16x1xf32>
    %cst_97 = arith.constant 3.200000e+01 : f32
    %233 = vector.broadcast %cst_97 : f32 to vector<16x1xf32>
    %234 = arith.divf %232, %233 : vector<16x1xf32>
    %235 = vector.broadcast %227 : vector<16x1xf32> to vector<16x32xf32>
    %236 = arith.subf %219, %235 : vector<16x32xf32>
    %cst_98 = arith.constant 9.99999996E-13 : f32
    %237 = vector.broadcast %cst_98 : f32 to vector<16x1xf32>
    %238 = arith.addf %234, %237 : vector<16x1xf32>
    %239 = math.rsqrt %238 : vector<16x1xf32>
    %240 = vector.broadcast %239 : vector<16x1xf32> to vector<16x32xf32>
    %241 = arith.mulf %236, %240 : vector<16x32xf32>
    %242 = vector.broadcast %221 : vector<1x32xf32> to vector<16x32xf32>
    %243 = arith.mulf %241, %242 : vector<16x32xf32>
    %244 = vector.broadcast %223 : vector<1x32xf32> to vector<16x32xf32>
    %245 = arith.addf %243, %244 : vector<16x32xf32>
    %c1_99 = arith.constant 1 : index
    %c0_100 = arith.constant 0 : index
    %c0_101 = arith.constant 0 : index
    %246 = vector.load %arg11[%c1_99, %c0_100, %c0_101] : memref<2x32x64xbf16, #tpu.memory_space<vmem>>, vector<1x32x64xbf16>
    %247 = vector.shape_cast %246 : vector<1x32x64xbf16> to vector<32x64xbf16>
    %248 = arith.truncf %245 : vector<16x32xf32> to vector<16x32xbf16>
    %cst_102 = arith.constant dense<0.000000e+00> : vector<16x64xf32>
    %249 = tpu.matmul %248, %247, %cst_102 {dimension_numbers = #tpu.dot_dimension_numbers<[1], [0], [0], [1], [0, 0, 1, 1], [], []>} : vector<16x32xbf16>, vector<32x64xbf16>, vector<16x64xf32> -> vector<16x64xf32>
    %c1_103 = arith.constant 1 : index
    %c0_104 = arith.constant 0 : index
    %c0_105 = arith.constant 0 : index
    %250 = vector.load %arg12[%c1_103, %c0_104, %c0_105] : memref<2x1x64xf32, #tpu.memory_space<vmem>>, vector<1x1x64xf32>
    %251 = vector.shape_cast %250 : vector<1x1x64xf32> to vector<1x64xf32>
    %252 = vector.broadcast %251 : vector<1x64xf32> to vector<16x64xf32>
    %253 = arith.addf %249, %252 : vector<16x64xf32>
    %254 = arith.mulf %253, %253 : vector<16x64xf32>
    %255 = arith.mulf %253, %254 : vector<16x64xf32>
    %cst_106 = arith.constant 4.471500e-02 : f32
    %256 = vector.broadcast %cst_106 : f32 to vector<16x64xf32>
    %257 = arith.mulf %256, %255 : vector<16x64xf32>
    %258 = arith.addf %253, %257 : vector<16x64xf32>
    %cst_107 = arith.constant 0.797884583 : f32
    %259 = vector.broadcast %cst_107 : f32 to vector<16x64xf32>
    %260 = arith.mulf %259, %258 : vector<16x64xf32>
    %261 = math.tanh %260 : vector<16x64xf32>
    %cst_108 = arith.constant 1.000000e+00 : f32
    %262 = vector.broadcast %cst_108 : f32 to vector<16x64xf32>
    %263 = arith.addf %262, %261 : vector<16x64xf32>
    %cst_109 = arith.constant 5.000000e-01 : f32
    %264 = vector.broadcast %cst_109 : f32 to vector<16x64xf32>
    %265 = arith.mulf %264, %263 : vector<16x64xf32>
    %266 = arith.mulf %253, %265 : vector<16x64xf32>
    %c1_110 = arith.constant 1 : index
    %c0_111 = arith.constant 0 : index
    %c0_112 = arith.constant 0 : index
    %267 = vector.load %arg13[%c1_110, %c0_111, %c0_112] : memref<2x64x32xbf16, #tpu.memory_space<vmem>>, vector<1x64x32xbf16>
    %268 = vector.shape_cast %267 : vector<1x64x32xbf16> to vector<64x32xbf16>
    %269 = arith.truncf %266 : vector<16x64xf32> to vector<16x64xbf16>
    %cst_113 = arith.constant dense<0.000000e+00> : vector<16x32xf32>
    %270 = tpu.matmul %269, %268, %cst_113 {dimension_numbers = #tpu.dot_dimension_numbers<[1], [0], [0], [1], [0, 0, 1, 1], [], []>} : vector<16x64xbf16>, vector<64x32xbf16>, vector<16x32xf32> -> vector<16x32xf32>
    %c1_114 = arith.constant 1 : index
    %c0_115 = arith.constant 0 : index
    %c0_116 = arith.constant 0 : index
    %271 = vector.load %arg14[%c1_114, %c0_115, %c0_116] : memref<2x1x32xf32, #tpu.memory_space<vmem>>, vector<1x1x32xf32>
    %272 = vector.shape_cast %271 : vector<1x1x32xf32> to vector<1x32xf32>
    %273 = vector.broadcast %272 : vector<1x32xf32> to vector<16x32xf32>
    %274 = arith.addf %270, %273 : vector<16x32xf32>
    %275 = arith.addf %245, %274 : vector<16x32xf32>
    %c1_117 = arith.constant 1 : index
    %c0_118 = arith.constant 0 : index
    %c0_119 = arith.constant 0 : index
    %276 = vector.load %arg15[%c1_117, %c0_118, %c0_119] : memref<2x1x32xf32, #tpu.memory_space<vmem>>, vector<1x1x32xf32>
    %277 = vector.shape_cast %276 : vector<1x1x32xf32> to vector<1x32xf32>
    %c1_120 = arith.constant 1 : index
    %c0_121 = arith.constant 0 : index
    %c0_122 = arith.constant 0 : index
    %278 = vector.load %arg16[%c1_120, %c0_121, %c0_122] : memref<2x1x32xf32, #tpu.memory_space<vmem>>, vector<1x1x32xf32>
    %279 = vector.shape_cast %278 : vector<1x1x32xf32> to vector<1x32xf32>
    %cst_123 = arith.constant dense<0.000000e+00> : vector<16xf32>
    %280 = vector.multi_reduction <add>, %275, %cst_123 [1] : vector<16x32xf32> to vector<16xf32>
    %281 = vector.shape_cast %280 : vector<16xf32> to vector<16x1xf32>
    %cst_124 = arith.constant 3.200000e+01 : f32
    %282 = vector.broadcast %cst_124 : f32 to vector<16x1xf32>
    %283 = arith.divf %281, %282 : vector<16x1xf32>
    %284 = vector.broadcast %283 : vector<16x1xf32> to vector<16x32xf32>
    %285 = arith.subf %275, %284 : vector<16x32xf32>
    %286 = arith.mulf %285, %285 : vector<16x32xf32>
    %cst_125 = arith.constant dense<0.000000e+00> : vector<16xf32>
    %287 = vector.multi_reduction <add>, %286, %cst_125 [1] : vector<16x32xf32> to vector<16xf32>
    %288 = vector.shape_cast %287 : vector<16xf32> to vector<16x1xf32>
    %cst_126 = arith.constant 3.200000e+01 : f32
    %289 = vector.broadcast %cst_126 : f32 to vector<16x1xf32>
    %290 = arith.divf %288, %289 : vector<16x1xf32>
    %291 = vector.broadcast %283 : vector<16x1xf32> to vector<16x32xf32>
    %292 = arith.subf %275, %291 : vector<16x32xf32>
    %cst_127 = arith.constant 9.99999996E-13 : f32
    %293 = vector.broadcast %cst_127 : f32 to vector<16x1xf32>
    %294 = arith.addf %290, %293 : vector<16x1xf32>
    %295 = math.rsqrt %294 : vector<16x1xf32>
    %296 = vector.broadcast %295 : vector<16x1xf32> to vector<16x32xf32>
    %297 = arith.mulf %292, %296 : vector<16x32xf32>
    %298 = vector.broadcast %277 : vector<1x32xf32> to vector<16x32xf32>
    %299 = arith.mulf %297, %298 : vector<16x32xf32>
    %300 = vector.broadcast %279 : vector<1x32xf32> to vector<16x32xf32>
    %301 = arith.addf %299, %300 : vector<16x32xf32>
    %302 = vector.extract_strided_slice %301 {offsets = [0, 0], sizes = [1, 32], strides = [1, 1]} : vector<16x32xf32> to vector<1x32xf32>
    %303 = vector.extract_strided_slice %301 {offsets = [8, 0], sizes = [1, 32], strides = [1, 1]} : vector<16x32xf32> to vector<1x32xf32>
    %304 = tpu.concatenate %302, %303 in 0 : vector<1x32xf32>, vector<1x32xf32> -> vector<2x32xf32>
    %c0_128 = arith.constant 0 : index
    %c0_129 = arith.constant 0 : index
    %305 = vector.load %arg17[%c0_128, %c0_129] : memref<32x128xbf16, #tpu.memory_space<vmem>>, vector<32x128xbf16>
    %306 = arith.truncf %304 : vector<2x32xf32> to vector<2x32xbf16>
    %cst_130 = arith.constant dense<0.000000e+00> : vector<2x128xf32>
    %307 = tpu.matmul %306, %305, %cst_130 {dimension_numbers = #tpu.dot_dimension_numbers<[1], [0], [0], [1], [0, 0, 1, 1], [], []>} : vector<2x32xbf16>, vector<32x128xbf16>, vector<2x128xf32> -> vector<2x128xf32>
    %c0_131 = arith.constant 0 : index
    %c0_132 = arith.constant 0 : index
    %308 = vector.load %arg18[%c0_131, %c0_132] : memref<1x128xf32, #tpu.memory_space<vmem>>, vector<1x128xf32>
    %309 = vector.broadcast %308 : vector<1x128xf32> to vector<2x128xf32>
    %310 = arith.addf %307, %309 : vector<2x128xf32>
    %311 = tpu.iota {dimensions = array<i32: 0>} : vector<128x128xi32>
    %312 = tpu.iota {dimensions = array<i32: 1>} : vector<128x128xi32>
    %313 = arith.cmpi eq, %311, %312 : vector<128x128xi32>
    %314 = vector.extract_strided_slice %310 {offsets = [0, 0], sizes = [1, 128], strides = [1, 1]} : vector<2x128xf32> to vector<1x128xf32>
    %315 = vector.shape_cast %314 : vector<1x128xf32> to vector<1x128xf32>
    %316 = vector.broadcast %315 : vector<1x128xf32> to vector<128x128xf32>
    %cst_133 = arith.constant 0.000000e+00 : f32
    %317 = vector.broadcast %cst_133 : f32 to vector<128x128xf32>
    %318 = arith.select %313, %316, %317 : vector<128x128xi1>, vector<128x128xf32>
    %cst_134 = arith.constant dense<0.000000e+00> : vector<128xf32>
    %319 = vector.multi_reduction <add>, %318, %cst_134 [1] : vector<128x128xf32> to vector<128xf32>
    %320 = vector.shape_cast %319 : vector<128xf32> to vector<128x1xf32>
    %321 = vector.broadcast %320 : vector<128x1xf32> to vector<128x128xf32>
    %322 = arith.cmpf oge, %316, %321 : vector<128x128xf32>
    %323 = arith.extui %322 : vector<128x128xi1> to vector<128x128xi32>
    %324 = arith.sitofp %323 : vector<128x128xi32> to vector<128x128xf32>
    %cst_135 = arith.constant dense<0.000000e+00> : vector<128xf32>
    %325 = vector.multi_reduction <add>, %324, %cst_135 [1] : vector<128x128xf32> to vector<128xf32>
    %326 = vector.shape_cast %325 : vector<128xf32> to vector<128x1xf32>
    %327 = arith.mulf %324, %316 : vector<128x128xf32>
    %cst_136 = arith.constant dense<0.000000e+00> : vector<128xf32>
    %328 = vector.multi_reduction <add>, %327, %cst_136 [1] : vector<128x128xf32> to vector<128xf32>
    %329 = vector.shape_cast %328 : vector<128xf32> to vector<128x1xf32>
    %330 = arith.mulf %326, %320 : vector<128x1xf32>
    %cst_137 = arith.constant 1.000000e+00 : f32
    %331 = vector.broadcast %cst_137 : f32 to vector<128x1xf32>
    %332 = arith.addf %331, %330 : vector<128x1xf32>
    %333 = arith.cmpf ogt, %332, %329 : vector<128x1xf32>
    %334 = arith.extui %333 : vector<128x1xi1> to vector<128x1xi32>
    %335 = arith.sitofp %334 : vector<128x1xi32> to vector<128x1xf32>
    %336 = vector.shape_cast %335 : vector<128x1xf32> to vector<1x128x1xf32>
    %cst_138 = arith.constant dense<0.000000e+00> : vector<1xf32>
    %337 = vector.multi_reduction <add>, %336, %cst_138 [1, 2] : vector<1x128x1xf32> to vector<1xf32>
    %338 = vector.shape_cast %337 : vector<1xf32> to vector<1x1x1xf32>
    %339 = vector.extract %338[0, 0, 0] : f32 from vector<1x1x1xf32>
    %340 = arith.mulf %320, %335 : vector<128x1xf32>
    %341 = vector.shape_cast %340 : vector<128x1xf32> to vector<1x128x1xf32>
    %cst_139 = arith.constant dense<0.000000e+00> : vector<1xf32>
    %342 = vector.multi_reduction <add>, %341, %cst_139 [1, 2] : vector<1x128x1xf32> to vector<1xf32>
    %343 = vector.shape_cast %342 : vector<1xf32> to vector<1x1x1xf32>
    %344 = vector.extract %343[0, 0, 0] : f32 from vector<1x1x1xf32>
    %cst_140 = arith.constant 1.000000e+00 : f32
    %345 = arith.subf %344, %cst_140 : f32
    %346 = arith.divf %345, %339 : f32
    %347 = vector.broadcast %346 : f32 to vector<1x128xf32>
    %348 = arith.subf %314, %347 : vector<1x128xf32>
    %cst_141 = arith.constant 0.000000e+00 : f32
    %349 = vector.broadcast %cst_141 : f32 to vector<1x128xf32>
    %350 = arith.maximumf %348, %349 : vector<1x128xf32>
    %351 = vector.extract_strided_slice %310 {offsets = [1, 0], sizes = [1, 128], strides = [1, 1]} : vector<2x128xf32> to vector<1x128xf32>
    %352 = vector.shape_cast %351 : vector<1x128xf32> to vector<1x128xf32>
    %353 = vector.broadcast %352 : vector<1x128xf32> to vector<128x128xf32>
    %cst_142 = arith.constant 0.000000e+00 : f32
    %354 = vector.broadcast %cst_142 : f32 to vector<128x128xf32>
    %355 = arith.select %313, %353, %354 : vector<128x128xi1>, vector<128x128xf32>
    %cst_143 = arith.constant dense<0.000000e+00> : vector<128xf32>
    %356 = vector.multi_reduction <add>, %355, %cst_143 [1] : vector<128x128xf32> to vector<128xf32>
    %357 = vector.shape_cast %356 : vector<128xf32> to vector<128x1xf32>
    %358 = vector.broadcast %357 : vector<128x1xf32> to vector<128x128xf32>
    %359 = arith.cmpf oge, %353, %358 : vector<128x128xf32>
    %360 = arith.extui %359 : vector<128x128xi1> to vector<128x128xi32>
    %361 = arith.sitofp %360 : vector<128x128xi32> to vector<128x128xf32>
    %cst_144 = arith.constant dense<0.000000e+00> : vector<128xf32>
    %362 = vector.multi_reduction <add>, %361, %cst_144 [1] : vector<128x128xf32> to vector<128xf32>
    %363 = vector.shape_cast %362 : vector<128xf32> to vector<128x1xf32>
    %364 = arith.mulf %361, %353 : vector<128x128xf32>
    %cst_145 = arith.constant dense<0.000000e+00> : vector<128xf32>
    %365 = vector.multi_reduction <add>, %364, %cst_145 [1] : vector<128x128xf32> to vector<128xf32>
    %366 = vector.shape_cast %365 : vector<128xf32> to vector<128x1xf32>
    %367 = arith.mulf %363, %357 : vector<128x1xf32>
    %cst_146 = arith.constant 1.000000e+00 : f32
    %368 = vector.broadcast %cst_146 : f32 to vector<128x1xf32>
    %369 = arith.addf %368, %367 : vector<128x1xf32>
    %370 = arith.cmpf ogt, %369, %366 : vector<128x1xf32>
    %371 = arith.extui %370 : vector<128x1xi1> to vector<128x1xi32>
    %372 = arith.sitofp %371 : vector<128x1xi32> to vector<128x1xf32>
    %373 = vector.shape_cast %372 : vector<128x1xf32> to vector<1x128x1xf32>
    %cst_147 = arith.constant dense<0.000000e+00> : vector<1xf32>
    %374 = vector.multi_reduction <add>, %373, %cst_147 [1, 2] : vector<1x128x1xf32> to vector<1xf32>
    %375 = vector.shape_cast %374 : vector<1xf32> to vector<1x1x1xf32>
    %376 = vector.extract %375[0, 0, 0] : f32 from vector<1x1x1xf32>
    %377 = arith.mulf %357, %372 : vector<128x1xf32>
    %378 = vector.shape_cast %377 : vector<128x1xf32> to vector<1x128x1xf32>
    %cst_148 = arith.constant dense<0.000000e+00> : vector<1xf32>
    %379 = vector.multi_reduction <add>, %378, %cst_148 [1, 2] : vector<1x128x1xf32> to vector<1xf32>
    %380 = vector.shape_cast %379 : vector<1xf32> to vector<1x1x1xf32>
    %381 = vector.extract %380[0, 0, 0] : f32 from vector<1x1x1xf32>
    %cst_149 = arith.constant 1.000000e+00 : f32
    %382 = arith.subf %381, %cst_149 : f32
    %383 = arith.divf %382, %376 : f32
    %384 = vector.broadcast %383 : f32 to vector<1x128xf32>
    %385 = arith.subf %351, %384 : vector<1x128xf32>
    %cst_150 = arith.constant 0.000000e+00 : f32
    %386 = vector.broadcast %cst_150 : f32 to vector<1x128xf32>
    %387 = arith.maximumf %385, %386 : vector<1x128xf32>
    %388 = tpu.concatenate %350, %387 in 0 : vector<1x128xf32>, vector<1x128xf32> -> vector<2x128xf32>
    %c0_151 = arith.constant 0 : index
    %c0_152 = arith.constant 0 : index
    %389 = vector.load %arg19[%c0_151, %c0_152] : memref<2x128xf32, #tpu.memory_space<vmem>>, vector<2x128xf32>
    tpu.vector_store %arg19[%c0_151, %c0_152], %388 {strides = array<i32>} : memref<2x128xf32, #tpu.memory_space<vmem>>, vector<2x128xf32>,
    return
  }
  func.func @transform_0(%arg0: i32) -> (i32, i32) {
    %c0_i32 = arith.constant 0 : i32
    %c0_i32_0 = arith.constant 0 : i32
    %c0_i32_1 = arith.constant 0 : i32
    return %c0_i32, %c0_i32_0 : i32, i32
  }
  func.func @transform_1(%arg0: i32) -> (i32, i32) {
    %c0_i32 = arith.constant 0 : i32
    %c0_i32_0 = arith.constant 0 : i32
    %c0_i32_1 = arith.constant 0 : i32
    return %c0_i32, %c0_i32_0 : i32, i32
  }
  func.func @transform_2(%arg0: i32) -> (i32, i32) {
    %c0_i32 = arith.constant 0 : i32
    %c0_i32_0 = arith.constant 0 : i32
    %c0_i32_1 = arith.constant 0 : i32
    return %c0_i32, %c0_i32_0 : i32, i32
  }
  func.func @transform_3(%arg0: i32) -> (i32, i32) {
    %c0_i32 = arith.constant 0 : i32
    %c0_i32_0 = arith.constant 0 : i32
    %c0_i32_1 = arith.constant 0 : i32
    return %c0_i32, %c0_i32_0 : i32, i32
  }
  func.func @transform_4(%arg0: i32) -> (i32, i32, i32) {
    %c0_i32 = arith.constant 0 : i32
    %c0_i32_0 = arith.constant 0 : i32
    %c0_i32_1 = arith.constant 0 : i32
    %c0_i32_2 = arith.constant 0 : i32
    return %c0_i32, %c0_i32_0, %c0_i32_1 : i32, i32, i32
  }
  func.func @transform_5(%arg0: i32) -> (i32, i32, i32) {
    %c0_i32 = arith.constant 0 : i32
    %c0_i32_0 = arith.constant 0 : i32
    %c0_i32_1 = arith.constant 0 : i32
    %c0_i32_2 = arith.constant 0 : i32
    return %c0_i32, %c0_i32_0, %c0_i32_1 : i32, i32, i32
  }
  func.func @transform_6(%arg0: i32) -> (i32, i32, i32) {
    %c0_i32 = arith.constant 0 : i32
    %c0_i32_0 = arith.constant 0 : i32
    %c0_i32_1 = arith.constant 0 : i32
    %c0_i32_2 = arith.constant 0 : i32
    return %c0_i32, %c0_i32_0, %c0_i32_1 : i32, i32, i32
  }
  func.func @transform_7(%arg0: i32) -> (i32, i32, i32) {
    %c0_i32 = arith.constant 0 : i32
    %c0_i32_0 = arith.constant 0 : i32
    %c0_i32_1 = arith.constant 0 : i32
    %c0_i32_2 = arith.constant 0 : i32
    return %c0_i32, %c0_i32_0, %c0_i32_1 : i32, i32, i32
  }
  func.func @transform_8(%arg0: i32) -> (i32, i32, i32) {
    %c0_i32 = arith.constant 0 : i32
    %c0_i32_0 = arith.constant 0 : i32
    %c0_i32_1 = arith.constant 0 : i32
    %c0_i32_2 = arith.constant 0 : i32
    return %c0_i32, %c0_i32_0, %c0_i32_1 : i32, i32, i32
  }
  func.func @transform_9(%arg0: i32) -> (i32, i32, i32) {
    %c0_i32 = arith.constant 0 : i32
    %c0_i32_0 = arith.constant 0 : i32
    %c0_i32_1 = arith.constant 0 : i32
    %c0_i32_2 = arith.constant 0 : i32
    return %c0_i32, %c0_i32_0, %c0_i32_1 : i32, i32, i32
  }
  func.func @transform_10(%arg0: i32) -> (i32, i32, i32) {
    %c0_i32 = arith.constant 0 : i32
    %c0_i32_0 = arith.constant 0 : i32
    %c0_i32_1 = arith.constant 0 : i32
    %c0_i32_2 = arith.constant 0 : i32
    return %c0_i32, %c0_i32_0, %c0_i32_1 : i32, i32, i32
  }
  func.func @transform_11(%arg0: i32) -> (i32, i32, i32) {
    %c0_i32 = arith.constant 0 : i32
    %c0_i32_0 = arith.constant 0 : i32
    %c0_i32_1 = arith.constant 0 : i32
    %c0_i32_2 = arith.constant 0 : i32
    return %c0_i32, %c0_i32_0, %c0_i32_1 : i32, i32, i32
  }
  func.func @transform_12(%arg0: i32) -> (i32, i32, i32) {
    %c0_i32 = arith.constant 0 : i32
    %c0_i32_0 = arith.constant 0 : i32
    %c0_i32_1 = arith.constant 0 : i32
    %c0_i32_2 = arith.constant 0 : i32
    return %c0_i32, %c0_i32_0, %c0_i32_1 : i32, i32, i32
  }
  func.func @transform_13(%arg0: i32) -> (i32, i32, i32) {
    %c0_i32 = arith.constant 0 : i32
    %c0_i32_0 = arith.constant 0 : i32
    %c0_i32_1 = arith.constant 0 : i32
    %c0_i32_2 = arith.constant 0 : i32
    return %c0_i32, %c0_i32_0, %c0_i32_1 : i32, i32, i32
  }
  func.func @transform_14(%arg0: i32) -> (i32, i32, i32) {
    %c0_i32 = arith.constant 0 : i32
    %c0_i32_0 = arith.constant 0 : i32
    %c0_i32_1 = arith.constant 0 : i32
    %c0_i32_2 = arith.constant 0 : i32
    return %c0_i32, %c0_i32_0, %c0_i32_1 : i32, i32, i32
  }
  func.func @transform_15(%arg0: i32) -> (i32, i32, i32) {
    %c0_i32 = arith.constant 0 : i32
    %c0_i32_0 = arith.constant 0 : i32
    %c0_i32_1 = arith.constant 0 : i32
    %c0_i32_2 = arith.constant 0 : i32
    return %c0_i32, %c0_i32_0, %c0_i32_1 : i32, i32, i32
  }
  func.func @transform_16(%arg0: i32) -> (i32, i32) {
    %c0_i32 = arith.constant 0 : i32
    %c0_i32_0 = arith.constant 0 : i32
    %c0_i32_1 = arith.constant 0 : i32
    return %c0_i32, %c0_i32_0 : i32, i32
  }
  func.func @transform_17(%arg0: i32) -> (i32, i32) {
    %c0_i32 = arith.constant 0 : i32
    %c0_i32_0 = arith.constant 0 : i32
    %c0_i32_1 = arith.constant 0 : i32
    return %c0_i32, %c0_i32_0 : i32, i32
  }
  func.func @transform_18(%arg0: i32) -> (i32, i32) {
    %c0_i32 = arith.constant 0 : i32
    %c0_i32_0 = arith.constant 0 : i32
    %c0_i32_1 = arith.constant 0 : i32
    return %c0_i32, %c0_i32_0 : i32, i32
  }
}

</mosaic_0001>

<llo_original>
// kernel: tpu_custom_call.1
$region0: #{tpu_custom_call.1}
  #allocation0 [shape = 'u32[]', space=smem, size = 0x4, offset = 0x4, fixed_abs, tag = 'smem constant byte address 0x4 - core index']
  #allocation1 [shape = 'u32[72,128]{1,0:T(1,128)}', space=vmem, size = 0x9000, scoped, tag = 'internal scratch']
  %s0 = inlined_call_operand.hbm [shape: f32[16,32], index: 0, kind: input, shape index: {}]
  %s1 = inlined_call_operand.vmem [shape: f32[64,64], index: 1, kind: input, shape index: {}]
  %s2 = inlined_call_operand.vmem [shape: f32[1,32], index: 2, kind: input, shape index: {}]
  %s3 = inlined_call_operand.hbm [shape: f32[1,32], index: 3, kind: input, shape index: {}]
  %s4 = inlined_call_operand.vmem [shape: bf16[2,32,96], index: 4, kind: input, shape index: {}]
  %s5 = inlined_call_operand.vmem [shape: f32[2,1,96], index: 5, kind: input, shape index: {}]
  %s6 = inlined_call_operand.hbm [shape: bf16[2,32,32], index: 6, kind: input, shape index: {}]
  %s7 = inlined_call_operand.vmem [shape: f32[2,1,32], index: 7, kind: input, shape index: {}]
  %s8 = inlined_call_operand.vmem [shape: f32[2,1,32], index: 8, kind: input, shape index: {}]
  %s9 = inlined_call_operand.hbm [shape: f32[2,1,32], index: 9, kind: input, shape index: {}]
  %s10 = inlined_call_operand.hbm [shape: bf16[2,32,64], index: 10, kind: input, shape index: {}]
  %s11 = inlined_call_operand.vmem [shape: f32[2,1,64], index: 11, kind: input, shape index: {}]
  %s12 = inlined_call_operand.vmem [shape: bf16[2,64,32], index: 12, kind: input, shape index: {}]
  %s13 = inlined_call_operand.vmem [shape: f32[2,1,32], index: 13, kind: input, shape index: {}]
  %s14 = inlined_call_operand.vmem [shape: f32[2,1,32], index: 14, kind: input, shape index: {}]
  %s15 = inlined_call_operand.hbm [shape: f32[2,1,32], index: 15, kind: input, shape index: {}]
  %s16 = inlined_call_operand.hbm [shape: bf16[32,128], index: 16, kind: input, shape index: {}]
  %s17 = inlined_call_operand.vmem [shape: f32[1,128], index: 17, kind: input, shape index: {}]
  %s18 = inlined_call_operand.hbm [shape: f32[2,128], index: 18, kind: output, shape index: {}]
  %s19 = sld [smem:[#allocation0]]
  $region110: #{tpu_custom_call.1} parent=0
    _
  %s21 = ssub.s32 1, %s19
  %s22 = scalar_select 0, %s21, %s19
  $region1: #{tpu_custom_call.1} parent=0
    #allocation2 [shape = 'u8[8192]{0}', space=vmem, size = 0x2000, scoped, tag = 'input window, operand 0, single buffered']
    #allocation3 [shape = 's32[1]{0}', space=sflag, size = 0x4, scoped, tag = 'scoped memory for tpu_custom_call.1']
    #allocation4 [shape = 's32[1]{0}', space=sflag, size = 0x4, scoped, tag = 'scoped memory for tpu_custom_call.1']
    #allocation5 [shape = 'u8[512]{0}', space=vmem, size = 0x400, scoped, tag = 'input window, operand 3, single buffered']
    #allocation6 [shape = 's32[1]{0}', space=sflag, size = 0x4, scoped, tag = 'scoped memory for tpu_custom_call.1']
    #allocation7 [shape = 'u8[16384]{0}', space=vmem, size = 0x4000, scoped, tag = 'input window, operand 6, single buffered']
    #allocation8 [shape = 'u8[1024]{0}', space=vmem, size = 0x400, scoped, tag = 'input window, operand 9, single buffered']
    #allocation9 [shape = 's32[1]{0}', space=sflag, size = 0x4, scoped, tag = 'scoped memory for tpu_custom_call.1']
    #allocation10 [shape = 'u8[16384]{0}', space=vmem, size = 0x4000, scoped, tag = 'input window, operand 10, single buffered']
    #allocation11 [shape = 'u8[1024]{0}', space=vmem, size = 0x400, scoped, tag = 'input window, operand 15, single buffered']
    #allocation12 [shape = 's32[1]{0}', space=sflag, size = 0x4, scoped, tag = 'scoped memory for tpu_custom_call.1']
    #allocation13 [shape = 'u8[8192]{0}', space=vmem, size = 0x2000, scoped, tag = 'input window, operand 16, single buffered']
    #allocation14 [shape = 'u8[1024]{0}', space=vmem, size = 0x400, scoped, tag = 'output window, operand 0, single buffered']
    %23 = vsyncpa [#allocation3], 0
    %24 = vsyncpa [#allocation6], 0
    %25 = vsyncpa [#allocation9], 0
    %26 = vsyncpa [#allocation12], 0
    %27 = vsyncpa [#allocation4], 0
    // Predicated region
    $region2: #{tpu_custom_call.1} parent=1 // pred_check
      _
    $region3: #{tpu_custom_call.1} parent=1 // pred_check_branch
      %29 = sbr.rel (0) target = $region5
    $region4: #{tpu_custom_call.1} parent=1 // pred_region
      %31 = vsyncadd [#allocation3], 0
      %s32 = sshll.u32 %s0, 4
      %s33 = int_to_ptr.hbm [resolvable:$true] %s32
      %s34 = sshll.u32 [#allocation2], 4
      %s35 = int_to_ptr.vmem [resolvable:$true] %s34
      %40 = dma.hbm_to_vmem [thread:$0]  %s33, 256, %s35, [#allocation3], 128, 128, 8
    $region5: #{tpu_custom_call.1} parent=1 // pred_fallthru
      _
    // Predicated region
    $region6: #{tpu_custom_call.1} parent=1 // pred_check
      _
    $region7: #{tpu_custom_call.1} parent=1 // pred_check_branch
      %42 = sbr.rel (0) target = $region9
    $region8: #{tpu_custom_call.1} parent=1 // pred_region
      _
    $region9: #{tpu_custom_call.1} parent=1 // pred_fallthru
      _
    // Predicated region
    $region10: #{tpu_custom_call.1} parent=1 // pred_check
      _
    $region11: #{tpu_custom_call.1} parent=1 // pred_check_branch
      %44 = sbr.rel (0) target = $region13
    $region12: #{tpu_custom_call.1} parent=1 // pred_region
      _
    $region13: #{tpu_custom_call.1} parent=1 // pred_fallthru
      _
    // Predicated region
    $region14: #{tpu_custom_call.1} parent=1 // pred_check
      _
    $region15: #{tpu_custom_call.1} parent=1 // pred_check_branch
      %46 = sbr.rel (0) target = $region17
    $region16: #{tpu_custom_call.1} parent=1 // pred_region
      %48 = vsyncadd [#allocation6], 0
      %s50 = sshll.u32 %s3, 4
      %s51 = int_to_ptr.hbm [resolvable:$true] %s50
      %s52 = sshll.u32 [#allocation5], 4
      %s53 = int_to_ptr.vmem [resolvable:$true] %s52
      %55 = dma.hbm_to_vmem [thread:$0]  %s51, 16, %s53, [#allocation6]
    $region17: #{tpu_custom_call.1} parent=1 // pred_fallthru
      _
    // Predicated region
    $region18: #{tpu_custom_call.1} parent=1 // pred_check
      _
    $region19: #{tpu_custom_call.1} parent=1 // pred_check_branch
      %57 = sbr.rel (0) target = $region21
    $region20: #{tpu_custom_call.1} parent=1 // pred_region
      _
    $region21: #{tpu_custom_call.1} parent=1 // pred_fallthru
      _
    // Predicated region
    $region22: #{tpu_custom_call.1} parent=1 // pred_check
      _
    $region23: #{tpu_custom_call.1} parent=1 // pred_check_branch
      %59 = sbr.rel (0) target = $region25
    $region24: #{tpu_custom_call.1} parent=1 // pred_region
      _
    $region25: #{tpu_custom_call.1} parent=1 // pred_fallthru
      _
    // Predicated region
    $region26: #{tpu_custom_call.1} parent=1 // pred_check
      _
    $region27: #{tpu_custom_call.1} parent=1 // pred_check_branch
      %61 = sbr.rel (0) target = $region29
    $region28: #{tpu_custom_call.1} parent=1 // pred_region
      %63 = vsyncadd [#allocation6], 0
      %s64 = sshll.u32 %s6, 4
      %s65 = int_to_ptr.hbm [resolvable:$true] %s64
      %s66 = sshll.u32 [#allocation7], 4
      %s67 = int_to_ptr.vmem [resolvable:$true] %s66
      %72 = dma.hbm_to_vmem [thread:$0]  %s65, 512, %s67, [#allocation6], 64, 64, 4
    $region29: #{tpu_custom_call.1} parent=1 // pred_fallthru
      _
    // Predicated region
    $region30: #{tpu_custom_call.1} parent=1 // pred_check
      _
    $region31: #{tpu_custom_call.1} parent=1 // pred_check_branch
      %74 = sbr.rel (0) target = $region33
    $region32: #{tpu_custom_call.1} parent=1 // pred_region
      _
    $region33: #{tpu_custom_call.1} parent=1 // pred_fallthru
      _
    // Predicated region
    $region34: #{tpu_custom_call.1} parent=1 // pred_check
      _
    $region35: #{tpu_custom_call.1} parent=1 // pred_check_branch
      %76 = sbr.rel (0) target = $region37
    $region36: #{tpu_custom_call.1} parent=1 // pred_region
      _
    $region37: #{tpu_custom_call.1} parent=1 // pred_fallthru
      _
    // Predicated region
    $region38: #{tpu_custom_call.1} parent=1 // pred_check
      _
    $region39: #{tpu_custom_call.1} parent=1 // pred_check_branch
      %78 = sbr.rel (0) target = $region41
    $region40: #{tpu_custom_call.1} parent=1 // pred_region
      %80 = vsyncadd [#allocation9], 0
      %s81 = sshll.u32 %s9, 4
      %s82 = int_to_ptr.hbm [resolvable:$true] %s81
      %s83 = sshll.u32 [#allocation8], 4
      %s84 = int_to_ptr.vmem [resolvable:$true] %s83
      %89 = dma.hbm_to_vmem [thread:$0]  %s82, 32, %s84, [#allocation9], 16, 16, 1
    $region41: #{tpu_custom_call.1} parent=1 // pred_fallthru
      _
    // Predicated region
    $region42: #{tpu_custom_call.1} parent=1 // pred_check
      _
    $region43: #{tpu_custom_call.1} parent=1 // pred_check_branch
      %91 = sbr.rel (0) target = $region45
    $region44: #{tpu_custom_call.1} parent=1 // pred_region
      %93 = vsyncadd [#allocation9], 0
      %s94 = sshll.u32 %s10, 4
      %s95 = int_to_ptr.hbm [resolvable:$true] %s94
      %s96 = sshll.u32 [#allocation10], 4
      %s97 = int_to_ptr.vmem [resolvable:$true] %s96
      %102 = dma.hbm_to_vmem [thread:$0]  %s95, 512, %s97, [#allocation9], 64, 64, 4
    $region45: #{tpu_custom_call.1} parent=1 // pred_fallthru
      _
    // Predicated region
    $region46: #{tpu_custom_call.1} parent=1 // pred_check
      _
    $region47: #{tpu_custom_call.1} parent=1 // pred_check_branch
      %104 = sbr.rel (0) target = $region49
    $region48: #{tpu_custom_call.1} parent=1 // pred_region
      _
    $region49: #{tpu_custom_call.1} parent=1 // pred_fallthru
      _
    // Predicated region
    $region50: #{tpu_custom_call.1} parent=1 // pred_check
      _
    $region51: #{tpu_custom_call.1} parent=1 // pred_check_branch
      %106 = sbr.rel (0) target = $region53
    $region52: #{tpu_custom_call.1} parent=1 // pred_region
      _
    $region53: #{tpu_custom_call.1} parent=1 // pred_fallthru
      _
    // Predicated region
    $region54: #{tpu_custom_call.1} parent=1 // pred_check
      _
    $region55: #{tpu_custom_call.1} parent=1 // pred_check_branch
      %108 = sbr.rel (0) target = $region57
    $region56: #{tpu_custom_call.1} parent=1 // pred_region
      _
    $region57: #{tpu_custom_call.1} parent=1 // pred_fallthru
      _
    // Predicated region
    $region58: #{tpu_custom_call.1} parent=1 // pred_check
      _
    $region59: #{tpu_custom_call.1} parent=1 // pred_check_branch
      %110 = sbr.rel (0) target = $region61
    $region60: #{tpu_custom_call.1} parent=1 // pred_region
      _
    $region61: #{tpu_custom_call.1} parent=1 // pred_fallthru
      _
    // Predicated region
    $region62: #{tpu_custom_call.1} parent=1 // pred_check
      _
    $region63: #{tpu_custom_call.1} parent=1 // pred_check_branch
      %112 = sbr.rel (0) target = $region65
    $region64: #{tpu_custom_call.1} parent=1 // pred_region
      %114 = vsyncadd [#allocation12], 0
      %s115 = sshll.u32 %s15, 4
      %s116 = int_to_ptr.hbm [resolvable:$true] %s115
      %s117 = sshll.u32 [#allocation11], 4
      %s118 = int_to_ptr.vmem [resolvable:$true] %s117
      %123 = dma.hbm_to_vmem [thread:$0]  %s116, 32, %s118, [#allocation12], 16, 16, 1
    $region65: #{tpu_custom_call.1} parent=1 // pred_fallthru
      _
    // Predicated region
    $region66: #{tpu_custom_call.1} parent=1 // pred_check
      _
    $region67: #{tpu_custom_call.1} parent=1 // pred_check_branch
      %125 = sbr.rel (0) target = $region69
    $region68: #{tpu_custom_call.1} parent=1 // pred_region
      %127 = vsyncadd [#allocation12], 0
      %s128 = sshll.u32 %s16, 4
      %s129 = int_to_ptr.hbm [resolvable:$true] %s128
      %s130 = sshll.u32 [#allocation13], 4
      %s131 = int_to_ptr.vmem [resolvable:$true] %s130
      %136 = dma.hbm_to_vmem [thread:$0]  %s129, 256, %s131, [#allocation12], 64, 64, 4
    $region69: #{tpu_custom_call.1} parent=1 // pred_fallthru
      _
    // Predicated region
    $region70: #{tpu_custom_call.1} parent=1 // pred_check
      _
    $region71: #{tpu_custom_call.1} parent=1 // pred_check_branch
      %138 = sbr.rel (0) target = $region73
    $region72: #{tpu_custom_call.1} parent=1 // pred_region
      _
    $region73: #{tpu_custom_call.1} parent=1 // pred_fallthru
      _
    // Predicated region
    $region74: #{tpu_custom_call.1} parent=1 // pred_check
      _
    $region75: #{tpu_custom_call.1} parent=1 // pred_check_branch
      %140 = sbr.rel (0) target = $region77
    $region76: #{tpu_custom_call.1} parent=1 // pred_region
      %142 = dma.done [#allocation3], 256
    $region77: #{tpu_custom_call.1} parent=1 // pred_fallthru
      _
    // Predicated region
    $region78: #{tpu_custom_call.1} parent=1 // pred_check
      _
    $region79: #{tpu_custom_call.1} parent=1 // pred_check_branch
      %144 = sbr.rel (0) target = $region81
    $region80: #{tpu_custom_call.1} parent=1 // pred_region
      %146 = dma.done [#allocation6], 16
    $region81: #{tpu_custom_call.1} parent=1 // pred_fallthru
      _
    // Predicated region
    $region82: #{tpu_custom_call.1} parent=1 // pred_check
      _
    $region83: #{tpu_custom_call.1} parent=1 // pred_check_branch
      %148 = sbr.rel (0) target = $region85
    $region84: #{tpu_custom_call.1} parent=1 // pred_region
      %150 = dma.done [#allocation6], 512
    $region85: #{tpu_custom_call.1} parent=1 // pred_fallthru
      _
    // Predicated region
    $region86: #{tpu_custom_call.1} parent=1 // pred_check
      _
    $region87: #{tpu_custom_call.1} parent=1 // pred_check_branch
      %152 = sbr.rel (0) target = $region89
    $region88: #{tpu_custom_call.1} parent=1 // pred_region
      %154 = dma.done [#allocation9], 32
    $region89: #{tpu_custom_call.1} parent=1 // pred_fallthru
      _
    // Predicated region
    $region90: #{tpu_custom_call.1} parent=1 // pred_check
      _
    $region91: #{tpu_custom_call.1} parent=1 // pred_check_branch
      %156 = sbr.rel (0) target = $region93
    $region92: #{tpu_custom_call.1} parent=1 // pred_region
      %158 = dma.done [#allocation9], 512
    $region93: #{tpu_custom_call.1} parent=1 // pred_fallthru
      _
    // Predicated region
    $region94: #{tpu_custom_call.1} parent=1 // pred_check
      _
    $region95: #{tpu_custom_call.1} parent=1 // pred_check_branch
      %160 = sbr.rel (0) target = $region97
    $region96: #{tpu_custom_call.1} parent=1 // pred_region
      %162 = dma.done [#allocation12], 32
    $region97: #{tpu_custom_call.1} parent=1 // pred_fallthru
      _
    // Predicated region
    $region98: #{tpu_custom_call.1} parent=1 // pred_check
      _
    $region99: #{tpu_custom_call.1} parent=1 // pred_check_branch
      %164 = sbr.rel (0) target = $region101
    $region100: #{tpu_custom_call.1} parent=1 // pred_region
      %166 = dma.done [#allocation12], 256
    $region101: #{tpu_custom_call.1} parent=1 // pred_fallthru
      _
    %v168 = vld [vmem:[%s1] sm:$0xff]
    %v169 = vld [vmem:[%s1 + $0x8] sm:$0xff]
    %v170 = vld [vmem:[%s1 + $0x10] sm:$0xff]
    %v171 = vld [vmem:[%s1 + $0x18] sm:$0xff]
    %v172 = vld [vmem:[%s1 + $0x20] sm:$0xff]
    %v173 = vld [vmem:[%s1 + $0x28] sm:$0xff]
    %v174 = vld [vmem:[%s1 + $0x30] sm:$0xff]
    %v175 = vld [vmem:[%s1 + $0x38] sm:$0xff]
    %v176 = vld [vmem:[#allocation2] sm:$0xff]
    %v177 = vld [vmem:[#allocation2 + $0x8] sm:$0xff]
    %v178 = vld [vmem:[%s2] sm:$0x1]
    %v179 = vld [vmem:[#allocation5] sm:$0x1]
    %vm180 = vcmask 261120
    %v181 = vsel %vm180, %v176, 0.0
    %182 = vadd.xlane.f32.xlu0 %v181
    %v183 = vpop.xlane.xlu0 %182
    %v184 = vsel %vm180, %v177, 0.0
    %185 = vadd.xlane.f32.xlu0 %v184
    %v186 = vpop.xlane.xlu0 %185
    %v187 = vrcp.pop 32.0
    %v188 = vmul.f32 32.0, %v187
    %v189 = vsub.f32 1.0, %v188
    %v190 = vmul.f32 %v187, %v189
    %v191 = vadd.f32 %v187, %v190
    %vm192 = vweird.f32 %v187
    %v193 = vsel %vm192, %v187, %v191
    %v194 = vmul.f32 %v183, %v193
    %v195 = vmul.f32 %v186, %v193
    %v196 = vsub.f32 %v176, %v194
    %v197 = vsub.f32 %v177, %v195
    %v198 = vmul.f32 %v196, %v196
    %v199 = vmul.f32 %v197, %v197
    %v200 = vsel %vm180, %v198, 0.0
    %201 = vadd.xlane.f32.xlu0 %v200
    %v202 = vpop.xlane.xlu0 %201
    %v203 = vsel %vm180, %v199, 0.0
    %204 = vadd.xlane.f32.xlu0 %v203
    %v205 = vpop.xlane.xlu0 %204
    %v206 = vmul.f32 %v202, %v193
    %v207 = vmul.f32 %v205, %v193
    %v208 = vadd.f32 %v206, 1e-12
    %v209 = vadd.f32 %v207, 1e-12
    %v210 = vrsqrt.pop %v208
    %v211 = vmul.f32 %v210, %v208
    %v212 = vmul.f32 %v211, %v210
    %v213 = vmul.f32 0.5, %v212
    %v214 = vsub.f32 1.5, %v213
    %v215 = vmul.f32 %v210, %v214
    %vm216 = vweird.f32 %v208
    %vm217 = vweird.f32 %v210
    %vm218 = vmor %vm216, %vm217
    %v219 = vsel %vm218, %v210, %v215
    %v220 = vrsqrt.pop %v209
    %v221 = vmul.f32 %v220, %v209
    %v222 = vmul.f32 %v221, %v220
    %v223 = vmul.f32 0.5, %v222
    %v224 = vsub.f32 1.5, %v223
    %v225 = vmul.f32 %v220, %v224
    %vm226 = vweird.f32 %v209
    %vm227 = vweird.f32 %v220
    %vm228 = vmor %vm226, %vm227
    %v229 = vsel %vm228, %v220, %v225
    %v230 = vmul.f32 %v196, %v219
    %v231 = vmul.f32 %v197, %v229
    %v233 = vperm.slane %v178, 0
    %v235 = vmul.f32 %v230, %v233
    %v236 = vmul.f32 %v231, %v233
    %v238 = vperm.slane %v179, 0
    %v240 = vadd.f32 %v235, %v238
    %v241 = vadd.f32 %v236, %v238
    %v242 = vld [vmem:[%s4] sm:$0xf]
    %v243 = vld [vmem:[%s4 + $0x4] sm:$0xf]
    %v244 = vld [vmem:[%s4 + $0x8] sm:$0xf]
    %v245 = vld [vmem:[%s4 + $0xc] sm:$0xf]
    %v246 = vpack.c.bf16 %v241, %v240
    %v247 = vld [vmem:[%s5] sm:$0x1]
    %v249 = vperm.slane %v247, 0
    %v255 = vunpack.c.l.b16 %v242
    %v256 = vunpack.c.l.b16 %v243
    %v257 = vunpack.c.l.b16 %v244
    %v258 = vunpack.c.l.b16 %v245
    %v259 = vpack.c.b16 %v256, %v255
    %v260 = vpack.c.b16 %v258, %v257
    %v264 = vsel %vm180, %v246, 0
    %266 = vmatpush.bf16.msra.mxu0 0
    %267 = vmatpush.bf16.msra.mxu0 0
    %268 = vmatpush.bf16.msra.mxu0 0
    %269 = vmatpush.bf16.msra.mxu0 0
    %270 = vmatpush.bf16.msra.mxu0 0
    %271 = vmatpush.bf16.msra.mxu0 0
    %272 = vmatpush.bf16.msra.mxu0 %v260
    %273 = vmatpush.bf16.msra.mxu0 %v259
    %274 = vmatmul.bf16.gmra.mxu0 %v264
    %v275 = vpop.f32.mrf.mxu0
    %v276 = vadd.f32 %v249, %v275
    %v277 = vpop.f32.mrf.mxu0
    %v278 = vadd.f32 %v249, %v277
    %279 = vdwg.mxu0
    %282 = vrot.lane.b32.xlu0 %v276, 120
    %v283 = vpop.permute.xlu0 %282
    %284 = vrot.lane.b32.xlu0 %v278, 120
    %v285 = vpop.permute.xlu0 %284
    %288 = vrot.lane.b32.xlu0 %v276, 112
    %v289 = vpop.permute.xlu0 %288
    %290 = vrot.lane.b32.xlu0 %v278, 112
    %v291 = vpop.permute.xlu0 %290
    %294 = vrot.lane.b32.xlu0 %v276, 104
    %v295 = vpop.permute.xlu0 %294
    %296 = vrot.lane.b32.xlu0 %v278, 104
    %v297 = vpop.permute.xlu0 %296
    %v300 = vpack.c.bf16 %v278, %v276
    %v301 = vpack.c.bf16 %v285, %v283
    %v302 = vpack.c.bf16 %v291, %v289
    %v303 = vpack.c.bf16 %v297, %v295
    %308 = vrot.lane.b32.xlu0 %v300, 96
    %v309 = vpop.permute.xlu0 %308
    %310 = vrot.lane.b32.xlu0 %v301, 96
    %v311 = vpop.permute.xlu0 %310
    %312 = vrot.lane.b32.xlu0 %v302, 96
    %v313 = vpop.permute.xlu0 %312
    %314 = vrot.lane.b32.xlu0 %v303, 96
    %v315 = vpop.permute.xlu0 %314
    %vm316 = vcmask 64512
    %v318 = vsel %vm316, %v300, 0
    %v321 = vsel %vm316, %v301, 0
    %v324 = vsel %vm316, %v302, 0
    %v327 = vsel %vm316, %v303, 0
    %v330 = vsel %vm316, %v309, 0
    %v333 = vsel %vm316, %v311, 0
    %v336 = vsel %vm316, %v313, 0
    %v339 = vsel %vm316, %v315, 0
    %341 = vmatpush.bf16.xpose.msra.mxu0 0
    %342 = vmatpush.bf16.xpose.msra.mxu0 0
    %343 = vmatpush.bf16.xpose.msra.mxu0 0
    %344 = vmatpush.bf16.xpose.msra.mxu0 0
    %345 = vmatpush.bf16.xpose.msra.mxu0 %v339
    %346 = vmatpush.bf16.xpose.msra.mxu0 %v336
    %347 = vmatpush.bf16.xpose.msra.mxu0 %v333
    %348 = vmatpush.bf16.xpose.msra.mxu0 %v330
    %349 = vmatmul.bf16.gmra.mxu0 %v318
    %v350 = vpop.f32.mrf.mxu0
    %v351 = vadd.f32 0.0, %v350
    %v352 = vpop.f32.mrf.mxu0
    %v353 = vadd.f32 0.0, %v352
    %354 = vmatmul.bf16.gmra.mxu0 %v321
    %v355 = vpop.f32.mrf.mxu0
    %v356 = vadd.f32 0.0, %v355
    %v357 = vpop.f32.mrf.mxu0
    %v358 = vadd.f32 0.0, %v357
    %359 = vmatmul.bf16.gmra.mxu0 %v324
    %v360 = vpop.f32.mrf.mxu0
    %v361 = vadd.f32 0.0, %v360
    %v362 = vpop.f32.mrf.mxu0
    %v363 = vadd.f32 0.0, %v362
    %364 = vmatmul.bf16.gmra.mxu0 %v327
    %v365 = vpop.f32.mrf.mxu0
    %v366 = vadd.f32 0.0, %v365
    %v367 = vpop.f32.mrf.mxu0
    %v368 = vadd.f32 0.0, %v367
    %369 = vdwg.mxu0
    %v370 = vmul.f32 %v351, 0.35355338
    %v371 = vmul.f32 %v353, 0.35355338
    %v372 = vmul.f32 %v356, 0.35355338
    %v373 = vmul.f32 %v358, 0.35355338
    %v374 = vmul.f32 %v361, 0.35355338
    %v375 = vmul.f32 %v363, 0.35355338
    %v376 = vmul.f32 %v366, 0.35355338
    %v377 = vmul.f32 %v368, 0.35355338
    %v378 = vadd.f32 %v370, %v168
    %v379 = vadd.f32 %v371, %v169
    %v380 = vadd.f32 %v372, %v170
    %v381 = vadd.f32 %v373, %v171
    %v382 = vadd.f32 %v374, %v172
    %v383 = vadd.f32 %v375, %v173
    %v384 = vadd.f32 %v376, %v174
    %v385 = vadd.f32 %v377, %v175
    %vm386 = vcmask 523264
    %v387 = vsel %vm386, %v378, -inf
    %388 = vmax.xlane.f32.xlu0 %v387
    %v389 = vpop.xlane.xlu0 %388
    %v390 = vsel %vm386, %v379, -inf
    %391 = vmax.xlane.f32.xlu0 %v390
    %v392 = vpop.xlane.xlu0 %391
    %v393 = vsel %vm386, %v380, -inf
    %394 = vmax.xlane.f32.xlu0 %v393
    %v395 = vpop.xlane.xlu0 %394
    %v396 = vsel %vm386, %v381, -inf
    %397 = vmax.xlane.f32.xlu0 %v396
    %v398 = vpop.xlane.xlu0 %397
    %v399 = vsel %vm386, %v382, -inf
    %400 = vmax.xlane.f32.xlu0 %v399
    %v401 = vpop.xlane.xlu0 %400
    %v402 = vsel %vm386, %v383, -inf
    %403 = vmax.xlane.f32.xlu0 %v402
    %v404 = vpop.xlane.xlu0 %403
    %v405 = vsel %vm386, %v384, -inf
    %406 = vmax.xlane.f32.xlu0 %v405
    %v407 = vpop.xlane.xlu0 %406
    %v408 = vsel %vm386, %v385, -inf
    %409 = vmax.xlane.f32.xlu0 %v408
    %v410 = vpop.xlane.xlu0 %409
    %v411 = vsub.f32 %v378, %v389
    %v412 = vsub.f32 %v379, %v392
    %v413 = vsub.f32 %v380, %v395
    %v414 = vsub.f32 %v381, %v398
    %v415 = vsub.f32 %v382, %v401
    %v416 = vsub.f32 %v383, %v404
    %v417 = vsub.f32 %v384, %v407
    %v418 = vsub.f32 %v385, %v410
    %v419 = vmul.f32 %v411, 1.442695
    %v420 = vpow.pop %v419
    %v421 = vmul.f32 %v412, 1.442695
    %v422 = vpow.pop %v421
    %v423 = vmul.f32 %v413, 1.442695
    %v424 = vpow.pop %v423
    %v425 = vmul.f32 %v414, 1.442695
    %v426 = vpow.pop %v425
    %v427 = vmul.f32 %v415, 1.442695
    %v428 = vpow.pop %v427
    %v429 = vmul.f32 %v416, 1.442695
    %v430 = vpow.pop %v429
    %v431 = vmul.f32 %v417, 1.442695
    %v432 = vpow.pop %v431
    %v433 = vmul.f32 %v418, 1.442695
    %v434 = vpow.pop %v433
    %v435 = vsel %vm386, %v420, 0.0
    %436 = vadd.xlane.f32.xlu0 %v435
    %v437 = vpop.xlane.xlu0 %436
    %v438 = vsel %vm386, %v422, 0.0
    %439 = vadd.xlane.f32.xlu0 %v438
    %v440 = vpop.xlane.xlu0 %439
    %v441 = vsel %vm386, %v424, 0.0
    %442 = vadd.xlane.f32.xlu0 %v441
    %v443 = vpop.xlane.xlu0 %442
    %v444 = vsel %vm386, %v426, 0.0
    %445 = vadd.xlane.f32.xlu0 %v444
    %v446 = vpop.xlane.xlu0 %445
    %v447 = vsel %vm386, %v428, 0.0
    %448 = vadd.xlane.f32.xlu0 %v447
    %v449 = vpop.xlane.xlu0 %448
    %v450 = vsel %vm386, %v430, 0.0
    %451 = vadd.xlane.f32.xlu0 %v450
    %v452 = vpop.xlane.xlu0 %451
    %v453 = vsel %vm386, %v432, 0.0
    %454 = vadd.xlane.f32.xlu0 %v453
    %v455 = vpop.xlane.xlu0 %454
    %v456 = vsel %vm386, %v434, 0.0
    %457 = vadd.xlane.f32.xlu0 %v456
    %v458 = vpop.xlane.xlu0 %457
    %v459 = vrcp.pop %v437
    %v460 = vrcp.pop %v440
    %v461 = vrcp.pop %v443
    %v462 = vrcp.pop %v446
    %v463 = vrcp.pop %v449
    %v464 = vrcp.pop %v452
    %v465 = vrcp.pop %v455
    %v466 = vrcp.pop %v458
    %v467 = vmul.f32 %v420, %v459
    %v468 = vmul.f32 %v422, %v460
    %v469 = vmul.f32 %v424, %v461
    %v470 = vmul.f32 %v426, %v462
    %v471 = vmul.f32 %v428, %v463
    %v472 = vmul.f32 %v430, %v464
    %v473 = vmul.f32 %v432, %v465
    %v474 = vmul.f32 %v434, %v466
    %v475 = vpack.c.bf16 %v468, %v467
    %v476 = vpack.c.bf16 %v470, %v469
    %v477 = vpack.c.bf16 %v472, %v471
    %v478 = vpack.c.bf16 %v474, %v473
    %479 = vrot.lane.b32.xlu0 %v300, 64
    %v480 = vpop.permute.xlu0 %479
    %481 = vrot.lane.b32.xlu0 %v301, 64
    %v482 = vpop.permute.xlu0 %481
    %483 = vrot.lane.b32.xlu0 %v302, 64
    %v484 = vpop.permute.xlu0 %483
    %485 = vrot.lane.b32.xlu0 %v303, 64
    %v486 = vpop.permute.xlu0 %485
    %v492 = vsel %vm386, %v475, 0
    %v495 = vsel %vm386, %v476, 0
    %v498 = vsel %vm386, %v477, 0
    %v501 = vsel %vm386, %v478, 0
    %503 = vmatpush.bf16.msra.mxu0 0
    %504 = vmatpush.bf16.msra.mxu0 0
    %505 = vmatpush.bf16.msra.mxu0 0
    %506 = vmatpush.bf16.msra.mxu0 0
    %507 = vmatpush.bf16.msra.mxu0 %v486
    %508 = vmatpush.bf16.msra.mxu0 %v484
    %509 = vmatpush.bf16.msra.mxu0 %v482
    %510 = vmatpush.bf16.msra.mxu0 %v480
    %511 = vmatmul.bf16.gmra.mxu0 %v492
    %v512 = vpop.f32.mrf.mxu0
    %v513 = vadd.f32 0.0, %v512
    %v514 = vpop.f32.mrf.mxu0
    %v515 = vadd.f32 0.0, %v514
    %516 = vmatmul.bf16.gmra.mxu0 %v495
    %v517 = vpop.f32.mrf.mxu0
    %v518 = vadd.f32 0.0, %v517
    %v519 = vpop.f32.mrf.mxu0
    %v520 = vadd.f32 0.0, %v519
    %521 = vmatmul.bf16.gmra.mxu0 %v498
    %v522 = vpop.f32.mrf.mxu0
    %v523 = vadd.f32 0.0, %v522
    %v524 = vpop.f32.mrf.mxu0
    %v525 = vadd.f32 0.0, %v524
    %526 = vmatmul.bf16.gmra.mxu0 %v501
    %v527 = vpop.f32.mrf.mxu0
    %v528 = vadd.f32 0.0, %v527
    %v529 = vpop.f32.mrf.mxu0
    %v530 = vadd.f32 0.0, %v529
    %531 = vdwg.mxu0
    %534 = vrot.lane.b32.xlu0 %v518, 8
    %v535 = vpop.permute.xlu0 %534
    %536 = vrot.lane.b32.xlu0 %v520, 8
    %v537 = vpop.permute.xlu0 %536
    %542 = vrot.lane.b32.xlu0 %v523, 16
    %v543 = vpop.permute.xlu0 %542
    %544 = vrot.lane.b32.xlu0 %v525, 16
    %v545 = vpop.permute.xlu0 %544
    %550 = vrot.lane.b32.xlu0 %v528, 24
    %v551 = vpop.permute.xlu0 %550
    %552 = vrot.lane.b32.xlu0 %v530, 24
    %v553 = vpop.permute.xlu0 %552
    %v556 = vsel %vm316, %v513, %v535
    %v557 = vsel %vm316, %v515, %v537
    %vm558 = vcmask 130048
    %v559 = vsel %vm558, %v556, %v543
    %v560 = vsel %vm558, %v557, %v545
    %vm561 = vcmask 195584
    %v562 = vsel %vm561, %v559, %v551
    %v563 = vsel %vm561, %v560, %v553
    %v564 = vld [vmem:[#allocation7] sm:$0xf]
    %v565 = vld [vmem:[#allocation7 + $0x4] sm:$0xf]
    %v566 = vld [vmem:[#allocation7 + $0x8] sm:$0xf]
    %v567 = vld [vmem:[#allocation7 + $0xc] sm:$0xf]
    %v568 = vpack.c.bf16 %v563, %v562
    %v569 = vld [vmem:[%s7] sm:$0x1]
    %v571 = vperm.slane %v569, 0
    %v577 = vunpack.c.l.b16 %v564
    %v578 = vunpack.c.l.b16 %v565
    %v579 = vunpack.c.l.b16 %v566
    %v580 = vunpack.c.l.b16 %v567
    %v581 = vpack.c.b16 %v578, %v577
    %v582 = vpack.c.b16 %v580, %v579
    %v586 = vsel %vm180, %v568, 0
    %588 = vmatpush.bf16.msra.mxu0 0
    %589 = vmatpush.bf16.msra.mxu0 0
    %590 = vmatpush.bf16.msra.mxu0 0
    %591 = vmatpush.bf16.msra.mxu0 0
    %592 = vmatpush.bf16.msra.mxu0 0
    %593 = vmatpush.bf16.msra.mxu0 0
    %594 = vmatpush.bf16.msra.mxu0 %v582
    %595 = vmatpush.bf16.msra.mxu0 %v581
    %596 = vmatmul.bf16.gmra.mxu0 %v586
    %v597 = vpop.f32.mrf.mxu0
    %v598 = vadd.f32 %v571, %v597
    %v599 = vpop.f32.mrf.mxu0
    %v600 = vadd.f32 %v571, %v599
    %601 = vdwg.mxu0
    %v602 = vadd.f32 %v240, %v598
    %v603 = vadd.f32 %v241, %v600
    %v604 = vld [vmem:[%s8] sm:$0x1]
    %v605 = vld [vmem:[#allocation8] sm:$0x1]
    %v606 = vsel %vm180, %v602, 0.0
    %607 = vadd.xlane.f32.xlu0 %v606
    %v608 = vpop.xlane.xlu0 %607
    %v609 = vsel %vm180, %v603, 0.0
    %610 = vadd.xlane.f32.xlu0 %v609
    %v611 = vpop.xlane.xlu0 %610
    %v612 = vmul.f32 %v608, %v193
    %v613 = vmul.f32 %v611, %v193
    %v614 = vsub.f32 %v602, %v612
    %v615 = vsub.f32 %v603, %v613
    %v616 = vmul.f32 %v614, %v614
    %v617 = vmul.f32 %v615, %v615
    %v618 = vsel %vm180, %v616, 0.0
    %619 = vadd.xlane.f32.xlu0 %v618
    %v620 = vpop.xlane.xlu0 %619
    %v621 = vsel %vm180, %v617, 0.0
    %622 = vadd.xlane.f32.xlu0 %v621
    %v623 = vpop.xlane.xlu0 %622
    %v624 = vmul.f32 %v620, %v193
    %v625 = vmul.f32 %v623, %v193
    %v626 = vadd.f32 %v624, 1e-12
    %v627 = vadd.f32 %v625, 1e-12
    %v628 = vrsqrt.pop %v626
    %v629 = vmul.f32 %v628, %v626
    %v630 = vmul.f32 %v629, %v628
    %v631 = vmul.f32 0.5, %v630
    %v632 = vsub.f32 1.5, %v631
    %v633 = vmul.f32 %v628, %v632
    %vm634 = vweird.f32 %v626
    %vm635 = vweird.f32 %v628
    %vm636 = vmor %vm634, %vm635
    %v637 = vsel %vm636, %v628, %v633
    %v638 = vrsqrt.pop %v627
    %v639 = vmul.f32 %v638, %v627
    %v640 = vmul.f32 %v639, %v638
    %v641 = vmul.f32 0.5, %v640
    %v642 = vsub.f32 1.5, %v641
    %v643 = vmul.f32 %v638, %v642
    %vm644 = vweird.f32 %v627
    %vm645 = vweird.f32 %v638
    %vm646 = vmor %vm644, %vm645
    %v647 = vsel %vm646, %v638, %v643
    %v648 = vmul.f32 %v614, %v637
    %v649 = vmul.f32 %v615, %v647
    %v651 = vperm.slane %v604, 0
    %v653 = vmul.f32 %v648, %v651
    %v654 = vmul.f32 %v649, %v651
    %v656 = vperm.slane %v605, 0
    %v658 = vadd.f32 %v653, %v656
    %v659 = vadd.f32 %v654, %v656
    %v660 = vld [vmem:[#allocation10] sm:$0xf]
    %v661 = vld [vmem:[#allocation10 + $0x4] sm:$0xf]
    %v662 = vld [vmem:[#allocation10 + $0x8] sm:$0xf]
    %v663 = vld [vmem:[#allocation10 + $0xc] sm:$0xf]
    %v664 = vpack.c.bf16 %v659, %v658
    %v665 = vld [vmem:[%s11] sm:$0x1]
    %v667 = vperm.slane %v665, 0
    %v673 = vunpack.c.l.b16 %v660
    %v674 = vunpack.c.l.b16 %v661
    %v675 = vunpack.c.l.b16 %v662
    %v676 = vunpack.c.l.b16 %v663
    %v677 = vpack.c.b16 %v674, %v673
    %v678 = vpack.c.b16 %v676, %v675
    %v682 = vsel %vm180, %v664, 0
    %684 = vmatpush.bf16.msra.mxu0 0
    %685 = vmatpush.bf16.msra.mxu0 0
    %686 = vmatpush.bf16.msra.mxu0 0
    %687 = vmatpush.bf16.msra.mxu0 0
    %688 = vmatpush.bf16.msra.mxu0 0
    %689 = vmatpush.bf16.msra.mxu0 0
    %690 = vmatpush.bf16.msra.mxu0 %v678
    %691 = vmatpush.bf16.msra.mxu0 %v677
    %692 = vmatmul.bf16.gmra.mxu0 %v682
    %v693 = vpop.f32.mrf.mxu0
    %v694 = vadd.f32 %v667, %v693
    %v695 = vpop.f32.mrf.mxu0
    %v696 = vadd.f32 %v667, %v695
    %697 = vdwg.mxu0
    %v698 = vmul.f32 %v694, %v694
    %v699 = vmul.f32 %v696, %v696
    %v700 = vmul.f32 %v694, %v698
    %v701 = vmul.f32 %v696, %v699
    %v702 = vmul.f32 %v700, 0.044715
    %v703 = vmul.f32 %v701, 0.044715
    %v704 = vadd.f32 %v694, %v702
    %v705 = vadd.f32 %v696, %v703
    %v706 = vmul.f32 %v704, 0.7978846
    %v707 = vmul.f32 %v705, 0.7978846
    %v708 = vtanh.pop %v706
    %v709 = vtanh.pop %v707
    %v710 = vadd.f32 %v708, 1.0
    %v711 = vadd.f32 %v709, 1.0
    %v712 = vmul.f32 %v710, 0.5
    %v713 = vmul.f32 %v711, 0.5
    %v714 = vmul.f32 %v694, %v712
    %v715 = vmul.f32 %v696, %v713
    %v716 = vld [vmem:[%s12] sm:$0xf]
    %v717 = vld [vmem:[%s12 + $0x4] sm:$0xf]
    %v718 = vld [vmem:[%s12 + $0x8] sm:$0xf]
    %v719 = vld [vmem:[%s12 + $0xc] sm:$0xf]
    %v720 = vld [vmem:[%s12 + $0x10] sm:$0xf]
    %v721 = vld [vmem:[%s12 + $0x14] sm:$0xf]
    %v722 = vld [vmem:[%s12 + $0x18] sm:$0xf]
    %v723 = vld [vmem:[%s12 + $0x1c] sm:$0xf]
    %v724 = vpack.c.bf16 %v715, %v714
    %v725 = vld [vmem:[%s13] sm:$0x1]
    %v727 = vperm.slane %v725, 0
    %v737 = vunpack.c.l.b16 %v716
    %v738 = vunpack.c.l.b16 %v717
    %v739 = vunpack.c.l.b16 %v718
    %v740 = vunpack.c.l.b16 %v719
    %v741 = vunpack.c.l.b16 %v720
    %v742 = vunpack.c.l.b16 %v721
    %v743 = vunpack.c.l.b16 %v722
    %v744 = vunpack.c.l.b16 %v723
    %v745 = vpack.c.b16 %v738, %v737
    %v746 = vpack.c.b16 %v740, %v739
    %v747 = vpack.c.b16 %v742, %v741
    %v748 = vpack.c.b16 %v744, %v743
    %v754 = vsel %vm386, %v724, 0
    %756 = vmatpush.bf16.msra.mxu0 0
    %757 = vmatpush.bf16.msra.mxu0 0
    %758 = vmatpush.bf16.msra.mxu0 0
    %759 = vmatpush.bf16.msra.mxu0 0
    %760 = vmatpush.bf16.msra.mxu0 %v748
    %761 = vmatpush.bf16.msra.mxu0 %v747
    %762 = vmatpush.bf16.msra.mxu0 %v746
    %763 = vmatpush.bf16.msra.mxu0 %v745
    %764 = vmatmul.bf16.gmra.mxu0 %v754
    %v765 = vpop.f32.mrf.mxu0
    %v766 = vadd.f32 %v727, %v765
    %v767 = vpop.f32.mrf.mxu0
    %v768 = vadd.f32 %v727, %v767
    %769 = vdwg.mxu0
    %v770 = vadd.f32 %v658, %v766
    %v771 = vadd.f32 %v659, %v768
    %v772 = vld [vmem:[%s14] sm:$0x1]
    %v773 = vld [vmem:[#allocation11] sm:$0x1]
    %v774 = vsel %vm180, %v770, 0.0
    %775 = vadd.xlane.f32.xlu0 %v774
    %v776 = vpop.xlane.xlu0 %775
    %v777 = vsel %vm180, %v771, 0.0
    %778 = vadd.xlane.f32.xlu0 %v777
    %v779 = vpop.xlane.xlu0 %778
    %v780 = vmul.f32 %v776, %v193
    %v781 = vmul.f32 %v779, %v193
    %v782 = vsub.f32 %v770, %v780
    %v783 = vsub.f32 %v771, %v781
    %v784 = vmul.f32 %v782, %v782
    %v785 = vmul.f32 %v783, %v783
    %v786 = vsel %vm180, %v784, 0.0
    %787 = vadd.xlane.f32.xlu0 %v786
    %v788 = vpop.xlane.xlu0 %787
    %v789 = vsel %vm180, %v785, 0.0
    %790 = vadd.xlane.f32.xlu0 %v789
    %v791 = vpop.xlane.xlu0 %790
    %v792 = vmul.f32 %v788, %v193
    %v793 = vmul.f32 %v791, %v193
    %v794 = vadd.f32 %v792, 1e-12
    %v795 = vadd.f32 %v793, 1e-12
    %v796 = vrsqrt.pop %v794
    %v797 = vmul.f32 %v796, %v794
    %v798 = vmul.f32 %v797, %v796
    %v799 = vmul.f32 0.5, %v798
    %v800 = vsub.f32 1.5, %v799
    %v801 = vmul.f32 %v796, %v800
    %vm802 = vweird.f32 %v794
    %vm803 = vweird.f32 %v796
    %vm804 = vmor %vm802, %vm803
    %v805 = vsel %vm804, %v796, %v801
    %v806 = vrsqrt.pop %v795
    %v807 = vmul.f32 %v806, %v795
    %v808 = vmul.f32 %v807, %v806
    %v809 = vmul.f32 0.5, %v808
    %v810 = vsub.f32 1.5, %v809
    %v811 = vmul.f32 %v806, %v810
    %vm812 = vweird.f32 %v795
    %vm813 = vweird.f32 %v806
    %vm814 = vmor %vm812, %vm813
    %v815 = vsel %vm814, %v806, %v811
    %v816 = vmul.f32 %v782, %v805
    %v817 = vmul.f32 %v783, %v815
    %v819 = vperm.slane %v772, 0
    %v821 = vmul.f32 %v816, %v819
    %v822 = vmul.f32 %v817, %v819
    %v824 = vperm.slane %v773, 0
    %v826 = vadd.f32 %v821, %v824
    %v827 = vadd.f32 %v822, %v824
    %s828 = scalar_lea.vmem %s4, 16
    %v829 = vld [vmem:[%s828] sm:$0xf]
    %v830 = vld [vmem:[%s828 + $0x4] sm:$0xf]
    %v831 = vld [vmem:[%s828 + $0x8] sm:$0xf]
    %v832 = vld [vmem:[%s828 + $0xc] sm:$0xf]
    %v833 = vpack.c.bf16 %v827, %v826
    %s834 = scalar_lea.vmem %s5, 1
    %v835 = vld [vmem:[%s834] sm:$0x1]
    %v837 = vperm.slane %v835, 0
    %v843 = vunpack.c.l.b16 %v829
    %v844 = vunpack.c.l.b16 %v830
    %v845 = vunpack.c.l.b16 %v831
    %v846 = vunpack.c.l.b16 %v832
    %v847 = vpack.c.b16 %v844, %v843
    %v848 = vpack.c.b16 %v846, %v845
    %v852 = vsel %vm180, %v833, 0
    %854 = vmatpush.bf16.msra.mxu0 0
    %855 = vmatpush.bf16.msra.mxu0 0
    %856 = vmatpush.bf16.msra.mxu0 0
    %857 = vmatpush.bf16.msra.mxu0 0
    %858 = vmatpush.bf16.msra.mxu0 0
    %859 = vmatpush.bf16.msra.mxu0 0
    %860 = vmatpush.bf16.msra.mxu0 %v848
    %861 = vmatpush.bf16.msra.mxu0 %v847
    %862 = vmatmul.bf16.gmra.mxu0 %v852
    %v863 = vpop.f32.mrf.mxu0
    %v864 = vadd.f32 %v837, %v863
    %v865 = vpop.f32.mrf.mxu0
    %v866 = vadd.f32 %v837, %v865
    %867 = vdwg.mxu0
    %870 = vrot.lane.b32.xlu0 %v864, 120
    %v871 = vpop.permute.xlu0 %870
    %872 = vrot.lane.b32.xlu0 %v866, 120
    %v873 = vpop.permute.xlu0 %872
    %876 = vrot.lane.b32.xlu0 %v864, 112
    %v877 = vpop.permute.xlu0 %876
    %878 = vrot.lane.b32.xlu0 %v866, 112
    %v879 = vpop.permute.xlu0 %878
    %882 = vrot.lane.b32.xlu0 %v864, 104
    %v883 = vpop.permute.xlu0 %882
    %884 = vrot.lane.b32.xlu0 %v866, 104
    %v885 = vpop.permute.xlu0 %884
    %v888 = vpack.c.bf16 %v866, %v864
    %v889 = vpack.c.bf16 %v873, %v871
    %v890 = vpack.c.bf16 %v879, %v877
    %v891 = vpack.c.bf16 %v885, %v883
    %896 = vrot.lane.b32.xlu0 %v888, 96
    %v897 = vpop.permute.xlu0 %896
    %898 = vrot.lane.b32.xlu0 %v889, 96
    %v899 = vpop.permute.xlu0 %898
    %900 = vrot.lane.b32.xlu0 %v890, 96
    %v901 = vpop.permute.xlu0 %900
    %902 = vrot.lane.b32.xlu0 %v891, 96
    %v903 = vpop.permute.xlu0 %902
    %v905 = vsel %vm316, %v888, 0
    %v908 = vsel %vm316, %v889, 0
    %v911 = vsel %vm316, %v890, 0
    %v914 = vsel %vm316, %v891, 0
    %v917 = vsel %vm316, %v897, 0
    %v920 = vsel %vm316, %v899, 0
    %v923 = vsel %vm316, %v901, 0
    %v926 = vsel %vm316, %v903, 0
    %928 = vmatpush.bf16.xpose.msra.mxu0 0
    %929 = vmatpush.bf16.xpose.msra.mxu0 0
    %930 = vmatpush.bf16.xpose.msra.mxu0 0
    %931 = vmatpush.bf16.xpose.msra.mxu0 0
    %932 = vmatpush.bf16.xpose.msra.mxu0 %v926
    %933 = vmatpush.bf16.xpose.msra.mxu0 %v923
    %934 = vmatpush.bf16.xpose.msra.mxu0 %v920
    %935 = vmatpush.bf16.xpose.msra.mxu0 %v917
    %936 = vmatmul.bf16.gmra.mxu0 %v905
    %v937 = vpop.f32.mrf.mxu0
    %v938 = vadd.f32 0.0, %v937
    %v939 = vpop.f32.mrf.mxu0
    %v940 = vadd.f32 0.0, %v939
    %941 = vmatmul.bf16.gmra.mxu0 %v908
    %v942 = vpop.f32.mrf.mxu0
    %v943 = vadd.f32 0.0, %v942
    %v944 = vpop.f32.mrf.mxu0
    %v945 = vadd.f32 0.0, %v944
    %946 = vmatmul.bf16.gmra.mxu0 %v911
    %v947 = vpop.f32.mrf.mxu0
    %v948 = vadd.f32 0.0, %v947
    %v949 = vpop.f32.mrf.mxu0
    %v950 = vadd.f32 0.0, %v949
    %951 = vmatmul.bf16.gmra.mxu0 %v914
    %v952 = vpop.f32.mrf.mxu0
    %v953 = vadd.f32 0.0, %v952
    %v954 = vpop.f32.mrf.mxu0
    %v955 = vadd.f32 0.0, %v954
    %956 = vdwg.mxu0
    %v957 = vmul.f32 %v938, 0.35355338
    %v958 = vmul.f32 %v940, 0.35355338
    %v959 = vmul.f32 %v943, 0.35355338
    %v960 = vmul.f32 %v945, 0.35355338
    %v961 = vmul.f32 %v948, 0.35355338
    %v962 = vmul.f32 %v950, 0.35355338
    %v963 = vmul.f32 %v953, 0.35355338
    %v964 = vmul.f32 %v955, 0.35355338
    %v965 = vadd.f32 %v957, %v168
    %v966 = vadd.f32 %v958, %v169
    %v967 = vadd.f32 %v959, %v170
    %v968 = vadd.f32 %v960, %v171
    %v969 = vadd.f32 %v961, %v172
    %v970 = vadd.f32 %v962, %v173
    %v971 = vadd.f32 %v963, %v174
    %v972 = vadd.f32 %v964, %v175
    %v973 = vsel %vm386, %v965, -inf
    %974 = vmax.xlane.f32.xlu0 %v973
    %v975 = vpop.xlane.xlu0 %974
    %v976 = vsel %vm386, %v966, -inf
    %977 = vmax.xlane.f32.xlu0 %v976
    %v978 = vpop.xlane.xlu0 %977
    %v979 = vsel %vm386, %v967, -inf
    %980 = vmax.xlane.f32.xlu0 %v979
    %v981 = vpop.xlane.xlu0 %980
    %v982 = vsel %vm386, %v968, -inf
    %983 = vmax.xlane.f32.xlu0 %v982
    %v984 = vpop.xlane.xlu0 %983
    %v985 = vsel %vm386, %v969, -inf
    %986 = vmax.xlane.f32.xlu0 %v985
    %v987 = vpop.xlane.xlu0 %986
    %v988 = vsel %vm386, %v970, -inf
    %989 = vmax.xlane.f32.xlu0 %v988
    %v990 = vpop.xlane.xlu0 %989
    %v991 = vsel %vm386, %v971, -inf
    %992 = vmax.xlane.f32.xlu0 %v991
    %v993 = vpop.xlane.xlu0 %992
    %v994 = vsel %vm386, %v972, -inf
    %995 = vmax.xlane.f32.xlu0 %v994
    %v996 = vpop.xlane.xlu0 %995
    %v997 = vsub.f32 %v965, %v975
    %v998 = vsub.f32 %v966, %v978
    %v999 = vsub.f32 %v967, %v981
    %v1000 = vsub.f32 %v968, %v984
    %v1001 = vsub.f32 %v969, %v987
    %v1002 = vsub.f32 %v970, %v990
    %v1003 = vsub.f32 %v971, %v993
    %v1004 = vsub.f32 %v972, %v996
    %v1005 = vmul.f32 %v997, 1.442695
    %v1006 = vpow.pop %v1005
    %v1007 = vmul.f32 %v998, 1.442695
    %v1008 = vpow.pop %v1007
    %v1009 = vmul.f32 %v999, 1.442695
    %v1010 = vpow.pop %v1009
    %v1011 = vmul.f32 %v1000, 1.442695
    %v1012 = vpow.pop %v1011
    %v1013 = vmul.f32 %v1001, 1.442695
    %v1014 = vpow.pop %v1013
    %v1015 = vmul.f32 %v1002, 1.442695
    %v1016 = vpow.pop %v1015
    %v1017 = vmul.f32 %v1003, 1.442695
    %v1018 = vpow.pop %v1017
    %v1019 = vmul.f32 %v1004, 1.442695
    %v1020 = vpow.pop %v1019
    %v1021 = vsel %vm386, %v1006, 0.0
    %1022 = vadd.xlane.f32.xlu0 %v1021
    %v1023 = vpop.xlane.xlu0 %1022
    %v1024 = vsel %vm386, %v1008, 0.0
    %1025 = vadd.xlane.f32.xlu0 %v1024
    %v1026 = vpop.xlane.xlu0 %1025
    %v1027 = vsel %vm386, %v1010, 0.0
    %1028 = vadd.xlane.f32.xlu0 %v1027
    %v1029 = vpop.xlane.xlu0 %1028
    %v1030 = vsel %vm386, %v1012, 0.0
    %1031 = vadd.xlane.f32.xlu0 %v1030
    %v1032 = vpop.xlane.xlu0 %1031
    %v1033 = vsel %vm386, %v1014, 0.0
    %1034 = vadd.xlane.f32.xlu0 %v1033
    %v1035 = vpop.xlane.xlu0 %1034
    %v1036 = vsel %vm386, %v1016, 0.0
    %1037 = vadd.xlane.f32.xlu0 %v1036
    %v1038 = vpop.xlane.xlu0 %1037
    %v1039 = vsel %vm386, %v1018, 0.0
    %1040 = vadd.xlane.f32.xlu0 %v1039
    %v1041 = vpop.xlane.xlu0 %1040
    %v1042 = vsel %vm386, %v1020, 0.0
    %1043 = vadd.xlane.f32.xlu0 %v1042
    %v1044 = vpop.xlane.xlu0 %1043
    %v1045 = vrcp.pop %v1023
    %v1046 = vrcp.pop %v1026
    %v1047 = vrcp.pop %v1029
    %v1048 = vrcp.pop %v1032
    %v1049 = vrcp.pop %v1035
    %v1050 = vrcp.pop %v1038
    %v1051 = vrcp.pop %v1041
    %v1052 = vrcp.pop %v1044
    %v1053 = vmul.f32 %v1006, %v1045
    %v1054 = vmul.f32 %v1008, %v1046
    %v1055 = vmul.f32 %v1010, %v1047
    %v1056 = vmul.f32 %v1012, %v1048
    %v1057 = vmul.f32 %v1014, %v1049
    %v1058 = vmul.f32 %v1016, %v1050
    %v1059 = vmul.f32 %v1018, %v1051
    %v1060 = vmul.f32 %v1020, %v1052
    %v1061 = vpack.c.bf16 %v1054, %v1053
    %v1062 = vpack.c.bf16 %v1056, %v1055
    %v1063 = vpack.c.bf16 %v1058, %v1057
    %v1064 = vpack.c.bf16 %v1060, %v1059
    %1065 = vrot.lane.b32.xlu0 %v888, 64
    %v1066 = vpop.permute.xlu0 %1065
    %1067 = vrot.lane.b32.xlu0 %v889, 64
    %v1068 = vpop.permute.xlu0 %1067
    %1069 = vrot.lane.b32.xlu0 %v890, 64
    %v1070 = vpop.permute.xlu0 %1069
    %1071 = vrot.lane.b32.xlu0 %v891, 64
    %v1072 = vpop.permute.xlu0 %1071
    %v1078 = vsel %vm386, %v1061, 0
    %v1081 = vsel %vm386, %v1062, 0
    %v1084 = vsel %vm386, %v1063, 0
    %v1087 = vsel %vm386, %v1064, 0
    %1089 = vmatpush.bf16.msra.mxu0 0
    %1090 = vmatpush.bf16.msra.mxu0 0
    %1091 = vmatpush.bf16.msra.mxu0 0
    %1092 = vmatpush.bf16.msra.mxu0 0
    %1093 = vmatpush.bf16.msra.mxu0 %v1072
    %1094 = vmatpush.bf16.msra.mxu0 %v1070
    %1095 = vmatpush.bf16.msra.mxu0 %v1068
    %1096 = vmatpush.bf16.msra.mxu0 %v1066
    %1097 = vmatmul.bf16.gmra.mxu0 %v1078
    %v1098 = vpop.f32.mrf.mxu0
    %v1099 = vadd.f32 0.0, %v1098
    %v1100 = vpop.f32.mrf.mxu0
    %v1101 = vadd.f32 0.0, %v1100
    %1102 = vmatmul.bf16.gmra.mxu0 %v1081
    %v1103 = vpop.f32.mrf.mxu0
    %v1104 = vadd.f32 0.0, %v1103
    %v1105 = vpop.f32.mrf.mxu0
    %v1106 = vadd.f32 0.0, %v1105
    %1107 = vmatmul.bf16.gmra.mxu0 %v1084
    %v1108 = vpop.f32.mrf.mxu0
    %v1109 = vadd.f32 0.0, %v1108
    %v1110 = vpop.f32.mrf.mxu0
    %v1111 = vadd.f32 0.0, %v1110
    %1112 = vmatmul.bf16.gmra.mxu0 %v1087
    %v1113 = vpop.f32.mrf.mxu0
    %v1114 = vadd.f32 0.0, %v1113
    %v1115 = vpop.f32.mrf.mxu0
    %v1116 = vadd.f32 0.0, %v1115
    %1117 = vdwg.mxu0
    %1120 = vrot.lane.b32.xlu0 %v1104, 8
    %v1121 = vpop.permute.xlu0 %1120
    %1122 = vrot.lane.b32.xlu0 %v1106, 8
    %v1123 = vpop.permute.xlu0 %1122
    %1128 = vrot.lane.b32.xlu0 %v1109, 16
    %v1129 = vpop.permute.xlu0 %1128
    %1130 = vrot.lane.b32.xlu0 %v1111, 16
    %v1131 = vpop.permute.xlu0 %1130
    %1136 = vrot.lane.b32.xlu0 %v1114, 24
    %v1137 = vpop.permute.xlu0 %1136
    %1138 = vrot.lane.b32.xlu0 %v1116, 24
    %v1139 = vpop.permute.xlu0 %1138
    %v1142 = vsel %vm316, %v1099, %v1121
    %v1143 = vsel %vm316, %v1101, %v1123
    %v1144 = vsel %vm558, %v1142, %v1129
    %v1145 = vsel %vm558, %v1143, %v1131
    %v1146 = vsel %vm561, %v1144, %v1137
    %v1147 = vsel %vm561, %v1145, %v1139
    %s1148 = scalar_lea.vmem [#allocation7], 16
    %v1149 = vld [vmem:[%s1148] sm:$0xf]
    %v1150 = vld [vmem:[%s1148 + $0x4] sm:$0xf]
    %v1151 = vld [vmem:[%s1148 + $0x8] sm:$0xf]
    %v1152 = vld [vmem:[%s1148 + $0xc] sm:$0xf]
    %v1153 = vpack.c.bf16 %v1147, %v1146
    %s1154 = scalar_lea.vmem %s7, 1
    %v1155 = vld [vmem:[%s1154] sm:$0x1]
    %v1157 = vperm.slane %v1155, 0
    %v1163 = vunpack.c.l.b16 %v1149
    %v1164 = vunpack.c.l.b16 %v1150
    %v1165 = vunpack.c.l.b16 %v1151
    %v1166 = vunpack.c.l.b16 %v1152
    %v1167 = vpack.c.b16 %v1164, %v1163
    %v1168 = vpack.c.b16 %v1166, %v1165
    %v1172 = vsel %vm180, %v1153, 0
    %1174 = vmatpush.bf16.msra.mxu0 0
    %1175 = vmatpush.bf16.msra.mxu0 0
    %1176 = vmatpush.bf16.msra.mxu0 0
    %1177 = vmatpush.bf16.msra.mxu0 0
    %1178 = vmatpush.bf16.msra.mxu0 0
    %1179 = vmatpush.bf16.msra.mxu0 0
    %1180 = vmatpush.bf16.msra.mxu0 %v1168
    %1181 = vmatpush.bf16.msra.mxu0 %v1167
    %1182 = vmatmul.bf16.gmra.mxu0 %v1172
    %v1183 = vpop.f32.mrf.mxu0
    %v1184 = vadd.f32 %v1157, %v1183
    %v1185 = vpop.f32.mrf.mxu0
    %v1186 = vadd.f32 %v1157, %v1185
    %1187 = vdwg.mxu0
    %v1188 = vadd.f32 %v826, %v1184
    %v1189 = vadd.f32 %v827, %v1186
    %s1190 = scalar_lea.vmem %s8, 1
    %v1191 = vld [vmem:[%s1190] sm:$0x1]
    %s1192 = scalar_lea.vmem [#allocation8], 1
    %v1193 = vld [vmem:[%s1192] sm:$0x1]
    %v1194 = vsel %vm180, %v1188, 0.0
    %1195 = vadd.xlane.f32.xlu0 %v1194
    %v1196 = vpop.xlane.xlu0 %1195
    %v1197 = vsel %vm180, %v1189, 0.0
    %1198 = vadd.xlane.f32.xlu0 %v1197
    %v1199 = vpop.xlane.xlu0 %1198
    %v1200 = vmul.f32 %v1196, %v193
    %v1201 = vmul.f32 %v1199, %v193
    %v1202 = vsub.f32 %v1188, %v1200
    %v1203 = vsub.f32 %v1189, %v1201
    %v1204 = vmul.f32 %v1202, %v1202
    %v1205 = vmul.f32 %v1203, %v1203
    %v1206 = vsel %vm180, %v1204, 0.0
    %1207 = vadd.xlane.f32.xlu0 %v1206
    %v1208 = vpop.xlane.xlu0 %1207
    %v1209 = vsel %vm180, %v1205, 0.0
    %1210 = vadd.xlane.f32.xlu0 %v1209
    %v1211 = vpop.xlane.xlu0 %1210
    %v1212 = vmul.f32 %v1208, %v193
    %v1213 = vmul.f32 %v1211, %v193
    %v1214 = vadd.f32 %v1212, 1e-12
    %v1215 = vadd.f32 %v1213, 1e-12
    %v1216 = vrsqrt.pop %v1214
    %v1217 = vmul.f32 %v1216, %v1214
    %v1218 = vmul.f32 %v1217, %v1216
    %v1219 = vmul.f32 0.5, %v1218
    %v1220 = vsub.f32 1.5, %v1219
    %v1221 = vmul.f32 %v1216, %v1220
    %vm1222 = vweird.f32 %v1214
    %vm1223 = vweird.f32 %v1216
    %vm1224 = vmor %vm1222, %vm1223
    %v1225 = vsel %vm1224, %v1216, %v1221
    %v1226 = vrsqrt.pop %v1215
    %v1227 = vmul.f32 %v1226, %v1215
    %v1228 = vmul.f32 %v1227, %v1226
    %v1229 = vmul.f32 0.5, %v1228
    %v1230 = vsub.f32 1.5, %v1229
    %v1231 = vmul.f32 %v1226, %v1230
    %vm1232 = vweird.f32 %v1215
    %vm1233 = vweird.f32 %v1226
    %vm1234 = vmor %vm1232, %vm1233
    %v1235 = vsel %vm1234, %v1226, %v1231
    %v1236 = vmul.f32 %v1202, %v1225
    %v1237 = vmul.f32 %v1203, %v1235
    %v1239 = vperm.slane %v1191, 0
    %v1241 = vmul.f32 %v1236, %v1239
    %v1242 = vmul.f32 %v1237, %v1239
    %v1244 = vperm.slane %v1193, 0
    %v1246 = vadd.f32 %v1241, %v1244
    %v1247 = vadd.f32 %v1242, %v1244
    %s1248 = scalar_lea.vmem [#allocation10], 16
    %v1249 = vld [vmem:[%s1248] sm:$0xf]
    %v1250 = vld [vmem:[%s1248 + $0x4] sm:$0xf]
    %v1251 = vld [vmem:[%s1248 + $0x8] sm:$0xf]
    %v1252 = vld [vmem:[%s1248 + $0xc] sm:$0xf]
    %v1253 = vpack.c.bf16 %v1247, %v1246
    %s1254 = scalar_lea.vmem %s11, 1
    %v1255 = vld [vmem:[%s1254] sm:$0x1]
    %v1257 = vperm.slane %v1255, 0
    %v1263 = vunpack.c.l.b16 %v1249
    %v1264 = vunpack.c.l.b16 %v1250
    %v1265 = vunpack.c.l.b16 %v1251
    %v1266 = vunpack.c.l.b16 %v1252
    %v1267 = vpack.c.b16 %v1264, %v1263
    %v1268 = vpack.c.b16 %v1266, %v1265
    %v1272 = vsel %vm180, %v1253, 0
    %1274 = vmatpush.bf16.msra.mxu0 0
    %1275 = vmatpush.bf16.msra.mxu0 0
    %1276 = vmatpush.bf16.msra.mxu0 0
    %1277 = vmatpush.bf16.msra.mxu0 0
    %1278 = vmatpush.bf16.msra.mxu0 0
    %1279 = vmatpush.bf16.msra.mxu0 0
    %1280 = vmatpush.bf16.msra.mxu0 %v1268
    %1281 = vmatpush.bf16.msra.mxu0 %v1267
    %1282 = vmatmul.bf16.gmra.mxu0 %v1272
    %v1283 = vpop.f32.mrf.mxu0
    %v1284 = vadd.f32 %v1257, %v1283
    %v1285 = vpop.f32.mrf.mxu0
    %v1286 = vadd.f32 %v1257, %v1285
    %1287 = vdwg.mxu0
    %v1288 = vmul.f32 %v1284, %v1284
    %v1289 = vmul.f32 %v1286, %v1286
    %v1290 = vmul.f32 %v1284, %v1288
    %v1291 = vmul.f32 %v1286, %v1289
    %v1292 = vmul.f32 %v1290, 0.044715
    %v1293 = vmul.f32 %v1291, 0.044715
    %v1294 = vadd.f32 %v1284, %v1292
    %v1295 = vadd.f32 %v1286, %v1293
    %v1296 = vmul.f32 %v1294, 0.7978846
    %v1297 = vmul.f32 %v1295, 0.7978846
    %v1298 = vtanh.pop %v1296
    %v1299 = vtanh.pop %v1297
    %v1300 = vadd.f32 %v1298, 1.0
    %v1301 = vadd.f32 %v1299, 1.0
    %v1302 = vmul.f32 %v1300, 0.5
    %v1303 = vmul.f32 %v1301, 0.5
    %v1304 = vmul.f32 %v1284, %v1302
    %v1305 = vmul.f32 %v1286, %v1303
    %s1306 = scalar_lea.vmem %s12, 32
    %v1307 = vld [vmem:[%s1306] sm:$0xf]
    %v1308 = vld [vmem:[%s1306 + $0x4] sm:$0xf]
    %v1309 = vld [vmem:[%s1306 + $0x8] sm:$0xf]
    %v1310 = vld [vmem:[%s1306 + $0xc] sm:$0xf]
    %v1311 = vld [vmem:[%s1306 + $0x10] sm:$0xf]
    %v1312 = vld [vmem:[%s1306 + $0x14] sm:$0xf]
    %v1313 = vld [vmem:[%s1306 + $0x18] sm:$0xf]
    %v1314 = vld [vmem:[%s1306 + $0x1c] sm:$0xf]
    %v1315 = vpack.c.bf16 %v1305, %v1304
    %s1316 = scalar_lea.vmem %s13, 1
    %v1317 = vld [vmem:[%s1316] sm:$0x1]
    %v1319 = vperm.slane %v1317, 0
    %v1329 = vunpack.c.l.b16 %v1307
    %v1330 = vunpack.c.l.b16 %v1308
    %v1331 = vunpack.c.l.b16 %v1309
    %v1332 = vunpack.c.l.b16 %v1310
    %v1333 = vunpack.c.l.b16 %v1311
    %v1334 = vunpack.c.l.b16 %v1312
    %v1335 = vunpack.c.l.b16 %v1313
    %v1336 = vunpack.c.l.b16 %v1314
    %v1337 = vpack.c.b16 %v1330, %v1329
    %v1338 = vpack.c.b16 %v1332, %v1331
    %v1339 = vpack.c.b16 %v1334, %v1333
    %v1340 = vpack.c.b16 %v1336, %v1335
    %v1346 = vsel %vm386, %v1315, 0
    %1348 = vmatpush.bf16.msra.mxu0 0
    %1349 = vmatpush.bf16.msra.mxu0 0
    %1350 = vmatpush.bf16.msra.mxu0 0
    %1351 = vmatpush.bf16.msra.mxu0 0
    %1352 = vmatpush.bf16.msra.mxu0 %v1340
    %1353 = vmatpush.bf16.msra.mxu0 %v1339
    %1354 = vmatpush.bf16.msra.mxu0 %v1338
    %1355 = vmatpush.bf16.msra.mxu0 %v1337
    %1356 = vmatmul.bf16.gmra.mxu0 %v1346
    %v1357 = vpop.f32.mrf.mxu0
    %v1358 = vadd.f32 %v1319, %v1357
    %v1359 = vpop.f32.mrf.mxu0
    %v1360 = vadd.f32 %v1319, %v1359
    %1361 = vdwg.mxu0
    %v1362 = vadd.f32 %v1246, %v1358
    %v1363 = vadd.f32 %v1247, %v1360
    %s1364 = scalar_lea.vmem %s14, 1
    %v1365 = vld [vmem:[%s1364] sm:$0x1]
    %s1366 = scalar_lea.vmem [#allocation11], 1
    %v1367 = vld [vmem:[%s1366] sm:$0x1]
    %v1368 = vsel %vm180, %v1362, 0.0
    %1369 = vadd.xlane.f32.xlu0 %v1368
    %v1370 = vpop.xlane.xlu0 %1369
    %v1371 = vsel %vm180, %v1363, 0.0
    %1372 = vadd.xlane.f32.xlu0 %v1371
    %v1373 = vpop.xlane.xlu0 %1372
    %v1374 = vmul.f32 %v1370, %v193
    %v1375 = vmul.f32 %v1373, %v193
    %v1376 = vsub.f32 %v1362, %v1374
    %v1377 = vsub.f32 %v1363, %v1375
    %v1378 = vmul.f32 %v1376, %v1376
    %v1379 = vmul.f32 %v1377, %v1377
    %v1380 = vsel %vm180, %v1378, 0.0
    %1381 = vadd.xlane.f32.xlu0 %v1380
    %v1382 = vpop.xlane.xlu0 %1381
    %v1383 = vsel %vm180, %v1379, 0.0
    %1384 = vadd.xlane.f32.xlu0 %v1383
    %v1385 = vpop.xlane.xlu0 %1384
    %v1386 = vmul.f32 %v1382, %v193
    %v1387 = vmul.f32 %v1385, %v193
    %v1388 = vadd.f32 %v1386, 1e-12
    %v1389 = vadd.f32 %v1387, 1e-12
    %v1390 = vrsqrt.pop %v1388
    %v1391 = vmul.f32 %v1390, %v1388
    %v1392 = vmul.f32 %v1391, %v1390
    %v1393 = vmul.f32 0.5, %v1392
    %v1394 = vsub.f32 1.5, %v1393
    %v1395 = vmul.f32 %v1390, %v1394
    %vm1396 = vweird.f32 %v1388
    %vm1397 = vweird.f32 %v1390
    %vm1398 = vmor %vm1396, %vm1397
    %v1399 = vsel %vm1398, %v1390, %v1395
    %v1400 = vrsqrt.pop %v1389
    %v1401 = vmul.f32 %v1400, %v1389
    %v1402 = vmul.f32 %v1401, %v1400
    %v1403 = vmul.f32 0.5, %v1402
    %v1404 = vsub.f32 1.5, %v1403
    %v1405 = vmul.f32 %v1400, %v1404
    %vm1406 = vweird.f32 %v1389
    %vm1407 = vweird.f32 %v1400
    %vm1408 = vmor %vm1406, %vm1407
    %v1409 = vsel %vm1408, %v1400, %v1405
    %v1410 = vmul.f32 %v1376, %v1399
    %v1411 = vmul.f32 %v1377, %v1409
    %v1413 = vperm.slane %v1365, 0
    %v1415 = vmul.f32 %v1410, %v1413
    %v1416 = vmul.f32 %v1411, %v1413
    %v1418 = vperm.slane %v1367, 0
    %v1420 = vadd.f32 %v1415, %v1418
    %v1421 = vadd.f32 %v1416, %v1418
    %v1423 = vrot.slane %v1421, 7
    %vm1425 = vcmask 1040384
    %v1426 = vsel %vm1425, %v1420, %v1423
    %v1427 = vld [vmem:[#allocation13] sm:$0xf]
    %v1428 = vld [vmem:[#allocation13 + $0x4] sm:$0xf]
    %v1429 = vld [vmem:[#allocation13 + $0x8] sm:$0xf]
    %v1430 = vld [vmem:[#allocation13 + $0xc] sm:$0xf]
    %v1431 = vpack.c.bf16 %v1426, %v1426
    %v1432 = vld [vmem:[%s17] sm:$0x1]
    %v1434 = vperm.slane %v1432, 0
    %v1440 = vunpack.c.l.b16 %v1427
    %v1441 = vunpack.c.l.b16 %v1428
    %v1442 = vunpack.c.l.b16 %v1429
    %v1443 = vunpack.c.l.b16 %v1430
    %v1444 = vpack.c.b16 %v1441, %v1440
    %v1445 = vpack.c.b16 %v1443, %v1442
    %v1449 = vsel %vm180, %v1431, 0
    %1451 = vmatpush.bf16.msra.mxu0 0
    %1452 = vmatpush.bf16.msra.mxu0 0
    %1453 = vmatpush.bf16.msra.mxu0 0
    %1454 = vmatpush.bf16.msra.mxu0 0
    %1455 = vmatpush.bf16.msra.mxu0 0
    %1456 = vmatpush.bf16.msra.mxu0 0
    %1457 = vmatpush.bf16.msra.mxu0 %v1445
    %1458 = vmatpush.bf16.msra.mxu0 %v1444
    %1459 = vmatmul.bf16.gmra.mxu0 %v1449
    %v1460 = vpop.f32.mrf.mxu0
    %v1461 = vadd.f32 %v1434, %v1460
    %v1462 = vpop.f32.mrf.mxu0
    %1463 = vdwg.mxu0
    %v1464 = vlaneseq
    %v1465 = vshrl.u32 %v1464, 7
    %v1466 = vadd.s32 %v1465, 8
    %v1467 = vadd.s32 %v1465, 16
    %v1468 = vadd.s32 %v1465, 24
    %v1469 = vadd.s32 %v1465, 32
    %v1470 = vadd.s32 %v1465, 40
    %v1471 = vadd.s32 %v1465, 48
    %v1472 = vadd.s32 %v1465, 56
    %v1473 = vadd.s32 %v1465, 64
    %v1474 = vadd.s32 %v1465, 72
    %v1475 = vadd.s32 %v1465, 80
    %v1476 = vadd.s32 %v1465, 88
    %v1477 = vadd.s32 %v1465, 96
    %v1478 = vadd.s32 %v1465, 104
    %v1479 = vadd.s32 %v1465, 112
    %v1480 = vadd.s32 %v1465, 120
    %v1481 = vlaneseq
    %v1482 = vand.u32 %v1481, 127
    %vm1483 = vcmp.eq.s32.totalorder %v1465, %v1482
    %vm1484 = vcmp.eq.s32.totalorder %v1466, %v1482
    %vm1485 = vcmp.eq.s32.totalorder %v1467, %v1482
    %vm1486 = vcmp.eq.s32.totalorder %v1468, %v1482
    %vm1487 = vcmp.eq.s32.totalorder %v1469, %v1482
    %vm1488 = vcmp.eq.s32.totalorder %v1470, %v1482
    %vm1489 = vcmp.eq.s32.totalorder %v1471, %v1482
    %vm1490 = vcmp.eq.s32.totalorder %v1472, %v1482
    %vm1491 = vcmp.eq.s32.totalorder %v1473, %v1482
    %vm1492 = vcmp.eq.s32.totalorder %v1474, %v1482
    %vm1493 = vcmp.eq.s32.totalorder %v1475, %v1482
    %vm1494 = vcmp.eq.s32.totalorder %v1476, %v1482
    %vm1495 = vcmp.eq.s32.totalorder %v1477, %v1482
    %vm1496 = vcmp.eq.s32.totalorder %v1478, %v1482
    %vm1497 = vcmp.eq.s32.totalorder %v1479, %v1482
    %vm1498 = vcmp.eq.s32.totalorder %v1480, %v1482
    %v1499 = vperm.slane %v1461, 0
    %v1500 = vsel %vm1483, %v1499, 0.0
    %v1501 = vsel %vm1484, %v1499, 0.0
    %v1502 = vsel %vm1485, %v1499, 0.0
    %v1503 = vsel %vm1486, %v1499, 0.0
    %v1504 = vsel %vm1487, %v1499, 0.0
    %v1505 = vsel %vm1488, %v1499, 0.0
    %v1506 = vsel %vm1489, %v1499, 0.0
    %v1507 = vsel %vm1490, %v1499, 0.0
    %v1508 = vsel %vm1491, %v1499, 0.0
    %v1509 = vsel %vm1492, %v1499, 0.0
    %v1510 = vsel %vm1493, %v1499, 0.0
    %v1511 = vsel %vm1494, %v1499, 0.0
    %v1512 = vsel %vm1495, %v1499, 0.0
    %v1513 = vsel %vm1496, %v1499, 0.0
    %v1514 = vsel %vm1497, %v1499, 0.0
    %v1515 = vsel %vm1498, %v1499, 0.0
    %1516 = vadd.xlane.f32.xlu0 %v1500
    %v1517 = vpop.xlane.xlu0 %1516
    %1518 = vadd.xlane.f32.xlu0 %v1501
    %v1519 = vpop.xlane.xlu0 %1518
    %1520 = vadd.xlane.f32.xlu0 %v1502
    %v1521 = vpop.xlane.xlu0 %1520
    %1522 = vadd.xlane.f32.xlu0 %v1503
    %v1523 = vpop.xlane.xlu0 %1522
    %1524 = vadd.xlane.f32.xlu0 %v1504
    %v1525 = vpop.xlane.xlu0 %1524
    %1526 = vadd.xlane.f32.xlu0 %v1505
    %v1527 = vpop.xlane.xlu0 %1526
    %1528 = vadd.xlane.f32.xlu0 %v1506
    %v1529 = vpop.xlane.xlu0 %1528
    %1530 = vadd.xlane.f32.xlu0 %v1507
    %v1531 = vpop.xlane.xlu0 %1530
    %1532 = vadd.xlane.f32.xlu0 %v1508
    %v1533 = vpop.xlane.xlu0 %1532
    %1534 = vadd.xlane.f32.xlu0 %v1509
    %v1535 = vpop.xlane.xlu0 %1534
    %1536 = vadd.xlane.f32.xlu0 %v1510
    %v1537 = vpop.xlane.xlu0 %1536
    %1538 = vadd.xlane.f32.xlu0 %v1511
    %v1539 = vpop.xlane.xlu0 %1538
    %1540 = vadd.xlane.f32.xlu0 %v1512
    %v1541 = vpop.xlane.xlu0 %1540
    %1542 = vadd.xlane.f32.xlu0 %v1513
    %v1543 = vpop.xlane.xlu0 %1542
    %1544 = vadd.xlane.f32.xlu0 %v1514
    %v1545 = vpop.xlane.xlu0 %1544
    %1546 = vadd.xlane.f32.xlu0 %v1515
    %v1547 = vpop.xlane.xlu0 %1546
    %vm1548 = vcmp.ge.f32.partialorder %v1499, %v1517
    %vm1549 = vcmp.ge.f32.partialorder %v1499, %v1519
    %vm1550 = vcmp.ge.f32.partialorder %v1499, %v1521
    %vm1551 = vcmp.ge.f32.partialorder %v1499, %v1523
    %vm1552 = vcmp.ge.f32.partialorder %v1499, %v1525
    %vm1553 = vcmp.ge.f32.partialorder %v1499, %v1527
    %vm1554 = vcmp.ge.f32.partialorder %v1499, %v1529
    %vm1555 = vcmp.ge.f32.partialorder %v1499, %v1531
    %vm1556 = vcmp.ge.f32.partialorder %v1499, %v1533
    %vm1557 = vcmp.ge.f32.partialorder %v1499, %v1535
    %vm1558 = vcmp.ge.f32.partialorder %v1499, %v1537
    %vm1559 = vcmp.ge.f32.partialorder %v1499, %v1539
    %vm1560 = vcmp.ge.f32.partialorder %v1499, %v1541
    %vm1561 = vcmp.ge.f32.partialorder %v1499, %v1543
    %vm1562 = vcmp.ge.f32.partialorder %v1499, %v1545
    %vm1563 = vcmp.ge.f32.partialorder %v1499, %v1547
    %v1564 = vsel %vm1548, 1, 0
    %v1565 = vsel %vm1549, 1, 0
    %v1566 = vsel %vm1550, 1, 0
    %v1567 = vsel %vm1551, 1, 0
    %v1568 = vsel %vm1552, 1, 0
    %v1569 = vsel %vm1553, 1, 0
    %v1570 = vsel %vm1554, 1, 0
    %v1571 = vsel %vm1555, 1, 0
    %v1572 = vsel %vm1556, 1, 0
    %v1573 = vsel %vm1557, 1, 0
    %v1574 = vsel %vm1558, 1, 0
    %v1575 = vsel %vm1559, 1, 0
    %v1576 = vsel %vm1560, 1, 0
    %v1577 = vsel %vm1561, 1, 0
    %v1578 = vsel %vm1562, 1, 0
    %v1579 = vsel %vm1563, 1, 0
    %v1580 = vcvt.s32.f32 %v1564
    %v1581 = vcvt.s32.f32 %v1565
    %v1582 = vcvt.s32.f32 %v1566
    %v1583 = vcvt.s32.f32 %v1567
    %v1584 = vcvt.s32.f32 %v1568
    %v1585 = vcvt.s32.f32 %v1569
    %v1586 = vcvt.s32.f32 %v1570
    %v1587 = vcvt.s32.f32 %v1571
    %v1588 = vcvt.s32.f32 %v1572
    %v1589 = vcvt.s32.f32 %v1573
    %v1590 = vcvt.s32.f32 %v1574
    %v1591 = vcvt.s32.f32 %v1575
    %v1592 = vcvt.s32.f32 %v1576
    %v1593 = vcvt.s32.f32 %v1577
    %v1594 = vcvt.s32.f32 %v1578
    %v1595 = vcvt.s32.f32 %v1579
    %1596 = vadd.xlane.f32.xlu0 %v1580
    %v1597 = vpop.xlane.xlu0 %1596
    %1598 = vadd.xlane.f32.xlu0 %v1581
    %v1599 = vpop.xlane.xlu0 %1598
    %1600 = vadd.xlane.f32.xlu0 %v1582
    %v1601 = vpop.xlane.xlu0 %1600
    %1602 = vadd.xlane.f32.xlu0 %v1583
    %v1603 = vpop.xlane.xlu0 %1602
    %1604 = vadd.xlane.f32.xlu0 %v1584
    %v1605 = vpop.xlane.xlu0 %1604
    %1606 = vadd.xlane.f32.xlu0 %v1585
    %v1607 = vpop.xlane.xlu0 %1606
    %1608 = vadd.xlane.f32.xlu0 %v1586
    %v1609 = vpop.xlane.xlu0 %1608
    %1610 = vadd.xlane.f32.xlu0 %v1587
    %v1611 = vpop.xlane.xlu0 %1610
    %1612 = vadd.xlane.f32.xlu0 %v1588
    %v1613 = vpop.xlane.xlu0 %1612
    %1614 = vadd.xlane.f32.xlu0 %v1589
    %v1615 = vpop.xlane.xlu0 %1614
    %1616 = vadd.xlane.f32.xlu0 %v1590
    %v1617 = vpop.xlane.xlu0 %1616
    %1618 = vadd.xlane.f32.xlu0 %v1591
    %v1619 = vpop.xlane.xlu0 %1618
    %1620 = vadd.xlane.f32.xlu0 %v1592
    %v1621 = vpop.xlane.xlu0 %1620
    %1622 = vadd.xlane.f32.xlu0 %v1593
    %v1623 = vpop.xlane.xlu0 %1622
    %1624 = vadd.xlane.f32.xlu0 %v1594
    %v1625 = vpop.xlane.xlu0 %1624
    %1626 = vadd.xlane.f32.xlu0 %v1595
    %v1627 = vpop.xlane.xlu0 %1626
    %v1628 = vmul.f32 %v1580, %v1499
    %v1629 = vmul.f32 %v1581, %v1499
    %v1630 = vmul.f32 %v1582, %v1499
    %v1631 = vmul.f32 %v1583, %v1499
    %v1632 = vmul.f32 %v1584, %v1499
    %v1633 = vmul.f32 %v1585, %v1499
    %v1634 = vmul.f32 %v1586, %v1499
    %v1635 = vmul.f32 %v1587, %v1499
    %v1636 = vmul.f32 %v1588, %v1499
    %v1637 = vmul.f32 %v1589, %v1499
    %v1638 = vmul.f32 %v1590, %v1499
    %v1639 = vmul.f32 %v1591, %v1499
    %v1640 = vmul.f32 %v1592, %v1499
    %v1641 = vmul.f32 %v1593, %v1499
    %v1642 = vmul.f32 %v1594, %v1499
    %v1643 = vmul.f32 %v1595, %v1499
    %1644 = vadd.xlane.f32.xlu0 %v1628
    %v1645 = vpop.xlane.xlu0 %1644
    %1646 = vadd.xlane.f32.xlu0 %v1629
    %v1647 = vpop.xlane.xlu0 %1646
    %1648 = vadd.xlane.f32.xlu0 %v1630
    %v1649 = vpop.xlane.xlu0 %1648
    %1650 = vadd.xlane.f32.xlu0 %v1631
    %v1651 = vpop.xlane.xlu0 %1650
    %1652 = vadd.xlane.f32.xlu0 %v1632
    %v1653 = vpop.xlane.xlu0 %1652
    %1654 = vadd.xlane.f32.xlu0 %v1633
    %v1655 = vpop.xlane.xlu0 %1654
    %1656 = vadd.xlane.f32.xlu0 %v1634
    %v1657 = vpop.xlane.xlu0 %1656
    %1658 = vadd.xlane.f32.xlu0 %v1635
    %v1659 = vpop.xlane.xlu0 %1658
    %1660 = vadd.xlane.f32.xlu0 %v1636
    %v1661 = vpop.xlane.xlu0 %1660
    %1662 = vadd.xlane.f32.xlu0 %v1637
    %v1663 = vpop.xlane.xlu0 %1662
    %1664 = vadd.xlane.f32.xlu0 %v1638
    %v1665 = vpop.xlane.xlu0 %1664
    %1666 = vadd.xlane.f32.xlu0 %v1639
    %v1667 = vpop.xlane.xlu0 %1666
    %1668 = vadd.xlane.f32.xlu0 %v1640
    %v1669 = vpop.xlane.xlu0 %1668
    %1670 = vadd.xlane.f32.xlu0 %v1641
    %v1671 = vpop.xlane.xlu0 %1670
    %1672 = vadd.xlane.f32.xlu0 %v1642
    %v1673 = vpop.xlane.xlu0 %1672
    %1674 = vadd.xlane.f32.xlu0 %v1643
    %v1675 = vpop.xlane.xlu0 %1674
    %v1676 = vmul.f32 %v1597, %v1517
    %v1677 = vmul.f32 %v1599, %v1519
    %v1678 = vmul.f32 %v1601, %v1521
    %v1679 = vmul.f32 %v1603, %v1523
    %v1680 = vmul.f32 %v1605, %v1525
    %v1681 = vmul.f32 %v1607, %v1527
    %v1682 = vmul.f32 %v1609, %v1529
    %v1683 = vmul.f32 %v1611, %v1531
    %v1684 = vmul.f32 %v1613, %v1533
    %v1685 = vmul.f32 %v1615, %v1535
    %v1686 = vmul.f32 %v1617, %v1537
    %v1687 = vmul.f32 %v1619, %v1539
    %v1688 = vmul.f32 %v1621, %v1541
    %v1689 = vmul.f32 %v1623, %v1543
    %v1690 = vmul.f32 %v1625, %v1545
    %v1691 = vmul.f32 %v1627, %v1547
    %v1692 = vadd.f32 %v1676, 1.0
    %v1693 = vadd.f32 %v1677, 1.0
    %v1694 = vadd.f32 %v1678, 1.0
    %v1695 = vadd.f32 %v1679, 1.0
    %v1696 = vadd.f32 %v1680, 1.0
    %v1697 = vadd.f32 %v1681, 1.0
    %v1698 = vadd.f32 %v1682, 1.0
    %v1699 = vadd.f32 %v1683, 1.0
    %v1700 = vadd.f32 %v1684, 1.0
    %v1701 = vadd.f32 %v1685, 1.0
    %v1702 = vadd.f32 %v1686, 1.0
    %v1703 = vadd.f32 %v1687, 1.0
    %v1704 = vadd.f32 %v1688, 1.0
    %v1705 = vadd.f32 %v1689, 1.0
    %v1706 = vadd.f32 %v1690, 1.0
    %v1707 = vadd.f32 %v1691, 1.0
    %vm1708 = vcmp.gt.f32.partialorder %v1692, %v1645
    %vm1709 = vcmp.gt.f32.partialorder %v1693, %v1647
    %vm1710 = vcmp.gt.f32.partialorder %v1694, %v1649
    %vm1711 = vcmp.gt.f32.partialorder %v1695, %v1651
    %vm1712 = vcmp.gt.f32.partialorder %v1696, %v1653
    %vm1713 = vcmp.gt.f32.partialorder %v1697, %v1655
    %vm1714 = vcmp.gt.f32.partialorder %v1698, %v1657
    %vm1715 = vcmp.gt.f32.partialorder %v1699, %v1659
    %vm1716 = vcmp.gt.f32.partialorder %v1700, %v1661
    %vm1717 = vcmp.gt.f32.partialorder %v1701, %v1663
    %vm1718 = vcmp.gt.f32.partialorder %v1702, %v1665
    %vm1719 = vcmp.gt.f32.partialorder %v1703, %v1667
    %vm1720 = vcmp.gt.f32.partialorder %v1704, %v1669
    %vm1721 = vcmp.gt.f32.partialorder %v1705, %v1671
    %vm1722 = vcmp.gt.f32.partialorder %v1706, %v1673
    %vm1723 = vcmp.gt.f32.partialorder %v1707, %v1675
    %v1724 = vsel %vm1708, 1, 0
    %v1725 = vsel %vm1709, 1, 0
    %v1726 = vsel %vm1710, 1, 0
    %v1727 = vsel %vm1711, 1, 0
    %v1728 = vsel %vm1712, 1, 0
    %v1729 = vsel %vm1713, 1, 0
    %v1730 = vsel %vm1714, 1, 0
    %v1731 = vsel %vm1715, 1, 0
    %v1732 = vsel %vm1716, 1, 0
    %v1733 = vsel %vm1717, 1, 0
    %v1734 = vsel %vm1718, 1, 0
    %v1735 = vsel %vm1719, 1, 0
    %v1736 = vsel %vm1720, 1, 0
    %v1737 = vsel %vm1721, 1, 0
    %v1738 = vsel %vm1722, 1, 0
    %v1739 = vsel %vm1723, 1, 0
    %v1740 = vcvt.s32.f32 %v1724
    %v1741 = vcvt.s32.f32 %v1725
    %v1742 = vcvt.s32.f32 %v1726
    %v1743 = vcvt.s32.f32 %v1727
    %v1744 = vcvt.s32.f32 %v1728
    %v1745 = vcvt.s32.f32 %v1729
    %v1746 = vcvt.s32.f32 %v1730
    %v1747 = vcvt.s32.f32 %v1731
    %v1748 = vcvt.s32.f32 %v1732
    %v1749 = vcvt.s32.f32 %v1733
    %v1750 = vcvt.s32.f32 %v1734
    %v1751 = vcvt.s32.f32 %v1735
    %v1752 = vcvt.s32.f32 %v1736
    %v1753 = vcvt.s32.f32 %v1737
    %v1754 = vcvt.s32.f32 %v1738
    %v1755 = vcvt.s32.f32 %v1739
    %vm1756 = vcmask 7168
    %v1757 = vsel %vm1756, %v1740, 0.0
    %v1758 = vsel %vm1756, %v1741, 0.0
    %v1759 = vadd.f32 %v1757, %v1758
    %v1760 = vsel %vm1756, %v1742, 0.0
    %v1761 = vadd.f32 %v1759, %v1760
    %v1762 = vsel %vm1756, %v1743, 0.0
    %v1763 = vadd.f32 %v1761, %v1762
    %v1764 = vsel %vm1756, %v1744, 0.0
    %v1765 = vadd.f32 %v1763, %v1764
    %v1766 = vsel %vm1756, %v1745, 0.0
    %v1767 = vadd.f32 %v1765, %v1766
    %v1768 = vsel %vm1756, %v1746, 0.0
    %v1769 = vadd.f32 %v1767, %v1768
    %v1770 = vsel %vm1756, %v1747, 0.0
    %v1771 = vadd.f32 %v1769, %v1770
    %v1772 = vsel %vm1756, %v1748, 0.0
    %v1773 = vadd.f32 %v1771, %v1772
    %v1774 = vsel %vm1756, %v1749, 0.0
    %v1775 = vadd.f32 %v1773, %v1774
    %v1776 = vsel %vm1756, %v1750, 0.0
    %v1777 = vadd.f32 %v1775, %v1776
    %v1778 = vsel %vm1756, %v1751, 0.0
    %v1779 = vadd.f32 %v1777, %v1778
    %v1780 = vsel %vm1756, %v1752, 0.0
    %v1781 = vadd.f32 %v1779, %v1780
    %v1782 = vsel %vm1756, %v1753, 0.0
    %v1783 = vadd.f32 %v1781, %v1782
    %v1784 = vsel %vm1756, %v1754, 0.0
    %v1785 = vadd.f32 %v1783, %v1784
    %v1786 = vsel %vm1756, %v1755, 0.0
    %v1787 = vadd.f32 %v1785, %v1786
    %1788 = vadd.xlane.f32.xlu0 %v1787
    %v1789 = vpop.xlane.xlu0 %1788
    %v1790 = vrot.slane %v1789, 4
    %v1791 = vadd.f32 %v1789, %v1790
    %v1792 = vrot.slane %v1791, 2
    %v1793 = vadd.f32 %v1791, %v1792
    %v1794 = vrot.slane %v1793, 1
    %v1795 = vadd.f32 %v1793, %v1794
    %s1796 = vtos %v1795
    %v1797 = vmul.f32 %v1517, %v1740
    %v1798 = vmul.f32 %v1519, %v1741
    %v1799 = vmul.f32 %v1521, %v1742
    %v1800 = vmul.f32 %v1523, %v1743
    %v1801 = vmul.f32 %v1525, %v1744
    %v1802 = vmul.f32 %v1527, %v1745
    %v1803 = vmul.f32 %v1529, %v1746
    %v1804 = vmul.f32 %v1531, %v1747
    %v1805 = vmul.f32 %v1533, %v1748
    %v1806 = vmul.f32 %v1535, %v1749
    %v1807 = vmul.f32 %v1537, %v1750
    %v1808 = vmul.f32 %v1539, %v1751
    %v1809 = vmul.f32 %v1541, %v1752
    %v1810 = vmul.f32 %v1543, %v1753
    %v1811 = vmul.f32 %v1545, %v1754
    %v1812 = vmul.f32 %v1547, %v1755
    %v1813 = vsel %vm1756, %v1797, 0.0
    %v1814 = vsel %vm1756, %v1798, 0.0
    %v1815 = vadd.f32 %v1813, %v1814
    %v1816 = vsel %vm1756, %v1799, 0.0
    %v1817 = vadd.f32 %v1815, %v1816
    %v1818 = vsel %vm1756, %v1800, 0.0
    %v1819 = vadd.f32 %v1817, %v1818
    %v1820 = vsel %vm1756, %v1801, 0.0
    %v1821 = vadd.f32 %v1819, %v1820
    %v1822 = vsel %vm1756, %v1802, 0.0
    %v1823 = vadd.f32 %v1821, %v1822
    %v1824 = vsel %vm1756, %v1803, 0.0
    %v1825 = vadd.f32 %v1823, %v1824
    %v1826 = vsel %vm1756, %v1804, 0.0
    %v1827 = vadd.f32 %v1825, %v1826
    %v1828 = vsel %vm1756, %v1805, 0.0
    %v1829 = vadd.f32 %v1827, %v1828
    %v1830 = vsel %vm1756, %v1806, 0.0
    %v1831 = vadd.f32 %v1829, %v1830
    %v1832 = vsel %vm1756, %v1807, 0.0
    %v1833 = vadd.f32 %v1831, %v1832
    %v1834 = vsel %vm1756, %v1808, 0.0
    %v1835 = vadd.f32 %v1833, %v1834
    %v1836 = vsel %vm1756, %v1809, 0.0
    %v1837 = vadd.f32 %v1835, %v1836
    %v1838 = vsel %vm1756, %v1810, 0.0
    %v1839 = vadd.f32 %v1837, %v1838
    %v1840 = vsel %vm1756, %v1811, 0.0
    %v1841 = vadd.f32 %v1839, %v1840
    %v1842 = vsel %vm1756, %v1812, 0.0
    %v1843 = vadd.f32 %v1841, %v1842
    %1844 = vadd.xlane.f32.xlu0 %v1843
    %v1845 = vpop.xlane.xlu0 %1844
    %v1846 = vrot.slane %v1845, 4
    %v1847 = vadd.f32 %v1845, %v1846
    %v1848 = vrot.slane %v1847, 2
    %v1849 = vadd.f32 %v1847, %v1848
    %v1850 = vrot.slane %v1849, 1
    %v1851 = vadd.f32 %v1849, %v1850
    %s1852 = vtos %v1851
    %s1853 = ssub.f32 %s1852, 1.0
    %v1854 = vstv %s1796
    %v1855 = vrcp.pop %v1854
    %v1856 = vmul.f32 %v1854, %v1855
    %v1857 = vsub.f32 1.0, %v1856
    %v1858 = vmul.f32 %v1855, %v1857
    %v1859 = vadd.f32 %v1855, %v1858
    %vm1860 = vweird.f32 %v1854
    %vm1861 = vweird.f32 %v1855
    %vm1862 = vmor %vm1860, %vm1861
    %v1863 = vsel %vm1862, %v1855, %v1859
    %v1864 = vand.u32 2147483647, %v1854
    %vm1865 = vcmp.eq.f32.partialorder %v1864, 8.507059e+37
    %v1866 = vand.u32 %v1854, 2147483648
    %v1867 = vor.u32 1.1754944e-38, %v1866
    %v1868 = vsel %vm1865, %v1867, %v1863
    %s1869 = vtos %v1868
    %s1870 = smul.f32 %s1853, %s1869
    %v1871 = vstv %s1870
    %v1872 = vsub.f32 %v1461, %v1871
    %v1873 = vmax.f32 %v1872, 0.0
    %v1874 = vperm.slane %v1461, 1
    %v1875 = vsel %vm1483, %v1874, 0.0
    %v1876 = vsel %vm1484, %v1874, 0.0
    %v1877 = vsel %vm1485, %v1874, 0.0
    %v1878 = vsel %vm1486, %v1874, 0.0
    %v1879 = vsel %vm1487, %v1874, 0.0
    %v1880 = vsel %vm1488, %v1874, 0.0
    %v1881 = vsel %vm1489, %v1874, 0.0
    %v1882 = vsel %vm1490, %v1874, 0.0
    %v1883 = vsel %vm1491, %v1874, 0.0
    %v1884 = vsel %vm1492, %v1874, 0.0
    %v1885 = vsel %vm1493, %v1874, 0.0
    %v1886 = vsel %vm1494, %v1874, 0.0
    %v1887 = vsel %vm1495, %v1874, 0.0
    %v1888 = vsel %vm1496, %v1874, 0.0
    %v1889 = vsel %vm1497, %v1874, 0.0
    %v1890 = vsel %vm1498, %v1874, 0.0
    %1891 = vadd.xlane.f32.xlu0 %v1875
    %v1892 = vpop.xlane.xlu0 %1891
    %1893 = vadd.xlane.f32.xlu0 %v1876
    %v1894 = vpop.xlane.xlu0 %1893
    %1895 = vadd.xlane.f32.xlu0 %v1877
    %v1896 = vpop.xlane.xlu0 %1895
    %1897 = vadd.xlane.f32.xlu0 %v1878
    %v1898 = vpop.xlane.xlu0 %1897
    %1899 = vadd.xlane.f32.xlu0 %v1879
    %v1900 = vpop.xlane.xlu0 %1899
    %1901 = vadd.xlane.f32.xlu0 %v1880
    %v1902 = vpop.xlane.xlu0 %1901
    %1903 = vadd.xlane.f32.xlu0 %v1881
    %v1904 = vpop.xlane.xlu0 %1903
    %1905 = vadd.xlane.f32.xlu0 %v1882
    %v1906 = vpop.xlane.xlu0 %1905
    %1907 = vadd.xlane.f32.xlu0 %v1883
    %v1908 = vpop.xlane.xlu0 %1907
    %1909 = vadd.xlane.f32.xlu0 %v1884
    %v1910 = vpop.xlane.xlu0 %1909
    %1911 = vadd.xlane.f32.xlu0 %v1885
    %v1912 = vpop.xlane.xlu0 %1911
    %1913 = vadd.xlane.f32.xlu0 %v1886
    %v1914 = vpop.xlane.xlu0 %1913
    %1915 = vadd.xlane.f32.xlu0 %v1887
    %v1916 = vpop.xlane.xlu0 %1915
    %1917 = vadd.xlane.f32.xlu0 %v1888
    %v1918 = vpop.xlane.xlu0 %1917
    %1919 = vadd.xlane.f32.xlu0 %v1889
    %v1920 = vpop.xlane.xlu0 %1919
    %1921 = vadd.xlane.f32.xlu0 %v1890
    %v1922 = vpop.xlane.xlu0 %1921
    %vm1923 = vcmp.ge.f32.partialorder %v1874, %v1892
    %vm1924 = vcmp.ge.f32.partialorder %v1874, %v1894
    %vm1925 = vcmp.ge.f32.partialorder %v1874, %v1896
    %vm1926 = vcmp.ge.f32.partialorder %v1874, %v1898
    %vm1927 = vcmp.ge.f32.partialorder %v1874, %v1900
    %vm1928 = vcmp.ge.f32.partialorder %v1874, %v1902
    %vm1929 = vcmp.ge.f32.partialorder %v1874, %v1904
    %vm1930 = vcmp.ge.f32.partialorder %v1874, %v1906
    %vm1931 = vcmp.ge.f32.partialorder %v1874, %v1908
    %vm1932 = vcmp.ge.f32.partialorder %v1874, %v1910
    %vm1933 = vcmp.ge.f32.partialorder %v1874, %v1912
    %vm1934 = vcmp.ge.f32.partialorder %v1874, %v1914
    %vm1935 = vcmp.ge.f32.partialorder %v1874, %v1916
    %vm1936 = vcmp.ge.f32.partialorder %v1874, %v1918
    %vm1937 = vcmp.ge.f32.partialorder %v1874, %v1920
    %vm1938 = vcmp.ge.f32.partialorder %v1874, %v1922
    %v1939 = vsel %vm1923, 1, 0
    %v1940 = vsel %vm1924, 1, 0
    %v1941 = vsel %vm1925, 1, 0
    %v1942 = vsel %vm1926, 1, 0
    %v1943 = vsel %vm1927, 1, 0
    %v1944 = vsel %vm1928, 1, 0
    %v1945 = vsel %vm1929, 1, 0
    %v1946 = vsel %vm1930, 1, 0
    %v1947 = vsel %vm1931, 1, 0
    %v1948 = vsel %vm1932, 1, 0
    %v1949 = vsel %vm1933, 1, 0
    %v1950 = vsel %vm1934, 1, 0
    %v1951 = vsel %vm1935, 1, 0
    %v1952 = vsel %vm1936, 1, 0
    %v1953 = vsel %vm1937, 1, 0
    %v1954 = vsel %vm1938, 1, 0
    %v1955 = vcvt.s32.f32 %v1939
    %v1956 = vcvt.s32.f32 %v1940
    %v1957 = vcvt.s32.f32 %v1941
    %v1958 = vcvt.s32.f32 %v1942
    %v1959 = vcvt.s32.f32 %v1943
    %v1960 = vcvt.s32.f32 %v1944
    %v1961 = vcvt.s32.f32 %v1945
    %v1962 = vcvt.s32.f32 %v1946
    %v1963 = vcvt.s32.f32 %v1947
    %v1964 = vcvt.s32.f32 %v1948
    %v1965 = vcvt.s32.f32 %v1949
    %v1966 = vcvt.s32.f32 %v1950
    %v1967 = vcvt.s32.f32 %v1951
    %v1968 = vcvt.s32.f32 %v1952
    %v1969 = vcvt.s32.f32 %v1953
    %v1970 = vcvt.s32.f32 %v1954
    %1971 = vadd.xlane.f32.xlu0 %v1955
    %v1972 = vpop.xlane.xlu0 %1971
    %1973 = vadd.xlane.f32.xlu0 %v1956
    %v1974 = vpop.xlane.xlu0 %1973
    %1975 = vadd.xlane.f32.xlu0 %v1957
    %v1976 = vpop.xlane.xlu0 %1975
    %1977 = vadd.xlane.f32.xlu0 %v1958
    %v1978 = vpop.xlane.xlu0 %1977
    %1979 = vadd.xlane.f32.xlu0 %v1959
    %v1980 = vpop.xlane.xlu0 %1979
    %1981 = vadd.xlane.f32.xlu0 %v1960
    %v1982 = vpop.xlane.xlu0 %1981
    %1983 = vadd.xlane.f32.xlu0 %v1961
    %v1984 = vpop.xlane.xlu0 %1983
    %1985 = vadd.xlane.f32.xlu0 %v1962
    %v1986 = vpop.xlane.xlu0 %1985
    %1987 = vadd.xlane.f32.xlu0 %v1963
    %v1988 = vpop.xlane.xlu0 %1987
    %1989 = vadd.xlane.f32.xlu0 %v1964
    %v1990 = vpop.xlane.xlu0 %1989
    %1991 = vadd.xlane.f32.xlu0 %v1965
    %v1992 = vpop.xlane.xlu0 %1991
    %1993 = vadd.xlane.f32.xlu0 %v1966
    %v1994 = vpop.xlane.xlu0 %1993
    %1995 = vadd.xlane.f32.xlu0 %v1967
    %v1996 = vpop.xlane.xlu0 %1995
    %1997 = vadd.xlane.f32.xlu0 %v1968
    %v1998 = vpop.xlane.xlu0 %1997
    %1999 = vadd.xlane.f32.xlu0 %v1969
    %v2000 = vpop.xlane.xlu0 %1999
    %2001 = vadd.xlane.f32.xlu0 %v1970
    %v2002 = vpop.xlane.xlu0 %2001
    %v2003 = vmul.f32 %v1955, %v1874
    %v2004 = vmul.f32 %v1956, %v1874
    %v2005 = vmul.f32 %v1957, %v1874
    %v2006 = vmul.f32 %v1958, %v1874
    %v2007 = vmul.f32 %v1959, %v1874
    %v2008 = vmul.f32 %v1960, %v1874
    %v2009 = vmul.f32 %v1961, %v1874
    %v2010 = vmul.f32 %v1962, %v1874
    %v2011 = vmul.f32 %v1963, %v1874
    %v2012 = vmul.f32 %v1964, %v1874
    %v2013 = vmul.f32 %v1965, %v1874
    %v2014 = vmul.f32 %v1966, %v1874
    %v2015 = vmul.f32 %v1967, %v1874
    %v2016 = vmul.f32 %v1968, %v1874
    %v2017 = vmul.f32 %v1969, %v1874
    %v2018 = vmul.f32 %v1970, %v1874
    %2019 = vadd.xlane.f32.xlu0 %v2003
    %v2020 = vpop.xlane.xlu0 %2019
    %2021 = vadd.xlane.f32.xlu0 %v2004
    %v2022 = vpop.xlane.xlu0 %2021
    %2023 = vadd.xlane.f32.xlu0 %v2005
    %v2024 = vpop.xlane.xlu0 %2023
    %2025 = vadd.xlane.f32.xlu0 %v2006
    %v2026 = vpop.xlane.xlu0 %2025
    %2027 = vadd.xlane.f32.xlu0 %v2007
    %v2028 = vpop.xlane.xlu0 %2027
    %2029 = vadd.xlane.f32.xlu0 %v2008
    %v2030 = vpop.xlane.xlu0 %2029
    %2031 = vadd.xlane.f32.xlu0 %v2009
    %v2032 = vpop.xlane.xlu0 %2031
    %2033 = vadd.xlane.f32.xlu0 %v2010
    %v2034 = vpop.xlane.xlu0 %2033
    %2035 = vadd.xlane.f32.xlu0 %v2011
    %v2036 = vpop.xlane.xlu0 %2035
    %2037 = vadd.xlane.f32.xlu0 %v2012
    %v2038 = vpop.xlane.xlu0 %2037
    %2039 = vadd.xlane.f32.xlu0 %v2013
    %v2040 = vpop.xlane.xlu0 %2039
    %2041 = vadd.xlane.f32.xlu0 %v2014
    %v2042 = vpop.xlane.xlu0 %2041
    %2043 = vadd.xlane.f32.xlu0 %v2015
    %v2044 = vpop.xlane.xlu0 %2043
    %2045 = vadd.xlane.f32.xlu0 %v2016
    %v2046 = vpop.xlane.xlu0 %2045
    %2047 = vadd.xlane.f32.xlu0 %v2017
    %v2048 = vpop.xlane.xlu0 %2047
    %2049 = vadd.xlane.f32.xlu0 %v2018
    %v2050 = vpop.xlane.xlu0 %2049
    %v2051 = vmul.f32 %v1972, %v1892
    %v2052 = vmul.f32 %v1974, %v1894
    %v2053 = vmul.f32 %v1976, %v1896
    %v2054 = vmul.f32 %v1978, %v1898
    %v2055 = vmul.f32 %v1980, %v1900
    %v2056 = vmul.f32 %v1982, %v1902
    %v2057 = vmul.f32 %v1984, %v1904
    %v2058 = vmul.f32 %v1986, %v1906
    %v2059 = vmul.f32 %v1988, %v1908
    %v2060 = vmul.f32 %v1990, %v1910
    %v2061 = vmul.f32 %v1992, %v1912
    %v2062 = vmul.f32 %v1994, %v1914
    %v2063 = vmul.f32 %v1996, %v1916
    %v2064 = vmul.f32 %v1998, %v1918
    %v2065 = vmul.f32 %v2000, %v1920
    %v2066 = vmul.f32 %v2002, %v1922
    %v2067 = vadd.f32 %v2051, 1.0
    %v2068 = vadd.f32 %v2052, 1.0
    %v2069 = vadd.f32 %v2053, 1.0
    %v2070 = vadd.f32 %v2054, 1.0
    %v2071 = vadd.f32 %v2055, 1.0
    %v2072 = vadd.f32 %v2056, 1.0
    %v2073 = vadd.f32 %v2057, 1.0
    %v2074 = vadd.f32 %v2058, 1.0
    %v2075 = vadd.f32 %v2059, 1.0
    %v2076 = vadd.f32 %v2060, 1.0
    %v2077 = vadd.f32 %v2061, 1.0
    %v2078 = vadd.f32 %v2062, 1.0
    %v2079 = vadd.f32 %v2063, 1.0
    %v2080 = vadd.f32 %v2064, 1.0
    %v2081 = vadd.f32 %v2065, 1.0
    %v2082 = vadd.f32 %v2066, 1.0
    %vm2083 = vcmp.gt.f32.partialorder %v2067, %v2020
    %vm2084 = vcmp.gt.f32.partialorder %v2068, %v2022
    %vm2085 = vcmp.gt.f32.partialorder %v2069, %v2024
    %vm2086 = vcmp.gt.f32.partialorder %v2070, %v2026
    %vm2087 = vcmp.gt.f32.partialorder %v2071, %v2028
    %vm2088 = vcmp.gt.f32.partialorder %v2072, %v2030
    %vm2089 = vcmp.gt.f32.partialorder %v2073, %v2032
    %vm2090 = vcmp.gt.f32.partialorder %v2074, %v2034
    %vm2091 = vcmp.gt.f32.partialorder %v2075, %v2036
    %vm2092 = vcmp.gt.f32.partialorder %v2076, %v2038
    %vm2093 = vcmp.gt.f32.partialorder %v2077, %v2040
    %vm2094 = vcmp.gt.f32.partialorder %v2078, %v2042
    %vm2095 = vcmp.gt.f32.partialorder %v2079, %v2044
    %vm2096 = vcmp.gt.f32.partialorder %v2080, %v2046
    %vm2097 = vcmp.gt.f32.partialorder %v2081, %v2048
    %vm2098 = vcmp.gt.f32.partialorder %v2082, %v2050
    %v2099 = vsel %vm2083, 1, 0
    %v2100 = vsel %vm2084, 1, 0
    %v2101 = vsel %vm2085, 1, 0
    %v2102 = vsel %vm2086, 1, 0
    %v2103 = vsel %vm2087, 1, 0
    %v2104 = vsel %vm2088, 1, 0
    %v2105 = vsel %vm2089, 1, 0
    %v2106 = vsel %vm2090, 1, 0
    %v2107 = vsel %vm2091, 1, 0
    %v2108 = vsel %vm2092, 1, 0
    %v2109 = vsel %vm2093, 1, 0
    %v2110 = vsel %vm2094, 1, 0
    %v2111 = vsel %vm2095, 1, 0
    %v2112 = vsel %vm2096, 1, 0
    %v2113 = vsel %vm2097, 1, 0
    %v2114 = vsel %vm2098, 1, 0
    %v2115 = vcvt.s32.f32 %v2099
    %v2116 = vcvt.s32.f32 %v2100
    %v2117 = vcvt.s32.f32 %v2101
    %v2118 = vcvt.s32.f32 %v2102
    %v2119 = vcvt.s32.f32 %v2103
    %v2120 = vcvt.s32.f32 %v2104
    %v2121 = vcvt.s32.f32 %v2105
    %v2122 = vcvt.s32.f32 %v2106
    %v2123 = vcvt.s32.f32 %v2107
    %v2124 = vcvt.s32.f32 %v2108
    %v2125 = vcvt.s32.f32 %v2109
    %v2126 = vcvt.s32.f32 %v2110
    %v2127 = vcvt.s32.f32 %v2111
    %v2128 = vcvt.s32.f32 %v2112
    %v2129 = vcvt.s32.f32 %v2113
    %v2130 = vcvt.s32.f32 %v2114
    %v2131 = vsel %vm1756, %v2115, 0.0
    %v2132 = vsel %vm1756, %v2116, 0.0
    %v2133 = vadd.f32 %v2131, %v2132
    %v2134 = vsel %vm1756, %v2117, 0.0
    %v2135 = vadd.f32 %v2133, %v2134
    %v2136 = vsel %vm1756, %v2118, 0.0
    %v2137 = vadd.f32 %v2135, %v2136
    %v2138 = vsel %vm1756, %v2119, 0.0
    %v2139 = vadd.f32 %v2137, %v2138
    %v2140 = vsel %vm1756, %v2120, 0.0
    %v2141 = vadd.f32 %v2139, %v2140
    %v2142 = vsel %vm1756, %v2121, 0.0
    %v2143 = vadd.f32 %v2141, %v2142
    %v2144 = vsel %vm1756, %v2122, 0.0
    %v2145 = vadd.f32 %v2143, %v2144
    %v2146 = vsel %vm1756, %v2123, 0.0
    %v2147 = vadd.f32 %v2145, %v2146
    %v2148 = vsel %vm1756, %v2124, 0.0
    %v2149 = vadd.f32 %v2147, %v2148
    %v2150 = vsel %vm1756, %v2125, 0.0
    %v2151 = vadd.f32 %v2149, %v2150
    %v2152 = vsel %vm1756, %v2126, 0.0
    %v2153 = vadd.f32 %v2151, %v2152
    %v2154 = vsel %vm1756, %v2127, 0.0
    %v2155 = vadd.f32 %v2153, %v2154
    %v2156 = vsel %vm1756, %v2128, 0.0
    %v2157 = vadd.f32 %v2155, %v2156
    %v2158 = vsel %vm1756, %v2129, 0.0
    %v2159 = vadd.f32 %v2157, %v2158
    %v2160 = vsel %vm1756, %v2130, 0.0
    %v2161 = vadd.f32 %v2159, %v2160
    %2162 = vadd.xlane.f32.xlu0 %v2161
    %v2163 = vpop.xlane.xlu0 %2162
    %v2164 = vrot.slane %v2163, 4
    %v2165 = vadd.f32 %v2163, %v2164
    %v2166 = vrot.slane %v2165, 2
    %v2167 = vadd.f32 %v2165, %v2166
    %v2168 = vrot.slane %v2167, 1
    %v2169 = vadd.f32 %v2167, %v2168
    %s2170 = vtos %v2169
    %v2171 = vmul.f32 %v1892, %v2115
    %v2172 = vmul.f32 %v1894, %v2116
    %v2173 = vmul.f32 %v1896, %v2117
    %v2174 = vmul.f32 %v1898, %v2118
    %v2175 = vmul.f32 %v1900, %v2119
    %v2176 = vmul.f32 %v1902, %v2120
    %v2177 = vmul.f32 %v1904, %v2121
    %v2178 = vmul.f32 %v1906, %v2122
    %v2179 = vmul.f32 %v1908, %v2123
    %v2180 = vmul.f32 %v1910, %v2124
    %v2181 = vmul.f32 %v1912, %v2125
    %v2182 = vmul.f32 %v1914, %v2126
    %v2183 = vmul.f32 %v1916, %v2127
    %v2184 = vmul.f32 %v1918, %v2128
    %v2185 = vmul.f32 %v1920, %v2129
    %v2186 = vmul.f32 %v1922, %v2130
    %v2187 = vsel %vm1756, %v2171, 0.0
    %v2188 = vsel %vm1756, %v2172, 0.0
    %v2189 = vadd.f32 %v2187, %v2188
    %v2190 = vsel %vm1756, %v2173, 0.0
    %v2191 = vadd.f32 %v2189, %v2190
    %v2192 = vsel %vm1756, %v2174, 0.0
    %v2193 = vadd.f32 %v2191, %v2192
    %v2194 = vsel %vm1756, %v2175, 0.0
    %v2195 = vadd.f32 %v2193, %v2194
    %v2196 = vsel %vm1756, %v2176, 0.0
    %v2197 = vadd.f32 %v2195, %v2196
    %v2198 = vsel %vm1756, %v2177, 0.0
    %v2199 = vadd.f32 %v2197, %v2198
    %v2200 = vsel %vm1756, %v2178, 0.0
    %v2201 = vadd.f32 %v2199, %v2200
    %v2202 = vsel %vm1756, %v2179, 0.0
    %v2203 = vadd.f32 %v2201, %v2202
    %v2204 = vsel %vm1756, %v2180, 0.0
    %v2205 = vadd.f32 %v2203, %v2204
    %v2206 = vsel %vm1756, %v2181, 0.0
    %v2207 = vadd.f32 %v2205, %v2206
    %v2208 = vsel %vm1756, %v2182, 0.0
    %v2209 = vadd.f32 %v2207, %v2208
    %v2210 = vsel %vm1756, %v2183, 0.0
    %v2211 = vadd.f32 %v2209, %v2210
    %v2212 = vsel %vm1756, %v2184, 0.0
    %v2213 = vadd.f32 %v2211, %v2212
    %v2214 = vsel %vm1756, %v2185, 0.0
    %v2215 = vadd.f32 %v2213, %v2214
    %v2216 = vsel %vm1756, %v2186, 0.0
    %v2217 = vadd.f32 %v2215, %v2216
    %2218 = vadd.xlane.f32.xlu0 %v2217
    %v2219 = vpop.xlane.xlu0 %2218
    %v2220 = vrot.slane %v2219, 4
    %v2221 = vadd.f32 %v2219, %v2220
    %v2222 = vrot.slane %v2221, 2
    %v2223 = vadd.f32 %v2221, %v2222
    %v2224 = vrot.slane %v2223, 1
    %v2225 = vadd.f32 %v2223, %v2224
    %s2226 = vtos %v2225
    %s2227 = ssub.f32 %s2226, 1.0
    %v2228 = vstv %s2170
    %v2229 = vrcp.pop %v2228
    %v2230 = vmul.f32 %v2228, %v2229
    %v2231 = vsub.f32 1.0, %v2230
    %v2232 = vmul.f32 %v2229, %v2231
    %v2233 = vadd.f32 %v2229, %v2232
    %vm2234 = vweird.f32 %v2228
    %vm2235 = vweird.f32 %v2229
    %vm2236 = vmor %vm2234, %vm2235
    %v2237 = vsel %vm2236, %v2229, %v2233
    %v2238 = vand.u32 2147483647, %v2228
    %vm2239 = vcmp.eq.f32.partialorder %v2238, 8.507059e+37
    %v2240 = vand.u32 %v2228, 2147483648
    %v2241 = vor.u32 1.1754944e-38, %v2240
    %v2242 = vsel %vm2239, %v2241, %v2237
    %s2243 = vtos %v2242
    %s2244 = smul.f32 %s2227, %s2243
    %v2245 = vstv %s2244
    %v2246 = vsub.f32 %v1461, %v2245
    %v2247 = vmax.f32 %v2246, 0.0
    %v2248 = vsel %vm1425, %v1873, %v2247
    %2249 = vst [vmem:[#allocation14] sm:$0x3] %v2248
    // Predicated region
    $region102: #{tpu_custom_call.1} parent=1 // pred_check
      _
    $region103: #{tpu_custom_call.1} parent=1 // pred_check_branch
      %2251 = sbr.rel (0) target = $region105
    $region104: #{tpu_custom_call.1} parent=1 // pred_region
      %2253 = vsyncadd [#allocation4], 0
      %s2255 = sshll.u32 [#allocation14], 4
      %s2256 = int_to_ptr.vmem [resolvable:$true] %s2255
      %s2257 = sshll.u32 %s18, 4
      %s2258 = int_to_ptr.hbm [resolvable:$true] %s2257
      %2260 = dma.vmem_to_hbm [thread:$0]  %s2256, 32, %s2258, [#allocation4]
    $region105: #{tpu_custom_call.1} parent=1 // pred_fallthru
      _
    // Predicated region
    $region106: #{tpu_custom_call.1} parent=1 // pred_check
      _
    $region107: #{tpu_custom_call.1} parent=1 // pred_check_branch
      %2262 = sbr.rel (0) target = $region109
    $region108: #{tpu_custom_call.1} parent=1 // pred_region
      %2264 = dma.done [#allocation4], 32
    $region109: #{tpu_custom_call.1} parent=1 // pred_fallthru
      _
    %2265 = vsyncpa [#allocation3], 1
    %2266 = vsyncpa [#allocation6], 1
    %2267 = vsyncpa [#allocation9], 1
    %2268 = vsyncpa [#allocation12], 1
    %2269 = vsyncpa [#allocation4], 1

</llo_original>
